<compile_context>
chip_gen: v5e
topology: v5e:2x2
jax: 0.10.0
libtpu: 0.0.40
codegen_flags: <defaults>
</compile_context>

<pallas_src>
import functools
import math

import jax
import jax.numpy as jnp
from jax import lax
from jax.experimental import pallas as pl
from jax.experimental.pallas import tpu as pltpu

_NEG_INF = -1e30          # large finite negative: same softmax as -inf, no NaN risk
_BF = jnp.bfloat16

# Row indices inside the packed per-half-layer small-parameter matrix (P, D).
(_R_LN1_W, _R_LN1_B, _R_LNKV_W, _R_LNKV_B, _R_BQ, _R_BK, _R_BV, _R_BO,
 _R_LN2_W, _R_LN2_B, _R_PRB) = range(11)
_P_SMALL = 11


# ---------------------------------------------------------------------------
# Math helpers (usable both inside the kernel and in the pure-JAX reference)
# ---------------------------------------------------------------------------
def _layer_norm(x, w, b, eps=1e-5):
    mu = jnp.mean(x, axis=-1, keepdims=True)
    var = jnp.mean((x - mu) ** 2, axis=-1, keepdims=True)
    return (x - mu) * lax.rsqrt(var + eps) * w + b


def _gelu(x):
    # nn.GELU default: exact erf formulation.
    return 0.5 * x * (1.0 + lax.erf(x * (1.0 / math.sqrt(2.0))))


# ---------------------------------------------------------------------------
# In-kernel attention on one batch element (heads batched with einsums)
# ---------------------------------------------------------------------------
def _attention_heads(q2, k2, v2, num_heads, mask):
    """q2: (Sq, D), k2/v2: (Skv, D); returns merged head context (Sq, D) bf16."""
    sq, d = q2.shape
    skv = k2.shape[0]
    hd = d // num_heads
    q3 = jnp.transpose(q2.astype(_BF).reshape(sq, num_heads, hd), (1, 0, 2))
    k3 = jnp.transpose(k2.astype(_BF).reshape(skv, num_heads, hd), (1, 0, 2))
    v3 = jnp.transpose(v2.astype(_BF).reshape(skv, num_heads, hd), (1, 0, 2))
    s = jnp.einsum('hqd,hkd->hqk', q3, k3,
                   preferred_element_type=jnp.float32)        # (H, Sq, Skv)
    if mask is not None:
        s = s + mask[None, :, :]
    s = s - jnp.max(s, axis=-1, keepdims=True)
    p = jnp.exp(s)
    p = p * pl.reciprocal(jnp.sum(p, axis=-1, keepdims=True), approx=True)
    ctx = jnp.einsum('hqk,hkd->hqd', p.astype(_BF), v3,
                     preferred_element_type=jnp.float32)      # (H, Sq, hd)
    return jnp.transpose(ctx.astype(_BF), (1, 0, 2)).reshape(sq, d)


# ---------------------------------------------------------------------------
# Fused half-layer kernel
# grid = (2 * layers, batch_tiles); axis 0 'arbitrary', axis 1 'parallel'.
# Even half-layers: causal self-attn block.  Odd: image cross-attn block.
# ---------------------------------------------------------------------------
def halfblock_kernel(txt_ref, img_ref,
                     wq_ref, wk_ref, wv_ref, wo_ref, fcw_ref, prw_ref,
                     small_ref, fcb_ref, lnf_ref, proj_ref,
                     out_ref,
                     x_scr, ctx_scr,
                     *, num_heads, batch_tile, seq_q, seq_img, d_model):
    hl = pl.program_id(0)
    n_half = pl.num_programs(0)
    b = pl.program_id(1)
    mq = batch_tile * seq_q

    # First half-layer: load the text activations into the VMEM carry.
    @pl.when(hl == 0)
    def _():
        x_scr[b] = txt_ref[...].reshape(mq, d_model)

    small = small_ref[0]                                   # (P, D) f32

    def row(i):
        return small[i:i + 1]                              # (1, D)

    x = x_scr[b]                                           # (MQ, D) f32 carry
    xn = _layer_norm(x, row(_R_LN1_W), row(_R_LN1_B))
    # Query projection (1/sqrt(hd) folded into wq/bq) is common to both halves.
    q = jnp.dot(xn.astype(_BF), wq_ref[0],
                preferred_element_type=jnp.float32) + row(_R_BQ)      # (MQ, D)

    is_self = (hl % 2) == 0

    @pl.when(is_self)
    def _():
        # Self-attention: k/v share ln_1(x); causal mask generated with iota.
        k = jnp.dot(xn.astype(_BF), wk_ref[0],
                    preferred_element_type=jnp.float32) + row(_R_BK)
        v = jnp.dot(xn.astype(_BF), wv_ref[0],
                    preferred_element_type=jnp.float32) + row(_R_BV)
        rows_i = lax.broadcasted_iota(jnp.int32, (seq_q, seq_q), 0)
        cols_i = lax.broadcasted_iota(jnp.int32, (seq_q, seq_q), 1)
        causal = jnp.where(cols_i > rows_i, _NEG_INF, 0.0).astype(jnp.float32)
        for bi in range(batch_tile):
            ctx_scr[bi] = _attention_heads(
                q[bi * seq_q:(bi + 1) * seq_q],
                k[bi * seq_q:(bi + 1) * seq_q],
                v[bi * seq_q:(bi + 1) * seq_q],
                num_heads, causal)

    @pl.when(jnp.logical_not(is_self))
    def _():
        # Cross-attention: k/v from ln_1_kv(image), no mask.
        img = img_ref[...].reshape(batch_tile * seq_img, d_model)
        imgn = _layer_norm(img, row(_R_LNKV_W), row(_R_LNKV_B))
        k = jnp.dot(imgn.astype(_BF), wk_ref[0],
                    preferred_element_type=jnp.float32) + row(_R_BK)
        v = jnp.dot(imgn.astype(_BF), wv_ref[0],
                    preferred_element_type=jnp.float32) + row(_R_BV)
        for bi in range(batch_tile):
            ctx_scr[bi] = _attention_heads(
                q[bi * seq_q:(bi + 1) * seq_q],
                k[bi * seq_img:(bi + 1) * seq_img],
                v[bi * seq_img:(bi + 1) * seq_img],
                num_heads, None)

    # Shared tail: output projection, residual, MLP residual, carry update.
    ctx = ctx_scr[...].reshape(mq, d_model)                          # bf16
    attn_out = jnp.dot(ctx, wo_ref[0],
                       preferred_element_type=jnp.float32) + row(_R_BO)
    x = x + attn_out

    xn2 = _layer_norm(x, row(_R_LN2_W), row(_R_LN2_B))
    h = jnp.dot(xn2.astype(_BF), fcw_ref[0],
                preferred_element_type=jnp.float32) + fcb_ref[0]
    # TODO(synk): on v6e/v7x the GELU + intermediate could run in bf16 (bf16
    # VPU/EUP); kept f32 here so v5e (no bf16 VPU) and the reference match.
    h = _gelu(h)
    y = jnp.dot(h.astype(_BF), prw_ref[0],
                preferred_element_type=jnp.float32) + row(_R_PRB)
    x = x + y
    x_scr[b] = x

    # Last half-layer: fused ln_final + text_projection.
    @pl.when(hl == n_half - 1)
    def _():
        lnf = lnf_ref[...]                                           # (2, D)
        xf = _layer_norm(x, lnf[0:1], lnf[1:2])
        out = jnp.dot(xf.astype(_BF), proj_ref[...],
                      preferred_element_type=jnp.float32)
        out_ref[...] = out.reshape(batch_tile, seq_q, proj_ref.shape[1])


# ---------------------------------------------------------------------------
# MultimodalTransformer.forward wrapper
# ---------------------------------------------------------------------------
def multimodal_transformer_forward(image_embs, text_embs, prepared, num_heads,
                                   context_length=77, batch_tile=None):
    B, Sq, D = text_embs.shape
    Si = image_embs.shape[1]
    assert Sq <= context_length
    Dout = prepared['proj'].shape[1]
    n_half = prepared['wq'].shape[0]

    if batch_tile is None:
        batch_tile = B if B <= 8 else max(c for c in (8, 4, 2, 1) if B % c == 0)
    assert B % batch_tile == 0, "batch must be divisible by batch_tile"
    n_b = B // batch_tile
    mq = batch_tile * Sq

    weight_keys = ('wq', 'wk', 'wv', 'wo', 'fc_w', 'pr_w', 'small', 'fc_b')
    weight_arrays = [prepared[k] for k in weight_keys]
    const_arrays = [prepared['ln_final'], prepared['proj']]

    def wspec(arr):
        shape = (1,) + arr.shape[1:]
        nd = len(shape)
        # Index only on the half-layer axis: weights are re-DMA'd only when the
        # (outer) layer axis advances, and reused across all batch tiles.
        return pl.BlockSpec(shape, lambda hl, b: (hl,) + (0,) * (nd - 1))

    def cspec(arr):
        nd = arr.ndim
        return pl.BlockSpec(arr.shape, lambda hl, b: (0,) * nd)

    in_specs = ([pl.BlockSpec((batch_tile, Sq, D), lambda hl, b: (b, 0, 0)),
                 pl.BlockSpec((batch_tile, Si, D), lambda hl, b: (b, 0, 0))]
                + [wspec(a) for a in weight_arrays]
                + [cspec(a) for a in const_arrays])

    # VMEM budget: double-buffered streamed blocks + resident constants +
    # carry / ctx scratch + slack, clamped to the part's physical capacity.
    def nbytes(shape, dtype):
        n = 1
        for s in shape:
            n *= int(s)
        return n * jnp.dtype(dtype).itemsize

    streamed = sum(nbytes((1,) + a.shape[1:], a.dtype) for a in weight_arrays)
    streamed += nbytes((batch_tile, Sq, D), text_embs.dtype)
    streamed += nbytes((batch_tile, Si, D), image_embs.dtype)
    streamed += nbytes((batch_tile, Sq, Dout), jnp.float32)
    resident = sum(nbytes(a.shape, a.dtype) for a in const_arrays)
    scratch = nbytes((n_b, mq, D), jnp.float32) + nbytes((batch_tile, Sq, D), _BF)
    vmem_need = 2 * streamed + resident + scratch + (8 << 20)
    try:
        cap = pltpu.get_tpu_info().vmem_capacity_bytes
    except Exception:
        cap = 128 * 1024 * 1024
    vmem_limit = int(min(max(vmem_need, 32 << 20), max(cap - (4 << 20), 32 << 20)))

    kernel = functools.partial(
        halfblock_kernel, num_heads=num_heads, batch_tile=batch_tile,
        seq_q=Sq, seq_img=Si, d_model=D)

    return pl.pallas_call(
        kernel,
        grid=(n_half, n_b),
        in_specs=in_specs,
        out_specs=pl.BlockSpec((batch_tile, Sq, Dout), lambda hl, b: (b, 0, 0)),
        out_shape=jax.ShapeDtypeStruct((B, Sq, Dout), jnp.float32),
        scratch_shapes=[pltpu.VMEM((n_b, mq, D), jnp.float32),   # hidden-state carry
                        pltpu.VMEM((batch_tile, Sq, D), _BF)],   # attention context
        compiler_params=pltpu.CompilerParams(
            dimension_semantics=("arbitrary", "parallel"),
            vmem_limit_bytes=vmem_limit),
    )(text_embs, image_embs, *weight_arrays, *const_arrays)


# ---------------------------------------------------------------------------
# Parameters: PyTorch-convention init, then host-side preparation
# ---------------------------------------------------------------------------
def init_block_params(key, D, mlp_width):
    ks = jax.random.split(key, 5)
    attn_std = D ** -0.5
    fc_std = (2 * D) ** -0.5
    return {
        'ln1_w': jnp.ones((1, D), jnp.float32), 'ln1_b': jnp.zeros((1, D), jnp.float32),
        'lnkv_w': jnp.ones((1, D), jnp.float32), 'lnkv_b': jnp.zeros((1, D), jnp.float32),
        'w_in': attn_std * jax.random.normal(ks[0], (3 * D, D), jnp.float32),
        'b_in': 0.02 * jax.random.normal(ks[1], (1, 3 * D), jnp.float32),
        'w_out': attn_std * jax.random.normal(ks[2], (D, D), jnp.float32),
        'b_out': jnp.zeros((1, D), jnp.float32),
        'ln2_w': jnp.ones((1, D), jnp.float32), 'ln2_b': jnp.zeros((1, D), jnp.float32),
        'fc_w': fc_std * jax.random.normal(ks[3], (mlp_width, D), jnp.float32),
        'fc_b': jnp.zeros((1, mlp_width), jnp.float32),
        'pr_w': attn_std * jax.random.normal(ks[4], (D, mlp_width), jnp.float32),
        'pr_b': jnp.zeros((1, D), jnp.float32),
    }


def init_model_params(key, width, layers, mlp_ratio, output_dim):
    mlp_width = int(width * mlp_ratio)
    keys = jax.random.split(key, 2 * layers + 1)
    layer_params = []
    for i in range(layers):
        layer_params.append({
            'self': init_block_params(keys[2 * i], width, mlp_width),
            'cross': init_block_params(keys[2 * i + 1], width, mlp_width),
        })
    return {
        'layers': layer_params,
        'ln_final_w': jnp.ones((1, width), jnp.float32),
        'ln_final_b': jnp.zeros((1, width), jnp.float32),
        'text_projection': (width ** -0.5)
        * jax.random.normal(keys[-1], (width, output_dim), jnp.float32),
    }


def prepare_block(p, D, H):
    """Pre-transpose / split / scale-fold / bf16-cast the PyTorch-layout params."""
    hd = D // H
    scale = hd ** -0.5
    W, Bi = p['w_in'], p['b_in']
    small = jnp.concatenate([
        p['ln1_w'], p['ln1_b'], p['lnkv_w'], p['lnkv_b'],
        Bi[:, 0:D] * scale, Bi[:, D:2 * D], Bi[:, 2 * D:3 * D],
        p['b_out'], p['ln2_w'], p['ln2_b'], p['pr_b']], axis=0)   # (P_SMALL, D)
    return {
        'wq': (W[0:D].T * scale).astype(_BF),
        'wk': W[D:2 * D].T.astype(_BF),
        'wv': W[2 * D:3 * D].T.astype(_BF),
        'wo': p['w_out'].T.astype(_BF),
        'fc_w': p['fc_w'].T.astype(_BF),
        'pr_w': p['pr_w'].T.astype(_BF),
        'small': small.astype(jnp.float32),
        'fc_b': p['fc_b'],
    }


def prepare_model_params(raw, D, H):
    # Half-layer order: [layer0 self, layer0 cross, layer1 self, layer1 cross, ...]
    blocks = []
    for lp in raw['layers']:
        blocks.append(prepare_block(lp['self'], D, H))
        blocks.append(prepare_block(lp['cross'], D, H))
    keys = ('wq', 'wk', 'wv', 'wo', 'fc_w', 'pr_w', 'small', 'fc_b')
    prepared = {k: jnp.stack([blk[k] for blk in blocks]) for k in keys}
    prepared['ln_final'] = jnp.concatenate(
        [raw['ln_final_w'], raw['ln_final_b']], axis=0)            # (2, D)
    prepared['proj'] = raw['text_projection'].astype(_BF)
    prepared['blocks'] = blocks                                    # for the reference
    return prepared


# ---------------------------------------------------------------------------
# Pure-JAX reference (same prepared bf16 weights, exact softmax) for sanity
# ---------------------------------------------------------------------------
def _ref_block(qx, kvx, mask, blk, H, cross):
    bf = _BF
    B, Sq, D = qx.shape
    hd = D // H
    small = blk['small']
    ln1_w, ln1_b = small[0], small[1]
    lnkv_w, lnkv_b = small[2], small[3]
    bq, bk, bv, bo = small[4], small[5], small[6], small[7]
    ln2_w, ln2_b, pr_b = small[8], small[9], small[10]
    qn = _layer_norm(qx, ln1_w, ln1_b)
    kvn = _layer_norm(kvx, lnkv_w, lnkv_b) if cross else _layer_norm(kvx, ln1_w, ln1_b)
    q = jnp.einsum('bsd,de->bse', qn.astype(bf), blk['wq'],
                   preferred_element_type=jnp.float32) + bq
    k = jnp.einsum('bsd,de->bse', kvn.astype(bf), blk['wk'],
                   preferred_element_type=jnp.float32) + bk
    v = jnp.einsum('bsd,de->bse', kvn.astype(bf), blk['wv'],
                   preferred_element_type=jnp.float32) + bv
    q = q.reshape(B, Sq, H, hd).astype(bf)
    k = k.reshape(B, -1, H, hd).astype(bf)
    v = v.reshape(B, -1, H, hd).astype(bf)
    s = jnp.einsum('bqhd,bkhd->bhqk', q, k, preferred_element_type=jnp.float32)
    if mask is not None:
        s = s + mask[None, None]
    a = jax.nn.softmax(s, axis=-1)
    ctx = jnp.einsum('bhqk,bkhd->bqhd', a.astype(bf), v,
                     preferred_element_type=jnp.float32)
    o = jnp.einsum('bsd,de->bse', ctx.reshape(B, Sq, D).astype(bf), blk['wo'],
                   preferred_element_type=jnp.float32) + bo
    x = qx + o
    xn = _layer_norm(x, ln2_w, ln2_b)
    h = jnp.einsum('bsd,dm->bsm', xn.astype(bf), blk['fc_w'],
                   preferred_element_type=jnp.float32) + blk['fc_b'][0]
    h = _gelu(h)
    y = jnp.einsum('bsm,md->bsd', h.astype(bf), blk['pr_w'],
                   preferred_element_type=jnp.float32) + pr_b
    return x + y


def _ref_forward(image_embs, text_embs, prepared, H):
    S = text_embs.shape[1]
    causal = jnp.triu(jnp.full((S, S), _NEG_INF, jnp.float32), k=1)
    x = text_embs
    blocks = prepared['blocks']
    for i in range(0, len(blocks), 2):
        x = _ref_block(x, x, causal, blocks[i], H, cross=False)
        x = _ref_block(x, image_embs, None, blocks[i + 1], H, cross=True)
    lnf = prepared['ln_final']
    xn = _layer_norm(x, lnf[0], lnf[1])
    return jnp.einsum('bsd,do->bso', xn.astype(_BF), prepared['proj'],
                      preferred_element_type=jnp.float32)


# ---------------------------------------------------------------------------
if __name__ == "__main__":
    B = 2
    width = 32          # d_model
    heads = 4
    layers = 2
    mlp_ratio = 4.0
    output_dim = 64
    context_length = 77
    S_txt = 8           # text sequence length (<= context_length)
    S_img = 16          # image token sequence length

    root = jax.random.PRNGKey(0)
    k_img, k_txt, k_par = jax.random.split(root, 3)
    image_embs = jax.random.normal(k_img, (B, S_img, width), jnp.float32)
    text_embs = jax.random.normal(k_txt, (B, S_txt, width), jnp.float32)

    raw_params = init_model_params(k_par, width, layers, mlp_ratio, output_dim)
    prepared = prepare_model_params(raw_params, width, heads)

    out = multimodal_transformer_forward(image_embs, text_embs, prepared,
                                         heads, context_length)
    out = jax.block_until_ready(out)

    ref = _ref_forward(image_embs, text_embs, prepared, heads)
    assert out.shape == (B, S_txt, output_dim)
    # bf16 matmuls + approx-reciprocal softmax vs exact-softmax reference.
    assert bool(jnp.allclose(out, ref, atol=5e-2, rtol=5e-2)), "mismatch vs reference"

    print("KERNEL_OK")
</pallas_src>

<mosaic_0001>
module attributes {stable_mosaic.version = 11 : i64} {
  func.func @halfblock_kernel(%arg0: i32, %arg1: i32, %arg2: memref<2x8x32xf32, #tpu.memory_space<vmem>>, %arg3: memref<2x16x32xf32, #tpu.memory_space<vmem>>, %arg4: memref<1x32x32xbf16, #tpu.memory_space<vmem>>, %arg5: memref<1x32x32xbf16, #tpu.memory_space<vmem>>, %arg6: memref<1x32x32xbf16, #tpu.memory_space<vmem>>, %arg7: memref<1x32x32xbf16, #tpu.memory_space<vmem>>, %arg8: memref<1x32x128xbf16, #tpu.memory_space<vmem>>, %arg9: memref<1x128x32xbf16, #tpu.memory_space<vmem>>, %arg10: memref<1x11x32xf32, #tpu.memory_space<vmem>>, %arg11: memref<1x1x128xf32, #tpu.memory_space<vmem>>, %arg12: memref<2x32xf32, #tpu.memory_space<vmem>>, %arg13: memref<32x64xbf16, #tpu.memory_space<vmem>>, %arg14: memref<2x8x64xf32, #tpu.memory_space<vmem>>, %arg15: memref<1x16x32xf32, #tpu.memory_space<vmem>>, %arg16: memref<2x8x32xbf16, #tpu.memory_space<vmem>>) attributes {dimension_semantics = [#tpu.dimension_semantics<arbitrary>, #tpu.dimension_semantics<parallel>], iteration_bounds = array<i64: 4, 1>, scalar_prefetch = 0 : i64, scratch_operands = 2 : i64, tpu.core_type = #tpu.core_type<tc>, window_params = [{transform_indices = @transform_0, window_bounds = array<i64: 2, 8, 32>}, {transform_indices = @transform_1, window_bounds = array<i64: 2, 16, 32>}, {transform_indices = @transform_2, window_bounds = array<i64: 1, 32, 32>}, {transform_indices = @transform_3, window_bounds = array<i64: 1, 32, 32>}, {transform_indices = @transform_4, window_bounds = array<i64: 1, 32, 32>}, {transform_indices = @transform_5, window_bounds = array<i64: 1, 32, 32>}, {transform_indices = @transform_6, window_bounds = array<i64: 1, 32, 128>}, {transform_indices = @transform_7, window_bounds = array<i64: 1, 128, 32>}, {transform_indices = @transform_8, window_bounds = array<i64: 1, 11, 32>}, {transform_indices = @transform_9, window_bounds = array<i64: 1, 1, 128>}, {pipeline_mode = #tpu.pipeline_mode<synchronous>, transform_indices = @transform_10, window_bounds = array<i64: 2, 32>}, {pipeline_mode = #tpu.pipeline_mode<synchronous>, transform_indices = @transform_11, window_bounds = array<i64: 32, 64>}, {transform_indices = @transform_12, window_bounds = array<i64: 2, 8, 64>}]} {
    %c0_i32 = arith.constant 0 : i32
    %0 = arith.cmpi eq, %arg0, %c0_i32 : i32
    %1 = arith.extui %0 : i1 to i32
    %c0_i32_0 = arith.constant 0 : i32
    %2 = arith.cmpi ne, %1, %c0_i32_0 : i32
    scf.if %2 {
      %c0_49 = arith.constant 0 : index
      %c0_50 = arith.constant 0 : index
      %c0_51 = arith.constant 0 : index
      %119 = vector.load %arg2[%c0_49, %c0_50, %c0_51] : memref<2x8x32xf32, #tpu.memory_space<vmem>>, vector<2x8x32xf32>
      %120 = vector.shape_cast %119 : vector<2x8x32xf32> to vector<16x32xf32>
      %121 = arith.index_cast %arg1 : i32 to index
      %c0_52 = arith.constant 0 : index
      %c0_53 = arith.constant 0 : index
      %122 = vector.load %arg15[%121, %c0_52, %c0_53] : memref<1x16x32xf32, #tpu.memory_space<vmem>>, vector<1x16x32xf32>
      %123 = vector.shape_cast %122 : vector<1x16x32xf32> to vector<16x32xf32>
      %124 = vector.shape_cast %120 : vector<16x32xf32> to vector<1x16x32xf32>
      tpu.vector_store %arg15[%121, %c0_52, %c0_53], %124 {strides = array<i32>} : memref<1x16x32xf32, #tpu.memory_space<vmem>>, vector<1x16x32xf32>,
    } else {
    }
    %c0 = arith.constant 0 : index
    %c0_1 = arith.constant 0 : index
    %c0_2 = arith.constant 0 : index
    %3 = vector.load %arg10[%c0, %c0_1, %c0_2] : memref<1x11x32xf32, #tpu.memory_space<vmem>>, vector<1x11x32xf32>
    %4 = vector.shape_cast %3 : vector<1x11x32xf32> to vector<11x32xf32>
    %5 = arith.index_cast %arg1 : i32 to index
    %c0_3 = arith.constant 0 : index
    %c0_4 = arith.constant 0 : index
    %6 = vector.load %arg15[%5, %c0_3, %c0_4] : memref<1x16x32xf32, #tpu.memory_space<vmem>>, vector<1x16x32xf32>
    %7 = vector.shape_cast %6 : vector<1x16x32xf32> to vector<16x32xf32>
    %8 = vector.extract_strided_slice %4 {offsets = [0, 0], sizes = [1, 32], strides = [1, 1]} : vector<11x32xf32> to vector<1x32xf32>
    %9 = vector.extract_strided_slice %4 {offsets = [1, 0], sizes = [1, 32], strides = [1, 1]} : vector<11x32xf32> to vector<1x32xf32>
    %cst = arith.constant dense<0.000000e+00> : vector<16xf32>
    %10 = vector.multi_reduction <add>, %7, %cst [1] : vector<16x32xf32> to vector<16xf32>
    %11 = vector.shape_cast %10 : vector<16xf32> to vector<16x1xf32>
    %cst_5 = arith.constant 3.200000e+01 : f32
    %12 = vector.broadcast %cst_5 : f32 to vector<16x1xf32>
    %13 = arith.divf %11, %12 : vector<16x1xf32>
    %14 = vector.broadcast %13 : vector<16x1xf32> to vector<16x32xf32>
    %15 = arith.subf %7, %14 : vector<16x32xf32>
    %16 = arith.mulf %15, %15 : vector<16x32xf32>
    %cst_6 = arith.constant dense<0.000000e+00> : vector<16xf32>
    %17 = vector.multi_reduction <add>, %16, %cst_6 [1] : vector<16x32xf32> to vector<16xf32>
    %18 = vector.shape_cast %17 : vector<16xf32> to vector<16x1xf32>
    %cst_7 = arith.constant 3.200000e+01 : f32
    %19 = vector.broadcast %cst_7 : f32 to vector<16x1xf32>
    %20 = arith.divf %18, %19 : vector<16x1xf32>
    %21 = vector.broadcast %13 : vector<16x1xf32> to vector<16x32xf32>
    %22 = arith.subf %7, %21 : vector<16x32xf32>
    %cst_8 = arith.constant 9.99999974E-6 : f32
    %23 = vector.broadcast %cst_8 : f32 to vector<16x1xf32>
    %24 = arith.addf %20, %23 : vector<16x1xf32>
    %25 = math.rsqrt %24 : vector<16x1xf32>
    %26 = vector.broadcast %25 : vector<16x1xf32> to vector<16x32xf32>
    %27 = arith.mulf %22, %26 : vector<16x32xf32>
    %28 = vector.broadcast %8 : vector<1x32xf32> to vector<16x32xf32>
    %29 = arith.mulf %27, %28 : vector<16x32xf32>
    %30 = vector.broadcast %9 : vector<1x32xf32> to vector<16x32xf32>
    %31 = arith.addf %29, %30 : vector<16x32xf32>
    %32 = arith.truncf %31 : vector<16x32xf32> to vector<16x32xbf16>
    %c0_9 = arith.constant 0 : index
    %c0_10 = arith.constant 0 : index
    %c0_11 = arith.constant 0 : index
    %33 = vector.load %arg4[%c0_9, %c0_10, %c0_11] : memref<1x32x32xbf16, #tpu.memory_space<vmem>>, vector<1x32x32xbf16>
    %34 = vector.shape_cast %33 : vector<1x32x32xbf16> to vector<32x32xbf16>
    %cst_12 = arith.constant dense<0.000000e+00> : vector<16x32xf32>
    %35 = tpu.matmul %32, %34, %cst_12 {dimension_numbers = #tpu.dot_dimension_numbers<[1], [0], [0], [1], [0, 0, 1, 1], [], []>} : vector<16x32xbf16>, vector<32x32xbf16>, vector<16x32xf32> -> vector<16x32xf32>
    %36 = vector.extract_strided_slice %4 {offsets = [4, 0], sizes = [1, 32], strides = [1, 1]} : vector<11x32xf32> to vector<1x32xf32>
    %37 = vector.broadcast %36 : vector<1x32xf32> to vector<16x32xf32>
    %38 = arith.addf %35, %37 : vector<16x32xf32>
    %c2_i32 = arith.constant 2 : i32
    %c0_i32_13 = arith.constant 0 : i32
    %39 = arith.cmpi eq, %c2_i32, %c0_i32_13 : i32
    %c1_i32 = arith.constant 1 : i32
    %40 = arith.select %39, %c1_i32, %c2_i32 : i32
    %41 = arith.remsi %arg0, %40 : i32
    %c0_i32_14 = arith.constant 0 : i32
    %42 = arith.cmpi ne, %41, %c0_i32_14 : i32
    %c0_i32_15 = arith.constant 0 : i32
    %43 = arith.cmpi slt, %41, %c0_i32_15 : i32
    %c0_i32_16 = arith.constant 0 : i32
    %44 = arith.cmpi slt, %40, %c0_i32_16 : i32
    %45 = arith.xori %43, %44 : i1
    %46 = arith.andi %45, %42 : i1
    %47 = arith.addi %41, %40 : i32
    %48 = arith.select %46, %47, %41 : i32
    %c0_i32_17 = arith.constant 0 : i32
    %49 = arith.cmpi eq, %48, %c0_i32_17 : i32
    %50 = arith.extui %49 : i1 to i32
    %c0_i32_18 = arith.constant 0 : i32
    %51 = arith.cmpi ne, %50, %c0_i32_18 : i32
    scf.if %51 {
      %119 = arith.truncf %31 : vector<16x32xf32> to vector<16x32xbf16>
      %c0_49 = arith.constant 0 : index
      %c0_50 = arith.constant 0 : index
      %c0_51 = arith.constant 0 : index
      %120 = vector.load %arg5[%c0_49, %c0_50, %c0_51] : memref<1x32x32xbf16, #tpu.memory_space<vmem>>, vector<1x32x32xbf16>
      %121 = vector.shape_cast %120 : vector<1x32x32xbf16> to vector<32x32xbf16>
      %cst_52 = arith.constant dense<0.000000e+00> : vector<16x32xf32>
      %122 = tpu.matmul %119, %121, %cst_52 {dimension_numbers = #tpu.dot_dimension_numbers<[1], [0], [0], [1], [0, 0, 1, 1], [], []>} : vector<16x32xbf16>, vector<32x32xbf16>, vector<16x32xf32> -> vector<16x32xf32>
      %123 = vector.extract_strided_slice %4 {offsets = [5, 0], sizes = [1, 32], strides = [1, 1]} : vector<11x32xf32> to vector<1x32xf32>
      %124 = vector.broadcast %123 : vector<1x32xf32> to vector<16x32xf32>
      %125 = arith.addf %122, %124 : vector<16x32xf32>
      %126 = arith.truncf %31 : vector<16x32xf32> to vector<16x32xbf16>
      %c0_53 = arith.constant 0 : index
      %c0_54 = arith.constant 0 : index
      %c0_55 = arith.constant 0 : index
      %127 = vector.load %arg6[%c0_53, %c0_54, %c0_55] : memref<1x32x32xbf16, #tpu.memory_space<vmem>>, vector<1x32x32xbf16>
      %128 = vector.shape_cast %127 : vector<1x32x32xbf16> to vector<32x32xbf16>
      %cst_56 = arith.constant dense<0.000000e+00> : vector<16x32xf32>
      %129 = tpu.matmul %126, %128, %cst_56 {dimension_numbers = #tpu.dot_dimension_numbers<[1], [0], [0], [1], [0, 0, 1, 1], [], []>} : vector<16x32xbf16>, vector<32x32xbf16>, vector<16x32xf32> -> vector<16x32xf32>
      %130 = vector.extract_strided_slice %4 {offsets = [6, 0], sizes = [1, 32], strides = [1, 1]} : vector<11x32xf32> to vector<1x32xf32>
      %131 = vector.broadcast %130 : vector<1x32xf32> to vector<16x32xf32>
      %132 = arith.addf %129, %131 : vector<16x32xf32>
      %133 = tpu.iota {dimensions = array<i32: 0>} : vector<8x8xi32>
      %134 = tpu.iota {dimensions = array<i32: 1>} : vector<8x8xi32>
      %135 = arith.cmpi sgt, %134, %133 : vector<8x8xi32>
      %cst_57 = arith.constant -1.000000e+30 : f32
      %cst_58 = arith.constant 0.000000e+00 : f32
      %136 = vector.broadcast %cst_57 : f32 to vector<8x8xf32>
      %137 = vector.broadcast %cst_58 : f32 to vector<8x8xf32>
      %138 = arith.select %135, %136, %137 : vector<8x8xi1>, vector<8x8xf32>
      %139 = vector.extract_strided_slice %38 {offsets = [0, 0], sizes = [8, 32], strides = [1, 1]} : vector<16x32xf32> to vector<8x32xf32>
      %140 = vector.extract_strided_slice %125 {offsets = [0, 0], sizes = [8, 32], strides = [1, 1]} : vector<16x32xf32> to vector<8x32xf32>
      %141 = vector.extract_strided_slice %132 {offsets = [0, 0], sizes = [8, 32], strides = [1, 1]} : vector<16x32xf32> to vector<8x32xf32>
      %142 = arith.truncf %139 : vector<8x32xf32> to vector<8x32xbf16>
      %143 = vector.shape_cast %142 : vector<8x32xbf16> to vector<8x4x8xbf16>
      %144 = tpu.transpose %143, [1, 0, 2] : vector<8x4x8xbf16> -> vector<4x8x8xbf16>
      %145 = arith.truncf %140 : vector<8x32xf32> to vector<8x32xbf16>
      %146 = vector.shape_cast %145 : vector<8x32xbf16> to vector<8x4x8xbf16>
      %147 = tpu.transpose %146, [1, 0, 2] : vector<8x4x8xbf16> -> vector<4x8x8xbf16>
      %148 = arith.truncf %141 : vector<8x32xf32> to vector<8x32xbf16>
      %149 = vector.shape_cast %148 : vector<8x32xbf16> to vector<8x4x8xbf16>
      %150 = tpu.transpose %149, [1, 0, 2] : vector<8x4x8xbf16> -> vector<4x8x8xbf16>
      "tpu.trace_start"() <{level = 10 : i32, message = "hqd,hkd->hqk"}> : () -> ()
      %cst_59 = arith.constant dense<0.000000e+00> : vector<4x8x8xf32>
      %151 = tpu.matmul %144, %147, %cst_59 {dimension_numbers = #tpu.dot_dimension_numbers<[2], [2], [1], [1], [0, 0, 0, 1, 1, 1], [0], [0]>} : vector<4x8x8xbf16>, vector<4x8x8xbf16>, vector<4x8x8xf32> -> vector<4x8x8xf32>
      "tpu.trace_stop"() : () -> ()
      %152 = vector.shape_cast %138 : vector<8x8xf32> to vector<1x8x8xf32>
      %153 = vector.broadcast %152 : vector<1x8x8xf32> to vector<4x8x8xf32>
      %154 = arith.addf %151, %153 : vector<4x8x8xf32>
      %cst_60 = arith.constant dense<0xFF800000> : vector<4x8xf32>
      %155 = vector.multi_reduction <maximumf>, %154, %cst_60 [2] : vector<4x8x8xf32> to vector<4x8xf32>
      %156 = vector.shape_cast %155 : vector<4x8xf32> to vector<4x8x1xf32>
      %157 = vector.broadcast %156 : vector<4x8x1xf32> to vector<4x8x8xf32>
      %158 = arith.subf %154, %157 : vector<4x8x8xf32>
      %159 = math.exp %158 : vector<4x8x8xf32>
      %cst_61 = arith.constant dense<0.000000e+00> : vector<4x8xf32>
      %160 = vector.multi_reduction <add>, %159, %cst_61 [2] : vector<4x8x8xf32> to vector<4x8xf32>
      %161 = vector.shape_cast %160 : vector<4x8xf32> to vector<4x8x1xf32>
      %162 = tpu.reciprocal %161 {approx = true} : vector<4x8x1xf32> -> vector<4x8x1xf32>
      %163 = vector.broadcast %162 : vector<4x8x1xf32> to vector<4x8x8xf32>
      %164 = arith.mulf %159, %163 : vector<4x8x8xf32>
      %165 = arith.truncf %164 : vector<4x8x8xf32> to vector<4x8x8xbf16>
      "tpu.trace_start"() <{level = 10 : i32, message = "hqk,hkd->hqd"}> : () -> ()
      %cst_62 = arith.constant dense<0.000000e+00> : vector<4x8x8xf32>
      %166 = tpu.matmul %165, %150, %cst_62 {dimension_numbers = #tpu.dot_dimension_numbers<[2], [1], [1], [2], [0, 0, 0, 1, 1, 2], [0], [0]>} : vector<4x8x8xbf16>, vector<4x8x8xbf16>, vector<4x8x8xf32> -> vector<4x8x8xf32>
      "tpu.trace_stop"() : () -> ()
      %167 = arith.truncf %166 : vector<4x8x8xf32> to vector<4x8x8xbf16>
      %168 = tpu.transpose %167, [1, 0, 2] : vector<4x8x8xbf16> -> vector<8x4x8xbf16>
      %169 = vector.shape_cast %168 : vector<8x4x8xbf16> to vector<8x32xbf16>
      %c0_63 = arith.constant 0 : index
      %c0_64 = arith.constant 0 : index
      %c0_65 = arith.constant 0 : index
      %170 = vector.load %arg16[%c0_63, %c0_64, %c0_65] : memref<2x8x32xbf16, #tpu.memory_space<vmem>>, vector<1x8x32xbf16>
      %171 = vector.shape_cast %170 : vector<1x8x32xbf16> to vector<8x32xbf16>
      %172 = vector.shape_cast %169 : vector<8x32xbf16> to vector<1x8x32xbf16>
      tpu.vector_store %arg16[%c0_63, %c0_64, %c0_65], %172 {strides = array<i32>} : memref<2x8x32xbf16, #tpu.memory_space<vmem>>, vector<1x8x32xbf16>,
      %173 = vector.extract_strided_slice %38 {offsets = [8, 0], sizes = [8, 32], strides = [1, 1]} : vector<16x32xf32> to vector<8x32xf32>
      %174 = vector.extract_strided_slice %125 {offsets = [8, 0], sizes = [8, 32], strides = [1, 1]} : vector<16x32xf32> to vector<8x32xf32>
      %175 = vector.extract_strided_slice %132 {offsets = [8, 0], sizes = [8, 32], strides = [1, 1]} : vector<16x32xf32> to vector<8x32xf32>
      %176 = arith.truncf %173 : vector<8x32xf32> to vector<8x32xbf16>
      %177 = vector.shape_cast %176 : vector<8x32xbf16> to vector<8x4x8xbf16>
      %178 = tpu.transpose %177, [1, 0, 2] : vector<8x4x8xbf16> -> vector<4x8x8xbf16>
      %179 = arith.truncf %174 : vector<8x32xf32> to vector<8x32xbf16>
      %180 = vector.shape_cast %179 : vector<8x32xbf16> to vector<8x4x8xbf16>
      %181 = tpu.transpose %180, [1, 0, 2] : vector<8x4x8xbf16> -> vector<4x8x8xbf16>
      %182 = arith.truncf %175 : vector<8x32xf32> to vector<8x32xbf16>
      %183 = vector.shape_cast %182 : vector<8x32xbf16> to vector<8x4x8xbf16>
      %184 = tpu.transpose %183, [1, 0, 2] : vector<8x4x8xbf16> -> vector<4x8x8xbf16>
      "tpu.trace_start"() <{level = 10 : i32, message = "hqd,hkd->hqk"}> : () -> ()
      %cst_66 = arith.constant dense<0.000000e+00> : vector<4x8x8xf32>
      %185 = tpu.matmul %178, %181, %cst_66 {dimension_numbers = #tpu.dot_dimension_numbers<[2], [2], [1], [1], [0, 0, 0, 1, 1, 1], [0], [0]>} : vector<4x8x8xbf16>, vector<4x8x8xbf16>, vector<4x8x8xf32> -> vector<4x8x8xf32>
      "tpu.trace_stop"() : () -> ()
      %186 = vector.shape_cast %138 : vector<8x8xf32> to vector<1x8x8xf32>
      %187 = vector.broadcast %186 : vector<1x8x8xf32> to vector<4x8x8xf32>
      %188 = arith.addf %185, %187 : vector<4x8x8xf32>
      %cst_67 = arith.constant dense<0xFF800000> : vector<4x8xf32>
      %189 = vector.multi_reduction <maximumf>, %188, %cst_67 [2] : vector<4x8x8xf32> to vector<4x8xf32>
      %190 = vector.shape_cast %189 : vector<4x8xf32> to vector<4x8x1xf32>
      %191 = vector.broadcast %190 : vector<4x8x1xf32> to vector<4x8x8xf32>
      %192 = arith.subf %188, %191 : vector<4x8x8xf32>
      %193 = math.exp %192 : vector<4x8x8xf32>
      %cst_68 = arith.constant dense<0.000000e+00> : vector<4x8xf32>
      %194 = vector.multi_reduction <add>, %193, %cst_68 [2] : vector<4x8x8xf32> to vector<4x8xf32>
      %195 = vector.shape_cast %194 : vector<4x8xf32> to vector<4x8x1xf32>
      %196 = tpu.reciprocal %195 {approx = true} : vector<4x8x1xf32> -> vector<4x8x1xf32>
      %197 = vector.broadcast %196 : vector<4x8x1xf32> to vector<4x8x8xf32>
      %198 = arith.mulf %193, %197 : vector<4x8x8xf32>
      %199 = arith.truncf %198 : vector<4x8x8xf32> to vector<4x8x8xbf16>
      "tpu.trace_start"() <{level = 10 : i32, message = "hqk,hkd->hqd"}> : () -> ()
      %cst_69 = arith.constant dense<0.000000e+00> : vector<4x8x8xf32>
      %200 = tpu.matmul %199, %184, %cst_69 {dimension_numbers = #tpu.dot_dimension_numbers<[2], [1], [1], [2], [0, 0, 0, 1, 1, 2], [0], [0]>} : vector<4x8x8xbf16>, vector<4x8x8xbf16>, vector<4x8x8xf32> -> vector<4x8x8xf32>
      "tpu.trace_stop"() : () -> ()
      %201 = arith.truncf %200 : vector<4x8x8xf32> to vector<4x8x8xbf16>
      %202 = tpu.transpose %201, [1, 0, 2] : vector<4x8x8xbf16> -> vector<8x4x8xbf16>
      %203 = vector.shape_cast %202 : vector<8x4x8xbf16> to vector<8x32xbf16>
      %c1 = arith.constant 1 : index
      %c0_70 = arith.constant 0 : index
      %c0_71 = arith.constant 0 : index
      %204 = vector.load %arg16[%c1, %c0_70, %c0_71] : memref<2x8x32xbf16, #tpu.memory_space<vmem>>, vector<1x8x32xbf16>
      %205 = vector.shape_cast %204 : vector<1x8x32xbf16> to vector<8x32xbf16>
      %206 = vector.shape_cast %203 : vector<8x32xbf16> to vector<1x8x32xbf16>
      tpu.vector_store %arg16[%c1, %c0_70, %c0_71], %206 {strides = array<i32>} : memref<2x8x32xbf16, #tpu.memory_space<vmem>>, vector<1x8x32xbf16>,
    } else {
    }
    %true = arith.constant true
    %52 = arith.xori %49, %true : i1
    %53 = arith.extui %52 : i1 to i32
    %c0_i32_19 = arith.constant 0 : i32
    %54 = arith.cmpi ne, %53, %c0_i32_19 : i32
    scf.if %54 {
      %c0_49 = arith.constant 0 : index
      %c0_50 = arith.constant 0 : index
      %c0_51 = arith.constant 0 : index
      %119 = vector.load %arg3[%c0_49, %c0_50, %c0_51] : memref<2x16x32xf32, #tpu.memory_space<vmem>>, vector<2x16x32xf32>
      %120 = vector.shape_cast %119 : vector<2x16x32xf32> to vector<32x32xf32>
      %121 = vector.extract_strided_slice %4 {offsets = [2, 0], sizes = [1, 32], strides = [1, 1]} : vector<11x32xf32> to vector<1x32xf32>
      %122 = vector.extract_strided_slice %4 {offsets = [3, 0], sizes = [1, 32], strides = [1, 1]} : vector<11x32xf32> to vector<1x32xf32>
      %cst_52 = arith.constant dense<0.000000e+00> : vector<32xf32>
      %123 = vector.multi_reduction <add>, %120, %cst_52 [1] : vector<32x32xf32> to vector<32xf32>
      %124 = vector.shape_cast %123 : vector<32xf32> to vector<32x1xf32>
      %cst_53 = arith.constant 3.200000e+01 : f32
      %125 = vector.broadcast %cst_53 : f32 to vector<32x1xf32>
      %126 = arith.divf %124, %125 : vector<32x1xf32>
      %127 = vector.broadcast %126 : vector<32x1xf32> to vector<32x32xf32>
      %128 = arith.subf %120, %127 : vector<32x32xf32>
      %129 = arith.mulf %128, %128 : vector<32x32xf32>
      %cst_54 = arith.constant dense<0.000000e+00> : vector<32xf32>
      %130 = vector.multi_reduction <add>, %129, %cst_54 [1] : vector<32x32xf32> to vector<32xf32>
      %131 = vector.shape_cast %130 : vector<32xf32> to vector<32x1xf32>
      %cst_55 = arith.constant 3.200000e+01 : f32
      %132 = vector.broadcast %cst_55 : f32 to vector<32x1xf32>
      %133 = arith.divf %131, %132 : vector<32x1xf32>
      %134 = vector.broadcast %126 : vector<32x1xf32> to vector<32x32xf32>
      %135 = arith.subf %120, %134 : vector<32x32xf32>
      %cst_56 = arith.constant 9.99999974E-6 : f32
      %136 = vector.broadcast %cst_56 : f32 to vector<32x1xf32>
      %137 = arith.addf %133, %136 : vector<32x1xf32>
      %138 = math.rsqrt %137 : vector<32x1xf32>
      %139 = vector.broadcast %138 : vector<32x1xf32> to vector<32x32xf32>
      %140 = arith.mulf %135, %139 : vector<32x32xf32>
      %141 = vector.broadcast %121 : vector<1x32xf32> to vector<32x32xf32>
      %142 = arith.mulf %140, %141 : vector<32x32xf32>
      %143 = vector.broadcast %122 : vector<1x32xf32> to vector<32x32xf32>
      %144 = arith.addf %142, %143 : vector<32x32xf32>
      %145 = arith.truncf %144 : vector<32x32xf32> to vector<32x32xbf16>
      %c0_57 = arith.constant 0 : index
      %c0_58 = arith.constant 0 : index
      %c0_59 = arith.constant 0 : index
      %146 = vector.load %arg5[%c0_57, %c0_58, %c0_59] : memref<1x32x32xbf16, #tpu.memory_space<vmem>>, vector<1x32x32xbf16>
      %147 = vector.shape_cast %146 : vector<1x32x32xbf16> to vector<32x32xbf16>
      %cst_60 = arith.constant dense<0.000000e+00> : vector<32x32xf32>
      %148 = tpu.matmul %145, %147, %cst_60 {dimension_numbers = #tpu.dot_dimension_numbers<[1], [0], [0], [1], [0, 0, 1, 1], [], []>} : vector<32x32xbf16>, vector<32x32xbf16>, vector<32x32xf32> -> vector<32x32xf32>
      %149 = vector.extract_strided_slice %4 {offsets = [5, 0], sizes = [1, 32], strides = [1, 1]} : vector<11x32xf32> to vector<1x32xf32>
      %150 = vector.broadcast %149 : vector<1x32xf32> to vector<32x32xf32>
      %151 = arith.addf %148, %150 : vector<32x32xf32>
      %152 = arith.truncf %144 : vector<32x32xf32> to vector<32x32xbf16>
      %c0_61 = arith.constant 0 : index
      %c0_62 = arith.constant 0 : index
      %c0_63 = arith.constant 0 : index
      %153 = vector.load %arg6[%c0_61, %c0_62, %c0_63] : memref<1x32x32xbf16, #tpu.memory_space<vmem>>, vector<1x32x32xbf16>
      %154 = vector.shape_cast %153 : vector<1x32x32xbf16> to vector<32x32xbf16>
      %cst_64 = arith.constant dense<0.000000e+00> : vector<32x32xf32>
      %155 = tpu.matmul %152, %154, %cst_64 {dimension_numbers = #tpu.dot_dimension_numbers<[1], [0], [0], [1], [0, 0, 1, 1], [], []>} : vector<32x32xbf16>, vector<32x32xbf16>, vector<32x32xf32> -> vector<32x32xf32>
      %156 = vector.extract_strided_slice %4 {offsets = [6, 0], sizes = [1, 32], strides = [1, 1]} : vector<11x32xf32> to vector<1x32xf32>
      %157 = vector.broadcast %156 : vector<1x32xf32> to vector<32x32xf32>
      %158 = arith.addf %155, %157 : vector<32x32xf32>
      %159 = vector.extract_strided_slice %38 {offsets = [0, 0], sizes = [8, 32], strides = [1, 1]} : vector<16x32xf32> to vector<8x32xf32>
      %160 = vector.extract_strided_slice %151 {offsets = [0, 0], sizes = [16, 32], strides = [1, 1]} : vector<32x32xf32> to vector<16x32xf32>
      %161 = vector.extract_strided_slice %158 {offsets = [0, 0], sizes = [16, 32], strides = [1, 1]} : vector<32x32xf32> to vector<16x32xf32>
      %162 = arith.truncf %159 : vector<8x32xf32> to vector<8x32xbf16>
      %163 = vector.shape_cast %162 : vector<8x32xbf16> to vector<8x4x8xbf16>
      %164 = tpu.transpose %163, [1, 0, 2] : vector<8x4x8xbf16> -> vector<4x8x8xbf16>
      %165 = arith.truncf %160 : vector<16x32xf32> to vector<16x32xbf16>
      %166 = vector.shape_cast %165 : vector<16x32xbf16> to vector<16x4x8xbf16>
      %167 = tpu.transpose %166, [1, 0, 2] : vector<16x4x8xbf16> -> vector<4x16x8xbf16>
      %168 = arith.truncf %161 : vector<16x32xf32> to vector<16x32xbf16>
      %169 = vector.shape_cast %168 : vector<16x32xbf16> to vector<16x4x8xbf16>
      %170 = tpu.transpose %169, [1, 0, 2] : vector<16x4x8xbf16> -> vector<4x16x8xbf16>
      "tpu.trace_start"() <{level = 10 : i32, message = "hqd,hkd->hqk"}> : () -> ()
      %cst_65 = arith.constant dense<0.000000e+00> : vector<4x8x16xf32>
      %171 = tpu.matmul %164, %167, %cst_65 {dimension_numbers = #tpu.dot_dimension_numbers<[2], [2], [1], [1], [0, 0, 0, 1, 1, 1], [0], [0]>} : vector<4x8x8xbf16>, vector<4x16x8xbf16>, vector<4x8x16xf32> -> vector<4x8x16xf32>
      "tpu.trace_stop"() : () -> ()
      %cst_66 = arith.constant dense<0xFF800000> : vector<4x8xf32>
      %172 = vector.multi_reduction <maximumf>, %171, %cst_66 [2] : vector<4x8x16xf32> to vector<4x8xf32>
      %173 = vector.shape_cast %172 : vector<4x8xf32> to vector<4x8x1xf32>
      %174 = vector.broadcast %173 : vector<4x8x1xf32> to vector<4x8x16xf32>
      %175 = arith.subf %171, %174 : vector<4x8x16xf32>
      %176 = math.exp %175 : vector<4x8x16xf32>
      %cst_67 = arith.constant dense<0.000000e+00> : vector<4x8xf32>
      %177 = vector.multi_reduction <add>, %176, %cst_67 [2] : vector<4x8x16xf32> to vector<4x8xf32>
      %178 = vector.shape_cast %177 : vector<4x8xf32> to vector<4x8x1xf32>
      %179 = tpu.reciprocal %178 {approx = true} : vector<4x8x1xf32> -> vector<4x8x1xf32>
      %180 = vector.broadcast %179 : vector<4x8x1xf32> to vector<4x8x16xf32>
      %181 = arith.mulf %176, %180 : vector<4x8x16xf32>
      %182 = arith.truncf %181 : vector<4x8x16xf32> to vector<4x8x16xbf16>
      "tpu.trace_start"() <{level = 10 : i32, message = "hqk,hkd->hqd"}> : () -> ()
      %cst_68 = arith.constant dense<0.000000e+00> : vector<4x8x8xf32>
      %183 = tpu.matmul %182, %170, %cst_68 {dimension_numbers = #tpu.dot_dimension_numbers<[2], [1], [1], [2], [0, 0, 0, 1, 1, 2], [0], [0]>} : vector<4x8x16xbf16>, vector<4x16x8xbf16>, vector<4x8x8xf32> -> vector<4x8x8xf32>
      "tpu.trace_stop"() : () -> ()
      %184 = arith.truncf %183 : vector<4x8x8xf32> to vector<4x8x8xbf16>
      %185 = tpu.transpose %184, [1, 0, 2] : vector<4x8x8xbf16> -> vector<8x4x8xbf16>
      %186 = vector.shape_cast %185 : vector<8x4x8xbf16> to vector<8x32xbf16>
      %c0_69 = arith.constant 0 : index
      %c0_70 = arith.constant 0 : index
      %c0_71 = arith.constant 0 : index
      %187 = vector.load %arg16[%c0_69, %c0_70, %c0_71] : memref<2x8x32xbf16, #tpu.memory_space<vmem>>, vector<1x8x32xbf16>
      %188 = vector.shape_cast %187 : vector<1x8x32xbf16> to vector<8x32xbf16>
      %189 = vector.shape_cast %186 : vector<8x32xbf16> to vector<1x8x32xbf16>
      tpu.vector_store %arg16[%c0_69, %c0_70, %c0_71], %189 {strides = array<i32>} : memref<2x8x32xbf16, #tpu.memory_space<vmem>>, vector<1x8x32xbf16>,
      %190 = vector.extract_strided_slice %38 {offsets = [8, 0], sizes = [8, 32], strides = [1, 1]} : vector<16x32xf32> to vector<8x32xf32>
      %191 = vector.extract_strided_slice %151 {offsets = [16, 0], sizes = [16, 32], strides = [1, 1]} : vector<32x32xf32> to vector<16x32xf32>
      %192 = vector.extract_strided_slice %158 {offsets = [16, 0], sizes = [16, 32], strides = [1, 1]} : vector<32x32xf32> to vector<16x32xf32>
      %193 = arith.truncf %190 : vector<8x32xf32> to vector<8x32xbf16>
      %194 = vector.shape_cast %193 : vector<8x32xbf16> to vector<8x4x8xbf16>
      %195 = tpu.transpose %194, [1, 0, 2] : vector<8x4x8xbf16> -> vector<4x8x8xbf16>
      %196 = arith.truncf %191 : vector<16x32xf32> to vector<16x32xbf16>
      %197 = vector.shape_cast %196 : vector<16x32xbf16> to vector<16x4x8xbf16>
      %198 = tpu.transpose %197, [1, 0, 2] : vector<16x4x8xbf16> -> vector<4x16x8xbf16>
      %199 = arith.truncf %192 : vector<16x32xf32> to vector<16x32xbf16>
      %200 = vector.shape_cast %199 : vector<16x32xbf16> to vector<16x4x8xbf16>
      %201 = tpu.transpose %200, [1, 0, 2] : vector<16x4x8xbf16> -> vector<4x16x8xbf16>
      "tpu.trace_start"() <{level = 10 : i32, message = "hqd,hkd->hqk"}> : () -> ()
      %cst_72 = arith.constant dense<0.000000e+00> : vector<4x8x16xf32>
      %202 = tpu.matmul %195, %198, %cst_72 {dimension_numbers = #tpu.dot_dimension_numbers<[2], [2], [1], [1], [0, 0, 0, 1, 1, 1], [0], [0]>} : vector<4x8x8xbf16>, vector<4x16x8xbf16>, vector<4x8x16xf32> -> vector<4x8x16xf32>
      "tpu.trace_stop"() : () -> ()
      %cst_73 = arith.constant dense<0xFF800000> : vector<4x8xf32>
      %203 = vector.multi_reduction <maximumf>, %202, %cst_73 [2] : vector<4x8x16xf32> to vector<4x8xf32>
      %204 = vector.shape_cast %203 : vector<4x8xf32> to vector<4x8x1xf32>
      %205 = vector.broadcast %204 : vector<4x8x1xf32> to vector<4x8x16xf32>
      %206 = arith.subf %202, %205 : vector<4x8x16xf32>
      %207 = math.exp %206 : vector<4x8x16xf32>
      %cst_74 = arith.constant dense<0.000000e+00> : vector<4x8xf32>
      %208 = vector.multi_reduction <add>, %207, %cst_74 [2] : vector<4x8x16xf32> to vector<4x8xf32>
      %209 = vector.shape_cast %208 : vector<4x8xf32> to vector<4x8x1xf32>
      %210 = tpu.reciprocal %209 {approx = true} : vector<4x8x1xf32> -> vector<4x8x1xf32>
      %211 = vector.broadcast %210 : vector<4x8x1xf32> to vector<4x8x16xf32>
      %212 = arith.mulf %207, %211 : vector<4x8x16xf32>
      %213 = arith.truncf %212 : vector<4x8x16xf32> to vector<4x8x16xbf16>
      "tpu.trace_start"() <{level = 10 : i32, message = "hqk,hkd->hqd"}> : () -> ()
      %cst_75 = arith.constant dense<0.000000e+00> : vector<4x8x8xf32>
      %214 = tpu.matmul %213, %201, %cst_75 {dimension_numbers = #tpu.dot_dimension_numbers<[2], [1], [1], [2], [0, 0, 0, 1, 1, 2], [0], [0]>} : vector<4x8x16xbf16>, vector<4x16x8xbf16>, vector<4x8x8xf32> -> vector<4x8x8xf32>
      "tpu.trace_stop"() : () -> ()
      %215 = arith.truncf %214 : vector<4x8x8xf32> to vector<4x8x8xbf16>
      %216 = tpu.transpose %215, [1, 0, 2] : vector<4x8x8xbf16> -> vector<8x4x8xbf16>
      %217 = vector.shape_cast %216 : vector<8x4x8xbf16> to vector<8x32xbf16>
      %c1 = arith.constant 1 : index
      %c0_76 = arith.constant 0 : index
      %c0_77 = arith.constant 0 : index
      %218 = vector.load %arg16[%c1, %c0_76, %c0_77] : memref<2x8x32xbf16, #tpu.memory_space<vmem>>, vector<1x8x32xbf16>
      %219 = vector.shape_cast %218 : vector<1x8x32xbf16> to vector<8x32xbf16>
      %220 = vector.shape_cast %217 : vector<8x32xbf16> to vector<1x8x32xbf16>
      tpu.vector_store %arg16[%c1, %c0_76, %c0_77], %220 {strides = array<i32>} : memref<2x8x32xbf16, #tpu.memory_space<vmem>>, vector<1x8x32xbf16>,
    } else {
    }
    %c0_20 = arith.constant 0 : index
    %c0_21 = arith.constant 0 : index
    %c0_22 = arith.constant 0 : index
    %55 = vector.load %arg16[%c0_20, %c0_21, %c0_22] : memref<2x8x32xbf16, #tpu.memory_space<vmem>>, vector<2x8x32xbf16>
    %56 = vector.shape_cast %55 : vector<2x8x32xbf16> to vector<16x32xbf16>
    %c0_23 = arith.constant 0 : index
    %c0_24 = arith.constant 0 : index
    %c0_25 = arith.constant 0 : index
    %57 = vector.load %arg7[%c0_23, %c0_24, %c0_25] : memref<1x32x32xbf16, #tpu.memory_space<vmem>>, vector<1x32x32xbf16>
    %58 = vector.shape_cast %57 : vector<1x32x32xbf16> to vector<32x32xbf16>
    %cst_26 = arith.constant dense<0.000000e+00> : vector<16x32xf32>
    %59 = tpu.matmul %56, %58, %cst_26 {dimension_numbers = #tpu.dot_dimension_numbers<[1], [0], [0], [1], [0, 0, 1, 1], [], []>} : vector<16x32xbf16>, vector<32x32xbf16>, vector<16x32xf32> -> vector<16x32xf32>
    %60 = vector.extract_strided_slice %4 {offsets = [7, 0], sizes = [1, 32], strides = [1, 1]} : vector<11x32xf32> to vector<1x32xf32>
    %61 = vector.broadcast %60 : vector<1x32xf32> to vector<16x32xf32>
    %62 = arith.addf %59, %61 : vector<16x32xf32>
    %63 = arith.addf %7, %62 : vector<16x32xf32>
    %64 = vector.extract_strided_slice %4 {offsets = [8, 0], sizes = [1, 32], strides = [1, 1]} : vector<11x32xf32> to vector<1x32xf32>
    %65 = vector.extract_strided_slice %4 {offsets = [9, 0], sizes = [1, 32], strides = [1, 1]} : vector<11x32xf32> to vector<1x32xf32>
    %cst_27 = arith.constant dense<0.000000e+00> : vector<16xf32>
    %66 = vector.multi_reduction <add>, %63, %cst_27 [1] : vector<16x32xf32> to vector<16xf32>
    %67 = vector.shape_cast %66 : vector<16xf32> to vector<16x1xf32>
    %cst_28 = arith.constant 3.200000e+01 : f32
    %68 = vector.broadcast %cst_28 : f32 to vector<16x1xf32>
    %69 = arith.divf %67, %68 : vector<16x1xf32>
    %70 = vector.broadcast %69 : vector<16x1xf32> to vector<16x32xf32>
    %71 = arith.subf %63, %70 : vector<16x32xf32>
    %72 = arith.mulf %71, %71 : vector<16x32xf32>
    %cst_29 = arith.constant dense<0.000000e+00> : vector<16xf32>
    %73 = vector.multi_reduction <add>, %72, %cst_29 [1] : vector<16x32xf32> to vector<16xf32>
    %74 = vector.shape_cast %73 : vector<16xf32> to vector<16x1xf32>
    %cst_30 = arith.constant 3.200000e+01 : f32
    %75 = vector.broadcast %cst_30 : f32 to vector<16x1xf32>
    %76 = arith.divf %74, %75 : vector<16x1xf32>
    %77 = vector.broadcast %69 : vector<16x1xf32> to vector<16x32xf32>
    %78 = arith.subf %63, %77 : vector<16x32xf32>
    %cst_31 = arith.constant 9.99999974E-6 : f32
    %79 = vector.broadcast %cst_31 : f32 to vector<16x1xf32>
    %80 = arith.addf %76, %79 : vector<16x1xf32>
    %81 = math.rsqrt %80 : vector<16x1xf32>
    %82 = vector.broadcast %81 : vector<16x1xf32> to vector<16x32xf32>
    %83 = arith.mulf %78, %82 : vector<16x32xf32>
    %84 = vector.broadcast %64 : vector<1x32xf32> to vector<16x32xf32>
    %85 = arith.mulf %83, %84 : vector<16x32xf32>
    %86 = vector.broadcast %65 : vector<1x32xf32> to vector<16x32xf32>
    %87 = arith.addf %85, %86 : vector<16x32xf32>
    %88 = arith.truncf %87 : vector<16x32xf32> to vector<16x32xbf16>
    %c0_32 = arith.constant 0 : index
    %c0_33 = arith.constant 0 : index
    %c0_34 = arith.constant 0 : index
    %89 = vector.load %arg8[%c0_32, %c0_33, %c0_34] : memref<1x32x128xbf16, #tpu.memory_space<vmem>>, vector<1x32x128xbf16>
    %90 = vector.shape_cast %89 : vector<1x32x128xbf16> to vector<32x128xbf16>
    %cst_35 = arith.constant dense<0.000000e+00> : vector<16x128xf32>
    %91 = tpu.matmul %88, %90, %cst_35 {dimension_numbers = #tpu.dot_dimension_numbers<[1], [0], [0], [1], [0, 0, 1, 1], [], []>} : vector<16x32xbf16>, vector<32x128xbf16>, vector<16x128xf32> -> vector<16x128xf32>
    %c0_36 = arith.constant 0 : index
    %c0_37 = arith.constant 0 : index
    %c0_38 = arith.constant 0 : index
    %92 = vector.load %arg11[%c0_36, %c0_37, %c0_38] : memref<1x1x128xf32, #tpu.memory_space<vmem>>, vector<1x1x128xf32>
    %93 = vector.shape_cast %92 : vector<1x1x128xf32> to vector<1x128xf32>
    %94 = vector.broadcast %93 : vector<1x128xf32> to vector<16x128xf32>
    %95 = arith.addf %91, %94 : vector<16x128xf32>
    %cst_39 = arith.constant 5.000000e-01 : f32
    %96 = vector.broadcast %cst_39 : f32 to vector<16x128xf32>
    %97 = arith.mulf %96, %95 : vector<16x128xf32>
    %cst_40 = arith.constant 0.707106769 : f32
    %98 = vector.broadcast %cst_40 : f32 to vector<16x128xf32>
    %99 = arith.mulf %95, %98 : vector<16x128xf32>
    %100 = math.erf %99 : vector<16x128xf32>
    %cst_41 = arith.constant 1.000000e+00 : f32
    %101 = vector.broadcast %cst_41 : f32 to vector<16x128xf32>
    %102 = arith.addf %101, %100 : vector<16x128xf32>
    %103 = arith.mulf %97, %102 : vector<16x128xf32>
    %104 = arith.truncf %103 : vector<16x128xf32> to vector<16x128xbf16>
    %c0_42 = arith.constant 0 : index
    %c0_43 = arith.constant 0 : index
    %c0_44 = arith.constant 0 : index
    %105 = vector.load %arg9[%c0_42, %c0_43, %c0_44] : memref<1x128x32xbf16, #tpu.memory_space<vmem>>, vector<1x128x32xbf16>
    %106 = vector.shape_cast %105 : vector<1x128x32xbf16> to vector<128x32xbf16>
    %cst_45 = arith.constant dense<0.000000e+00> : vector<16x32xf32>
    %107 = tpu.matmul %104, %106, %cst_45 {dimension_numbers = #tpu.dot_dimension_numbers<[1], [0], [0], [1], [0, 0, 1, 1], [], []>} : vector<16x128xbf16>, vector<128x32xbf16>, vector<16x32xf32> -> vector<16x32xf32>
    %108 = vector.extract_strided_slice %4 {offsets = [10, 0], sizes = [1, 32], strides = [1, 1]} : vector<11x32xf32> to vector<1x32xf32>
    %109 = vector.broadcast %108 : vector<1x32xf32> to vector<16x32xf32>
    %110 = arith.addf %107, %109 : vector<16x32xf32>
    %111 = arith.addf %63, %110 : vector<16x32xf32>
    %112 = arith.index_cast %arg1 : i32 to index
    %c0_46 = arith.constant 0 : index
    %c0_47 = arith.constant 0 : index
    %113 = vector.load %arg15[%112, %c0_46, %c0_47] : memref<1x16x32xf32, #tpu.memory_space<vmem>>, vector<1x16x32xf32>
    %114 = vector.shape_cast %113 : vector<1x16x32xf32> to vector<16x32xf32>
    %115 = vector.shape_cast %111 : vector<16x32xf32> to vector<1x16x32xf32>
    tpu.vector_store %arg15[%112, %c0_46, %c0_47], %115 {strides = array<i32>} : memref<1x16x32xf32, #tpu.memory_space<vmem>>, vector<1x16x32xf32>,
    %c3_i32 = arith.constant 3 : i32
    %116 = arith.cmpi eq, %arg0, %c3_i32 : i32
    %117 = arith.extui %116 : i1 to i32
    %c0_i32_48 = arith.constant 0 : i32
    %118 = arith.cmpi ne, %117, %c0_i32_48 : i32
    scf.if %118 {
      %c0_49 = arith.constant 0 : index
      %c0_50 = arith.constant 0 : index
      %119 = vector.load %arg12[%c0_49, %c0_50] : memref<2x32xf32, #tpu.memory_space<vmem>>, vector<2x32xf32>
      %120 = vector.extract_strided_slice %119 {offsets = [0, 0], sizes = [1, 32], strides = [1, 1]} : vector<2x32xf32> to vector<1x32xf32>
      %121 = vector.extract_strided_slice %119 {offsets = [1, 0], sizes = [1, 32], strides = [1, 1]} : vector<2x32xf32> to vector<1x32xf32>
      %cst_51 = arith.constant dense<0.000000e+00> : vector<16xf32>
      %122 = vector.multi_reduction <add>, %111, %cst_51 [1] : vector<16x32xf32> to vector<16xf32>
      %123 = vector.shape_cast %122 : vector<16xf32> to vector<16x1xf32>
      %cst_52 = arith.constant 3.200000e+01 : f32
      %124 = vector.broadcast %cst_52 : f32 to vector<16x1xf32>
      %125 = arith.divf %123, %124 : vector<16x1xf32>
      %126 = vector.broadcast %125 : vector<16x1xf32> to vector<16x32xf32>
      %127 = arith.subf %111, %126 : vector<16x32xf32>
      %128 = arith.mulf %127, %127 : vector<16x32xf32>
      %cst_53 = arith.constant dense<0.000000e+00> : vector<16xf32>
      %129 = vector.multi_reduction <add>, %128, %cst_53 [1] : vector<16x32xf32> to vector<16xf32>
      %130 = vector.shape_cast %129 : vector<16xf32> to vector<16x1xf32>
      %cst_54 = arith.constant 3.200000e+01 : f32
      %131 = vector.broadcast %cst_54 : f32 to vector<16x1xf32>
      %132 = arith.divf %130, %131 : vector<16x1xf32>
      %133 = vector.broadcast %125 : vector<16x1xf32> to vector<16x32xf32>
      %134 = arith.subf %111, %133 : vector<16x32xf32>
      %cst_55 = arith.constant 9.99999974E-6 : f32
      %135 = vector.broadcast %cst_55 : f32 to vector<16x1xf32>
      %136 = arith.addf %132, %135 : vector<16x1xf32>
      %137 = math.rsqrt %136 : vector<16x1xf32>
      %138 = vector.broadcast %137 : vector<16x1xf32> to vector<16x32xf32>
      %139 = arith.mulf %134, %138 : vector<16x32xf32>
      %140 = vector.broadcast %120 : vector<1x32xf32> to vector<16x32xf32>
      %141 = arith.mulf %139, %140 : vector<16x32xf32>
      %142 = vector.broadcast %121 : vector<1x32xf32> to vector<16x32xf32>
      %143 = arith.addf %141, %142 : vector<16x32xf32>
      %144 = arith.truncf %143 : vector<16x32xf32> to vector<16x32xbf16>
      %c0_56 = arith.constant 0 : index
      %c0_57 = arith.constant 0 : index
      %145 = vector.load %arg13[%c0_56, %c0_57] : memref<32x64xbf16, #tpu.memory_space<vmem>>, vector<32x64xbf16>
      %cst_58 = arith.constant dense<0.000000e+00> : vector<16x64xf32>
      %146 = tpu.matmul %144, %145, %cst_58 {dimension_numbers = #tpu.dot_dimension_numbers<[1], [0], [0], [1], [0, 0, 1, 1], [], []>} : vector<16x32xbf16>, vector<32x64xbf16>, vector<16x64xf32> -> vector<16x64xf32>
      %147 = vector.shape_cast %146 : vector<16x64xf32> to vector<2x8x64xf32>
      %c0_59 = arith.constant 0 : index
      %c0_60 = arith.constant 0 : index
      %c0_61 = arith.constant 0 : index
      %148 = vector.load %arg14[%c0_59, %c0_60, %c0_61] : memref<2x8x64xf32, #tpu.memory_space<vmem>>, vector<2x8x64xf32>
      tpu.vector_store %arg14[%c0_59, %c0_60, %c0_61], %147 {strides = array<i32>} : memref<2x8x64xf32, #tpu.memory_space<vmem>>, vector<2x8x64xf32>,
    } else {
    }
    return
  }
  func.func @transform_0(%arg0: i32, %arg1: i32) -> (i32, i32, i32) {
    %c0_i32 = arith.constant 0 : i32
    %c0_i32_0 = arith.constant 0 : i32
    %c0_i32_1 = arith.constant 0 : i32
    return %arg1, %c0_i32, %c0_i32_0 : i32, i32, i32
  }
  func.func @transform_1(%arg0: i32, %arg1: i32) -> (i32, i32, i32) {
    %c0_i32 = arith.constant 0 : i32
    %c0_i32_0 = arith.constant 0 : i32
    %c0_i32_1 = arith.constant 0 : i32
    return %arg1, %c0_i32, %c0_i32_0 : i32, i32, i32
  }
  func.func @transform_2(%arg0: i32, %arg1: i32) -> (i32, i32, i32) {
    %c0_i32 = arith.constant 0 : i32
    %c0_i32_0 = arith.constant 0 : i32
    %c0_i32_1 = arith.constant 0 : i32
    return %arg0, %c0_i32, %c0_i32_0 : i32, i32, i32
  }
  func.func @transform_3(%arg0: i32, %arg1: i32) -> (i32, i32, i32) {
    %c0_i32 = arith.constant 0 : i32
    %c0_i32_0 = arith.constant 0 : i32
    %c0_i32_1 = arith.constant 0 : i32
    return %arg0, %c0_i32, %c0_i32_0 : i32, i32, i32
  }
  func.func @transform_4(%arg0: i32, %arg1: i32) -> (i32, i32, i32) {
    %c0_i32 = arith.constant 0 : i32
    %c0_i32_0 = arith.constant 0 : i32
    %c0_i32_1 = arith.constant 0 : i32
    return %arg0, %c0_i32, %c0_i32_0 : i32, i32, i32
  }
  func.func @transform_5(%arg0: i32, %arg1: i32) -> (i32, i32, i32) {
    %c0_i32 = arith.constant 0 : i32
    %c0_i32_0 = arith.constant 0 : i32
    %c0_i32_1 = arith.constant 0 : i32
    return %arg0, %c0_i32, %c0_i32_0 : i32, i32, i32
  }
  func.func @transform_6(%arg0: i32, %arg1: i32) -> (i32, i32, i32) {
    %c0_i32 = arith.constant 0 : i32
    %c0_i32_0 = arith.constant 0 : i32
    %c0_i32_1 = arith.constant 0 : i32
    return %arg0, %c0_i32, %c0_i32_0 : i32, i32, i32
  }
  func.func @transform_7(%arg0: i32, %arg1: i32) -> (i32, i32, i32) {
    %c0_i32 = arith.constant 0 : i32
    %c0_i32_0 = arith.constant 0 : i32
    %c0_i32_1 = arith.constant 0 : i32
    return %arg0, %c0_i32, %c0_i32_0 : i32, i32, i32
  }
  func.func @transform_8(%arg0: i32, %arg1: i32) -> (i32, i32, i32) {
    %c0_i32 = arith.constant 0 : i32
    %c0_i32_0 = arith.constant 0 : i32
    %c0_i32_1 = arith.constant 0 : i32
    return %arg0, %c0_i32, %c0_i32_0 : i32, i32, i32
  }
  func.func @transform_9(%arg0: i32, %arg1: i32) -> (i32, i32, i32) {
    %c0_i32 = arith.constant 0 : i32
    %c0_i32_0 = arith.constant 0 : i32
    %c0_i32_1 = arith.constant 0 : i32
    return %arg0, %c0_i32, %c0_i32_0 : i32, i32, i32
  }
  func.func @transform_10(%arg0: i32, %arg1: i32) -> (i32, i32) {
    %c0_i32 = arith.constant 0 : i32
    %c0_i32_0 = arith.constant 0 : i32
    %c0_i32_1 = arith.constant 0 : i32
    return %c0_i32, %c0_i32_0 : i32, i32
  }
  func.func @transform_11(%arg0: i32, %arg1: i32) -> (i32, i32) {
    %c0_i32 = arith.constant 0 : i32
    %c0_i32_0 = arith.constant 0 : i32
    %c0_i32_1 = arith.constant 0 : i32
    return %c0_i32, %c0_i32_0 : i32, i32
  }
  func.func @transform_12(%arg0: i32, %arg1: i32) -> (i32, i32, i32) {
    %c0_i32 = arith.constant 0 : i32
    %c0_i32_0 = arith.constant 0 : i32
    %c0_i32_1 = arith.constant 0 : i32
    return %arg1, %c0_i32, %c0_i32_0 : i32, i32, i32
  }
}

</mosaic_0001>

<llo_original>
// kernel: tpu_custom_call.1
$region0: #{tpu_custom_call.1}
  #allocation0 [shape = 'u32[]', space=smem, size = 0x4, offset = 0x4, fixed_abs, tag = 'smem constant byte address 0x4 - core index']
  #allocation1 [shape = 'u32[72,128]{1,0:T(1,128)}', space=vmem, size = 0x9000, scoped, tag = 'internal scratch']
  #allocation2 [shape = 'f32[1,16,32]{2,1,0:T(8,128)}', space=vmem, size = 0x2000, scoped, tag = 'scratch operand']
  #allocation3 [shape = 'bf16[2,8,32]{2,1,0:T(8,128)(2,1)}', space=vmem, size = 0x1000, scoped, tag = 'scratch operand']
  %s0 = inlined_call_operand.vmem [shape: f32[2,8,32], index: 0, kind: input, shape index: {}]
  %s1 = inlined_call_operand.vmem [shape: f32[2,16,32], index: 1, kind: input, shape index: {}]
  %s2 = inlined_call_operand.vmem [shape: bf16[4,32,32], index: 2, kind: input, shape index: {}]
  %s3 = inlined_call_operand.vmem [shape: bf16[4,32,32], index: 3, kind: input, shape index: {}]
  %s4 = inlined_call_operand.vmem [shape: bf16[4,32,32], index: 4, kind: input, shape index: {}]
  %s5 = inlined_call_operand.vmem [shape: bf16[4,32,32], index: 5, kind: input, shape index: {}]
  %s6 = inlined_call_operand.vmem [shape: bf16[4,32,128], index: 6, kind: input, shape index: {}]
  %s7 = inlined_call_operand.vmem [shape: bf16[4,128,32], index: 7, kind: input, shape index: {}]
  %s8 = inlined_call_operand.vmem [shape: f32[4,11,32], index: 8, kind: input, shape index: {}]
  %s9 = inlined_call_operand.hbm [shape: f32[4,1,128], index: 9, kind: input, shape index: {}]
  %s10 = inlined_call_operand.vmem [shape: f32[2,32], index: 10, kind: input, shape index: {}]
  %s11 = inlined_call_operand.hbm [shape: bf16[32,64], index: 11, kind: input, shape index: {}]
  %s12 = inlined_call_operand.hbm [shape: f32[2,8,64], index: 12, kind: output, shape index: {}]
  %s13 = sld [smem:[#allocation0]]
  $region105: #{tpu_custom_call.1} parent=0
    _
  %s15 = ssub.s32 1, %s13
  %s16 = scalar_select 0, %s15, %s13
  $region1: #{tpu_custom_call.1} parent=0
    #allocation4 [shape = 'u8[1024]{0}', space=vmem, size = 0x400, scoped, tag = 'input window, operand 9']
    #allocation5 [shape = 's32[2]{0}', space=sflag, size = 0x8, scoped, tag = 'scoped memory for tpu_custom_call.1']
    #allocation6 [shape = 's32[2]{0}', space=sflag, size = 0x8, scoped, tag = 'scoped memory for tpu_custom_call.1']
    #allocation7 [shape = 'u8[8192]{0}', space=vmem, size = 0x2000, scoped, tag = 'input window, operand 11, single buffered']
    #allocation8 [shape = 's32[1]{0}', space=sflag, size = 0x4, scoped, tag = 'scoped memory for tpu_custom_call.1']
    #allocation9 [shape = 'u8[8192]{0}', space=vmem, size = 0x2000, scoped, tag = 'output window, operand 0, single buffered']
    %17 = vsyncpa [#allocation5], 0
    %s18 = scalar_lea.sflag [#allocation5], 1
    %19 = vsyncpa %s18, 0
    %20 = vsyncpa [#allocation8], 0
    %21 = vsyncpa [#allocation6], 0
    loop: start=0, step=1, limit=6
    $region2: #{tpu_custom_call.1} parent=1 // loop_pre_header
      _
    $region3: #{tpu_custom_call.1} parent=1 // loop_header
      %s23 = sphi 0, %s27
      %p24 = scmp.ge.s32.totalorder %s23, 6
      %s30 = sphi 0, %s42
      %s31 = sphi 0, %s38
      %s32 = sphi 0, %s30
      %s33 = sphi 0, %s31
      %s34 = sphi 0, %s32
      %s35 = sphi 0, %s33
      %s45 = sphi 0, %s47
      %s48 = sphi 0, %s45
      %s49 = sphi 0, %s48
      %s65 = sphi 0, %s49
      %s71 = sphi 0, %s73
      %s74 = sphi 0, %s71
      %s75 = sphi 0, %s74
      %s91 = sphi 0, %s75
      %s97 = sphi 0, %s99
      %s100 = sphi 0, %s97
      %s101 = sphi 0, %s100
      %s117 = sphi 0, %s101
      %s123 = sphi 0, %s125
      %s126 = sphi 0, %s123
      %s127 = sphi 0, %s126
      %s143 = sphi 0, %s127
      %s149 = sphi 0, %s151
      %s152 = sphi 0, %s149
      %s153 = sphi 0, %s152
      %s169 = sphi 0, %s153
      %s175 = sphi 0, %s177
      %s178 = sphi 0, %s175
      %s179 = sphi 0, %s178
      %s195 = sphi 0, %s179
      %s201 = sphi 0, %s203
      %s204 = sphi 0, %s201
      %s205 = sphi 0, %s204
      %s221 = sphi 0, %s205
      %s227 = sphi 0, %s229
      %s230 = sphi 0, %s227
      %s231 = sphi 0, %s230
      %s247 = sphi 0, %s231
      %s253 = sphi 0, %s255
      %s256 = sphi 0, %s253
      %s257 = sphi 0, %s256
      %s273 = sphi 0, %s257
      %s279 = sphi 0, %s281
      %s282 = sphi 0, %s279
      %s283 = sphi 0, %s282
      %s299 = sphi 0, %s283
      %s303 = sphi 0, %s303
      %s305 = sphi 0, %s303
      %s306 = sphi 0, %s305
      %s320 = sphi 0, %s306
      %s324 = sphi 0, %s324
      %s326 = sphi 0, %s324
      %s327 = sphi 0, %s326
      %s341 = sphi 0, %s327
      %s347 = sphi 0, %s349
      %s350 = sphi 0, %s347
      %s351 = sphi 0, %s350
      %s367 = sphi 0, %s351
    $region4: #{tpu_custom_call.1} parent=1 // loop_header_branch
      %26 = sbr.rel (%p24) target = $region8
    $region5: #{tpu_custom_call.1} parent=1 // loop_body
      %s28 = ssub.s32 %s23, 1
      %s29 = ssub.s32 %s23, 2
      %s36 = sadd.s32 1, %s31
      %p37 = scmp.ge.s32.totalorder %s36, 1
      %s38 = scalar_select %p37, 0, %s36
      %s39 = sadd.s32 1, %s30
      %s40 = scalar_select %p37, %s39, %s30
      %p41 = scmp.ge.s32.totalorder %s40, 4
      %s42 = scalar_select %p41, 0, %s40
      %s43 = ssub.s32 %s31, %s38
      %p44 = scmp.eq.s32.totalorder %s43, 0
      %s46 = sadd.s32 %s45, 1
      %s47 = scalar_select %p44, %s45, %s46
      %p50 = pneg %p44
      %p51 = scmp.eq.s32.totalorder %s23, 3
      %p52 = por %p50, %p51
      %p53 = scmp.ne.s32.totalorder %s45, %s48
      %p54 = scmp.eq.s32.totalorder %s23, 0
      %p55 = por %p53, %p54
      %p56 = scmp.ne.s32.totalorder %s45, %s48
      %p57 = scmp.eq.s32.totalorder %s28, 3
      %p58 = por %p56, %p57
      %p59 = scmp.ne.s32.totalorder %s48, %s49
      %p60 = scmp.eq.s32.totalorder %s28, 0
      %p61 = por %p59, %p60
      %p62 = scmp.ne.s32.totalorder %s48, %s49
      %p63 = scmp.eq.s32.totalorder %s29, 3
      %p64 = por %p62, %p63
      %p66 = scmp.ne.s32.totalorder %s49, %s65
      %p67 = scmp.eq.s32.totalorder %s29, 0
      %p68 = por %p66, %p67
      %s69 = ssub.s32 %s31, %s38
      %p70 = scmp.eq.s32.totalorder %s69, 0
      %s72 = sadd.s32 %s71, 1
      %s73 = scalar_select %p70, %s71, %s72
      %p76 = pneg %p70
      %p77 = scmp.eq.s32.totalorder %s23, 3
      %p78 = por %p76, %p77
      %p79 = scmp.ne.s32.totalorder %s71, %s74
      %p80 = scmp.eq.s32.totalorder %s23, 0
      %p81 = por %p79, %p80
      %p82 = scmp.ne.s32.totalorder %s71, %s74
      %p83 = scmp.eq.s32.totalorder %s28, 3
      %p84 = por %p82, %p83
      %p85 = scmp.ne.s32.totalorder %s74, %s75
      %p86 = scmp.eq.s32.totalorder %s28, 0
      %p87 = por %p85, %p86
      %p88 = scmp.ne.s32.totalorder %s74, %s75
      %p89 = scmp.eq.s32.totalorder %s29, 3
      %p90 = por %p88, %p89
      %p92 = scmp.ne.s32.totalorder %s75, %s91
      %p93 = scmp.eq.s32.totalorder %s29, 0
      %p94 = por %p92, %p93
      %s95 = ssub.s32 %s30, %s42
      %p96 = scmp.eq.s32.totalorder %s95, 0
      %s98 = sadd.s32 %s97, 1
      %s99 = scalar_select %p96, %s97, %s98
      %p102 = pneg %p96
      %p103 = scmp.eq.s32.totalorder %s23, 3
      %p104 = por %p102, %p103
      %p105 = scmp.ne.s32.totalorder %s97, %s100
      %p106 = scmp.eq.s32.totalorder %s23, 0
      %p107 = por %p105, %p106
      %p108 = scmp.ne.s32.totalorder %s97, %s100
      %p109 = scmp.eq.s32.totalorder %s28, 3
      %p110 = por %p108, %p109
      %p111 = scmp.ne.s32.totalorder %s100, %s101
      %p112 = scmp.eq.s32.totalorder %s28, 0
      %p113 = por %p111, %p112
      %p114 = scmp.ne.s32.totalorder %s100, %s101
      %p115 = scmp.eq.s32.totalorder %s29, 3
      %p116 = por %p114, %p115
      %p118 = scmp.ne.s32.totalorder %s101, %s117
      %p119 = scmp.eq.s32.totalorder %s29, 0
      %p120 = por %p118, %p119
      %s121 = ssub.s32 %s30, %s42
      %p122 = scmp.eq.s32.totalorder %s121, 0
      %s124 = sadd.s32 %s123, 1
      %s125 = scalar_select %p122, %s123, %s124
      %p128 = pneg %p122
      %p129 = scmp.eq.s32.totalorder %s23, 3
      %p130 = por %p128, %p129
      %p131 = scmp.ne.s32.totalorder %s123, %s126
      %p132 = scmp.eq.s32.totalorder %s23, 0
      %p133 = por %p131, %p132
      %p134 = scmp.ne.s32.totalorder %s123, %s126
      %p135 = scmp.eq.s32.totalorder %s28, 3
      %p136 = por %p134, %p135
      %p137 = scmp.ne.s32.totalorder %s126, %s127
      %p138 = scmp.eq.s32.totalorder %s28, 0
      %p139 = por %p137, %p138
      %p140 = scmp.ne.s32.totalorder %s126, %s127
      %p141 = scmp.eq.s32.totalorder %s29, 3
      %p142 = por %p140, %p141
      %p144 = scmp.ne.s32.totalorder %s127, %s143
      %p145 = scmp.eq.s32.totalorder %s29, 0
      %p146 = por %p144, %p145
      %s147 = ssub.s32 %s30, %s42
      %p148 = scmp.eq.s32.totalorder %s147, 0
      %s150 = sadd.s32 %s149, 1
      %s151 = scalar_select %p148, %s149, %s150
      %p154 = pneg %p148
      %p155 = scmp.eq.s32.totalorder %s23, 3
      %p156 = por %p154, %p155
      %p157 = scmp.ne.s32.totalorder %s149, %s152
      %p158 = scmp.eq.s32.totalorder %s23, 0
      %p159 = por %p157, %p158
      %p160 = scmp.ne.s32.totalorder %s149, %s152
      %p161 = scmp.eq.s32.totalorder %s28, 3
      %p162 = por %p160, %p161
      %p163 = scmp.ne.s32.totalorder %s152, %s153
      %p164 = scmp.eq.s32.totalorder %s28, 0
      %p165 = por %p163, %p164
      %p166 = scmp.ne.s32.totalorder %s152, %s153
      %p167 = scmp.eq.s32.totalorder %s29, 3
      %p168 = por %p166, %p167
      %p170 = scmp.ne.s32.totalorder %s153, %s169
      %p171 = scmp.eq.s32.totalorder %s29, 0
      %p172 = por %p170, %p171
      %s173 = ssub.s32 %s30, %s42
      %p174 = scmp.eq.s32.totalorder %s173, 0
      %s176 = sadd.s32 %s175, 1
      %s177 = scalar_select %p174, %s175, %s176
      %p180 = pneg %p174
      %p181 = scmp.eq.s32.totalorder %s23, 3
      %p182 = por %p180, %p181
      %p183 = scmp.ne.s32.totalorder %s175, %s178
      %p184 = scmp.eq.s32.totalorder %s23, 0
      %p185 = por %p183, %p184
      %p186 = scmp.ne.s32.totalorder %s175, %s178
      %p187 = scmp.eq.s32.totalorder %s28, 3
      %p188 = por %p186, %p187
      %p189 = scmp.ne.s32.totalorder %s178, %s179
      %p190 = scmp.eq.s32.totalorder %s28, 0
      %p191 = por %p189, %p190
      %p192 = scmp.ne.s32.totalorder %s178, %s179
      %p193 = scmp.eq.s32.totalorder %s29, 3
      %p194 = por %p192, %p193
      %p196 = scmp.ne.s32.totalorder %s179, %s195
      %p197 = scmp.eq.s32.totalorder %s29, 0
      %p198 = por %p196, %p197
      %s199 = ssub.s32 %s30, %s42
      %p200 = scmp.eq.s32.totalorder %s199, 0
      %s202 = sadd.s32 %s201, 1
      %s203 = scalar_select %p200, %s201, %s202
      %p206 = pneg %p200
      %p207 = scmp.eq.s32.totalorder %s23, 3
      %p208 = por %p206, %p207
      %p209 = scmp.ne.s32.totalorder %s201, %s204
      %p210 = scmp.eq.s32.totalorder %s23, 0
      %p211 = por %p209, %p210
      %p212 = scmp.ne.s32.totalorder %s201, %s204
      %p213 = scmp.eq.s32.totalorder %s28, 3
      %p214 = por %p212, %p213
      %p215 = scmp.ne.s32.totalorder %s204, %s205
      %p216 = scmp.eq.s32.totalorder %s28, 0
      %p217 = por %p215, %p216
      %p218 = scmp.ne.s32.totalorder %s204, %s205
      %p219 = scmp.eq.s32.totalorder %s29, 3
      %p220 = por %p218, %p219
      %p222 = scmp.ne.s32.totalorder %s205, %s221
      %p223 = scmp.eq.s32.totalorder %s29, 0
      %p224 = por %p222, %p223
      %s225 = ssub.s32 %s30, %s42
      %p226 = scmp.eq.s32.totalorder %s225, 0
      %s228 = sadd.s32 %s227, 1
      %s229 = scalar_select %p226, %s227, %s228
      %p232 = pneg %p226
      %p233 = scmp.eq.s32.totalorder %s23, 3
      %p234 = por %p232, %p233
      %p235 = scmp.ne.s32.totalorder %s227, %s230
      %p236 = scmp.eq.s32.totalorder %s23, 0
      %p237 = por %p235, %p236
      %p238 = scmp.ne.s32.totalorder %s227, %s230
      %p239 = scmp.eq.s32.totalorder %s28, 3
      %p240 = por %p238, %p239
      %p241 = scmp.ne.s32.totalorder %s230, %s231
      %p242 = scmp.eq.s32.totalorder %s28, 0
      %p243 = por %p241, %p242
      %p244 = scmp.ne.s32.totalorder %s230, %s231
      %p245 = scmp.eq.s32.totalorder %s29, 3
      %p246 = por %p244, %p245
      %p248 = scmp.ne.s32.totalorder %s231, %s247
      %p249 = scmp.eq.s32.totalorder %s29, 0
      %p250 = por %p248, %p249
      %s251 = ssub.s32 %s30, %s42
      %p252 = scmp.eq.s32.totalorder %s251, 0
      %s254 = sadd.s32 %s253, 1
      %s255 = scalar_select %p252, %s253, %s254
      %p258 = pneg %p252
      %p259 = scmp.eq.s32.totalorder %s23, 3
      %p260 = por %p258, %p259
      %p261 = scmp.ne.s32.totalorder %s253, %s256
      %p262 = scmp.eq.s32.totalorder %s23, 0
      %p263 = por %p261, %p262
      %p264 = scmp.ne.s32.totalorder %s253, %s256
      %p265 = scmp.eq.s32.totalorder %s28, 3
      %p266 = por %p264, %p265
      %p267 = scmp.ne.s32.totalorder %s256, %s257
      %p268 = scmp.eq.s32.totalorder %s28, 0
      %p269 = por %p267, %p268
      %p270 = scmp.ne.s32.totalorder %s256, %s257
      %p271 = scmp.eq.s32.totalorder %s29, 3
      %p272 = por %p270, %p271
      %p274 = scmp.ne.s32.totalorder %s257, %s273
      %p275 = scmp.eq.s32.totalorder %s29, 0
      %p276 = por %p274, %p275
      %s277 = ssub.s32 %s30, %s42
      %p278 = scmp.eq.s32.totalorder %s277, 0
      %s280 = sadd.s32 %s279, 1
      %s281 = scalar_select %p278, %s279, %s280
      %p284 = pneg %p278
      %p285 = scmp.eq.s32.totalorder %s23, 3
      %p286 = por %p284, %p285
      %p287 = scmp.ne.s32.totalorder %s279, %s282
      %p288 = scmp.eq.s32.totalorder %s23, 0
      %p289 = por %p287, %p288
      %p290 = scmp.ne.s32.totalorder %s279, %s282
      %p291 = scmp.eq.s32.totalorder %s28, 3
      %p292 = por %p290, %p291
      %p293 = scmp.ne.s32.totalorder %s282, %s283
      %p294 = scmp.eq.s32.totalorder %s28, 0
      %p295 = por %p293, %p294
      %p296 = scmp.ne.s32.totalorder %s282, %s283
      %p297 = scmp.eq.s32.totalorder %s29, 3
      %p298 = por %p296, %p297
      %p300 = scmp.ne.s32.totalorder %s283, %s299
      %p301 = scmp.eq.s32.totalorder %s29, 0
      %p302 = por %p300, %p301
      %s304 = sadd.s32 %s303, 1
      %p307 = scmp.eq.s32.totalorder %s23, 3
      %p308 = scmp.ne.s32.totalorder %s303, %s305
      %p309 = scmp.eq.s32.totalorder %s23, 0
      %p310 = por %p308, %p309
      %p311 = scmp.ne.s32.totalorder %s303, %s305
      %p312 = scmp.eq.s32.totalorder %s28, 3
      %p313 = por %p311, %p312
      %p314 = scmp.ne.s32.totalorder %s305, %s306
      %p315 = scmp.eq.s32.totalorder %s28, 0
      %p316 = por %p314, %p315
      %p317 = scmp.ne.s32.totalorder %s305, %s306
      %p318 = scmp.eq.s32.totalorder %s29, 3
      %p319 = por %p317, %p318
      %p321 = scmp.ne.s32.totalorder %s306, %s320
      %p322 = scmp.eq.s32.totalorder %s29, 0
      %p323 = por %p321, %p322
      %s325 = sadd.s32 %s324, 1
      %p328 = scmp.eq.s32.totalorder %s23, 3
      %p329 = scmp.ne.s32.totalorder %s324, %s326
      %p330 = scmp.eq.s32.totalorder %s23, 0
      %p331 = por %p329, %p330
      %p332 = scmp.ne.s32.totalorder %s324, %s326
      %p333 = scmp.eq.s32.totalorder %s28, 3
      %p334 = por %p332, %p333
      %p335 = scmp.ne.s32.totalorder %s326, %s327
      %p336 = scmp.eq.s32.totalorder %s28, 0
      %p337 = por %p335, %p336
      %p338 = scmp.ne.s32.totalorder %s326, %s327
      %p339 = scmp.eq.s32.totalorder %s29, 3
      %p340 = por %p338, %p339
      %p342 = scmp.ne.s32.totalorder %s327, %s341
      %p343 = scmp.eq.s32.totalorder %s29, 0
      %p344 = por %p342, %p343
      %s345 = ssub.s32 %s31, %s38
      %p346 = scmp.eq.s32.totalorder %s345, 0
      %s348 = sadd.s32 %s347, 1
      %s349 = scalar_select %p346, %s347, %s348
      %p352 = pneg %p346
      %p353 = scmp.eq.s32.totalorder %s23, 3
      %p354 = por %p352, %p353
      %p355 = scmp.ne.s32.totalorder %s347, %s350
      %p356 = scmp.eq.s32.totalorder %s23, 0
      %p357 = por %p355, %p356
      %p358 = scmp.ne.s32.totalorder %s347, %s350
      %p359 = scmp.eq.s32.totalorder %s28, 3
      %p360 = por %p358, %p359
      %p361 = scmp.ne.s32.totalorder %s350, %s351
      %p362 = scmp.eq.s32.totalorder %s28, 0
      %p363 = por %p361, %p362
      %p364 = scmp.ne.s32.totalorder %s350, %s351
      %p365 = scmp.eq.s32.totalorder %s29, 3
      %p366 = por %p364, %p365
      %p368 = scmp.ne.s32.totalorder %s351, %s367
      %p369 = scmp.eq.s32.totalorder %s29, 0
      %p370 = por %p368, %p369
      %p371 = scmp.le.s32.totalorder 1, %s23
      %p372 = scmp.lt.s32.totalorder %s23, 5
      %p373 = pnand %p371, %p372
      %p374 = pneg %p373
      // Predicated region
      $region9: #{tpu_custom_call.1} parent=5 // pred_check
        _
      $region10: #{tpu_custom_call.1} parent=5 // pred_check_branch
        %376 = sbr.rel (%p373) target = $region12
      $region11: #{tpu_custom_call.1} parent=5 // pred_region
        %s377 = ssub.s32 %s23, 1
        // Predicated region
        $region13: #{tpu_custom_call.1} parent=11 // pred_check
          %p378 = pneg %p61
        $region14: #{tpu_custom_call.1} parent=11 // pred_check_branch
          %380 = sbr.rel (%p378) target = $region16
        $region15: #{tpu_custom_call.1} parent=11 // pred_region
          %s381 = smul.u32 2, %s33
          %p382 = scmp.lt.s32.totalorder %s381, 1
          %s383 = scalar_select %p382, %s381, 1
          %s384 = smul.addr %s383, 8
          %s385 = scalar_lea.vmem %s0, %s384
          %s386 = smul.u32 2, %s33
        $region16: #{tpu_custom_call.1} parent=11 // pred_fallthru
          _
        // Predicated region
        $region17: #{tpu_custom_call.1} parent=11 // pred_check
          %p387 = pneg %p87
        $region18: #{tpu_custom_call.1} parent=11 // pred_check_branch
          %389 = sbr.rel (%p387) target = $region20
        $region19: #{tpu_custom_call.1} parent=11 // pred_region
          %s390 = smul.u32 2, %s33
          %p391 = scmp.lt.s32.totalorder %s390, 1
          %s392 = scalar_select %p391, %s390, 1
          %s393 = smul.addr %s392, 2
          %s394 = smul.addr %s393, 8
          %s395 = scalar_lea.vmem %s1, %s394
          %s396 = smul.u32 2, %s33
        $region20: #{tpu_custom_call.1} parent=11 // pred_fallthru
          _
        // Predicated region
        $region21: #{tpu_custom_call.1} parent=11 // pred_check
          %p397 = pneg %p316
        $region22: #{tpu_custom_call.1} parent=11 // pred_check_branch
          %399 = sbr.rel (%p397) target = $region24
        $region23: #{tpu_custom_call.1} parent=11 // pred_region
          _
        $region24: #{tpu_custom_call.1} parent=11 // pred_fallthru
          _
        // Predicated region
        $region25: #{tpu_custom_call.1} parent=11 // pred_check
          %p400 = pneg %p337
        $region26: #{tpu_custom_call.1} parent=11 // pred_check_branch
          %402 = sbr.rel (%p400) target = $region28
        $region27: #{tpu_custom_call.1} parent=11 // pred_region
          %404 = vsyncadd [#allocation8], 0
          %s405 = sshll.u32 %s11, 4
          %s406 = int_to_ptr.hbm [resolvable:$true] %s405
          %s407 = sshll.u32 [#allocation7], 4
          %s408 = int_to_ptr.vmem [resolvable:$true] %s407
          %413 = dma.hbm_to_vmem [thread:$0]  %s406, 256, %s408, [#allocation8], 64, 64, 4
        $region28: #{tpu_custom_call.1} parent=11 // pred_fallthru
          _
      $region12: #{tpu_custom_call.1} parent=5 // pred_fallthru
        _
      %p414 = scmp.lt.s32.totalorder %s23, 4
      // Predicated region
      $region29: #{tpu_custom_call.1} parent=5 // pred_check
        %p415 = pneg %p414
      $region30: #{tpu_custom_call.1} parent=5 // pred_check_branch
        %417 = sbr.rel (%p415) target = $region32
      $region31: #{tpu_custom_call.1} parent=5 // pred_region
        // Predicated region
        $region33: #{tpu_custom_call.1} parent=31 // pred_check
          %p418 = pneg %p107
        $region34: #{tpu_custom_call.1} parent=31 // pred_check_branch
          %420 = sbr.rel (%p418) target = $region36
        $region35: #{tpu_custom_call.1} parent=31 // pred_region
          %p421 = scmp.lt.s32.totalorder %s30, 3
          %s422 = scalar_select %p421, %s30, 3
          %s423 = smul.addr %s422, 4
          %s424 = smul.addr %s423, 4
          %s425 = scalar_lea.vmem %s2, %s424
        $region36: #{tpu_custom_call.1} parent=31 // pred_fallthru
          _
        // Predicated region
        $region37: #{tpu_custom_call.1} parent=31 // pred_check
          %p426 = pneg %p133
        $region38: #{tpu_custom_call.1} parent=31 // pred_check_branch
          %428 = sbr.rel (%p426) target = $region40
        $region39: #{tpu_custom_call.1} parent=31 // pred_region
          %p429 = scmp.lt.s32.totalorder %s30, 3
          %s430 = scalar_select %p429, %s30, 3
          %s431 = smul.addr %s430, 4
          %s432 = smul.addr %s431, 4
          %s433 = scalar_lea.vmem %s3, %s432
        $region40: #{tpu_custom_call.1} parent=31 // pred_fallthru
          _
        // Predicated region
        $region41: #{tpu_custom_call.1} parent=31 // pred_check
          %p434 = pneg %p159
        $region42: #{tpu_custom_call.1} parent=31 // pred_check_branch
          %436 = sbr.rel (%p434) target = $region44
        $region43: #{tpu_custom_call.1} parent=31 // pred_region
          %p437 = scmp.lt.s32.totalorder %s30, 3
          %s438 = scalar_select %p437, %s30, 3
          %s439 = smul.addr %s438, 4
          %s440 = smul.addr %s439, 4
          %s441 = scalar_lea.vmem %s4, %s440
        $region44: #{tpu_custom_call.1} parent=31 // pred_fallthru
          _
        // Predicated region
        $region45: #{tpu_custom_call.1} parent=31 // pred_check
          %p442 = pneg %p185
        $region46: #{tpu_custom_call.1} parent=31 // pred_check_branch
          %444 = sbr.rel (%p442) target = $region48
        $region47: #{tpu_custom_call.1} parent=31 // pred_region
          %p445 = scmp.lt.s32.totalorder %s30, 3
          %s446 = scalar_select %p445, %s30, 3
          %s447 = smul.addr %s446, 4
          %s448 = smul.addr %s447, 4
          %s449 = scalar_lea.vmem %s5, %s448
        $region48: #{tpu_custom_call.1} parent=31 // pred_fallthru
          _
        // Predicated region
        $region49: #{tpu_custom_call.1} parent=31 // pred_check
          %p450 = pneg %p211
        $region50: #{tpu_custom_call.1} parent=31 // pred_check_branch
          %452 = sbr.rel (%p450) target = $region52
        $region51: #{tpu_custom_call.1} parent=31 // pred_region
          %p453 = scmp.lt.s32.totalorder %s30, 3
          %s454 = scalar_select %p453, %s30, 3
          %s455 = smul.addr %s454, 4
          %s456 = smul.addr %s455, 4
          %s457 = scalar_lea.vmem %s6, %s456
        $region52: #{tpu_custom_call.1} parent=31 // pred_fallthru
          _
        // Predicated region
        $region53: #{tpu_custom_call.1} parent=31 // pred_check
          %p458 = pneg %p237
        $region54: #{tpu_custom_call.1} parent=31 // pred_check_branch
          %460 = sbr.rel (%p458) target = $region56
        $region55: #{tpu_custom_call.1} parent=31 // pred_region
          %p461 = scmp.lt.s32.totalorder %s30, 3
          %s462 = scalar_select %p461, %s30, 3
          %s463 = smul.addr %s462, 16
          %s464 = smul.addr %s463, 4
          %s465 = scalar_lea.vmem %s7, %s464
        $region56: #{tpu_custom_call.1} parent=31 // pred_fallthru
          _
        // Predicated region
        $region57: #{tpu_custom_call.1} parent=31 // pred_check
          %p466 = pneg %p263
        $region58: #{tpu_custom_call.1} parent=31 // pred_check_branch
          %468 = sbr.rel (%p466) target = $region60
        $region59: #{tpu_custom_call.1} parent=31 // pred_region
          %p469 = scmp.lt.s32.totalorder %s30, 3
          %s470 = scalar_select %p469, %s30, 3
          %s471 = smul.addr %s470, 2
          %s472 = smul.addr %s471, 8
          %s473 = scalar_lea.vmem %s8, %s472
        $region60: #{tpu_custom_call.1} parent=31 // pred_fallthru
          _
        // Predicated region
        $region61: #{tpu_custom_call.1} parent=31 // pred_check
          %p474 = pneg %p289
        $region62: #{tpu_custom_call.1} parent=31 // pred_check_branch
          %476 = sbr.rel (%p474) target = $region64
        $region63: #{tpu_custom_call.1} parent=31 // pred_region
          %s477 = sand.u32 %s279, 1
          %s478 = scalar_lea.sflag [#allocation5], %s477
          %s479 = sand.u32 %s279, 1
          %s480 = scalar_lea.vmem [#allocation4], %s479
          %482 = vsyncadd %s478, 0
          %s483 = scalar_lea.hbm %s9, %s30
          %s485 = sshll.u32 %s483, 4
          %s486 = int_to_ptr.hbm [resolvable:$true] %s485
          %s487 = sshll.u32 %s480, 4
          %s488 = int_to_ptr.vmem [resolvable:$true] %s487
          %490 = dma.hbm_to_vmem [thread:$0]  %s486, 16, %s488, %s478
        $region64: #{tpu_custom_call.1} parent=31 // pred_fallthru
          _
      $region32: #{tpu_custom_call.1} parent=5 // pred_fallthru
        _
      %p491 = scmp.le.s32.totalorder 1, %s23
      %p492 = scmp.lt.s32.totalorder %s23, 5
      %p493 = pnand %p491, %p492
      %p494 = pneg %p493
      // Predicated region
      $region65: #{tpu_custom_call.1} parent=5 // pred_check
        _
      $region66: #{tpu_custom_call.1} parent=5 // pred_check_branch
        %496 = sbr.rel (%p493) target = $region68
      $region67: #{tpu_custom_call.1} parent=5 // pred_region
        %s497 = ssub.s32 %s23, 1
        %s498 = sand.u32 %s282, 1
        %s499 = scalar_lea.sflag [#allocation5], %s498
        %s500 = sand.u32 %s282, 1
        %s501 = scalar_lea.vmem [#allocation4], %s500
        // Predicated region
        $region69: #{tpu_custom_call.1} parent=67 // pred_check
          %p502 = pneg %p295
        $region70: #{tpu_custom_call.1} parent=67 // pred_check_branch
          %504 = sbr.rel (%p502) target = $region72
        $region71: #{tpu_custom_call.1} parent=67 // pred_region
          %506 = dma.done %s499, 16
        $region72: #{tpu_custom_call.1} parent=67 // pred_fallthru
          _
        // Predicated region
        $region73: #{tpu_custom_call.1} parent=67 // pred_check
          %p507 = pneg %p337
        $region74: #{tpu_custom_call.1} parent=67 // pred_check_branch
          %509 = sbr.rel (%p507) target = $region76
        $region75: #{tpu_custom_call.1} parent=67 // pred_region
          %511 = dma.done [#allocation8], 256
        $region76: #{tpu_custom_call.1} parent=67 // pred_fallthru
          _
        %s512 = smul.u32 2, %s33
        %p513 = scmp.lt.s32.totalorder %s512, 1
        %s514 = scalar_select %p513, %s512, 1
        %s515 = smul.addr %s514, 8
        %s516 = scalar_lea.vmem %s0, %s515
        %p517 = pneg %p61
        %p518 = pneg %p58
        %s519 = smul.u32 2, %s33
        %p520 = scmp.lt.s32.totalorder %s519, 1
        %s521 = scalar_select %p520, %s519, 1
        %s522 = smul.addr %s521, 2
        %s523 = smul.addr %s522, 8
        %s524 = scalar_lea.vmem %s1, %s523
        %p525 = pneg %p87
        %p526 = pneg %p84
        %p527 = scmp.lt.s32.totalorder %s32, 3
        %s528 = scalar_select %p527, %s32, 3
        %s529 = smul.addr %s528, 4
        %s530 = smul.addr %s529, 4
        %s531 = scalar_lea.vmem %s2, %s530
        %p532 = pneg %p113
        %p533 = pneg %p110
        %p534 = scmp.lt.s32.totalorder %s32, 3
        %s535 = scalar_select %p534, %s32, 3
        %s536 = smul.addr %s535, 4
        %s537 = smul.addr %s536, 4
        %s538 = scalar_lea.vmem %s3, %s537
        %p539 = pneg %p139
        %p540 = pneg %p136
        %p541 = scmp.lt.s32.totalorder %s32, 3
        %s542 = scalar_select %p541, %s32, 3
        %s543 = smul.addr %s542, 4
        %s544 = smul.addr %s543, 4
        %s545 = scalar_lea.vmem %s4, %s544
        %p546 = pneg %p165
        %p547 = pneg %p162
        %p548 = scmp.lt.s32.totalorder %s32, 3
        %s549 = scalar_select %p548, %s32, 3
        %s550 = smul.addr %s549, 4
        %s551 = smul.addr %s550, 4
        %s552 = scalar_lea.vmem %s5, %s551
        %p553 = pneg %p191
        %p554 = pneg %p188
        %p555 = scmp.lt.s32.totalorder %s32, 3
        %s556 = scalar_select %p555, %s32, 3
        %s557 = smul.addr %s556, 4
        %s558 = smul.addr %s557, 4
        %s559 = scalar_lea.vmem %s6, %s558
        %p560 = pneg %p217
        %p561 = pneg %p214
        %p562 = scmp.lt.s32.totalorder %s32, 3
        %s563 = scalar_select %p562, %s32, 3
        %s564 = smul.addr %s563, 16
        %s565 = smul.addr %s564, 4
        %s566 = scalar_lea.vmem %s7, %s565
        %p567 = pneg %p243
        %p568 = pneg %p240
        %p569 = scmp.lt.s32.totalorder %s32, 3
        %s570 = scalar_select %p569, %s32, 3
        %s571 = smul.addr %s570, 2
        %s572 = smul.addr %s571, 8
        %s573 = scalar_lea.vmem %s8, %s572
        %p574 = pneg %p269
        %p575 = pneg %p266
        %s576 = sand.u32 %s282, 1
        %s577 = scalar_lea.sflag [#allocation5], %s576
        %s578 = sand.u32 %s282, 1
        %s579 = scalar_lea.vmem [#allocation4], %s578
        %p580 = pneg %p295
        %p581 = pneg %p292
        %p582 = pneg %p316
        %p583 = pneg %p313
        %p584 = pneg %p337
        %p585 = pneg %p334
        %p586 = pneg %p363
        %p587 = pneg %p360
        %s588 = smul.u32 2, %s33
        %p589 = scmp.lt.s32.totalorder %s588, 1
        %s590 = scalar_select %p589, %s588, 1
        %s591 = smul.addr %s590, 8
        %s592 = scalar_lea.vmem %s0, %s591
        %s593 = smul.u32 2, %s33
        %s594 = smul.u32 2, %s33
        %p595 = scmp.lt.s32.totalorder %s594, 1
        %s596 = scalar_select %p595, %s594, 1
        %s597 = smul.addr %s596, 2
        %s598 = smul.addr %s597, 8
        %s599 = scalar_lea.vmem %s1, %s598
        %s600 = smul.u32 2, %s33
        %p601 = scmp.lt.s32.totalorder %s32, 3
        %s602 = scalar_select %p601, %s32, 3
        %s603 = smul.addr %s602, 4
        %s604 = smul.addr %s603, 4
        %s605 = scalar_lea.vmem %s2, %s604
        %p606 = scmp.lt.s32.totalorder %s32, 3
        %s607 = scalar_select %p606, %s32, 3
        %s608 = smul.addr %s607, 4
        %s609 = smul.addr %s608, 4
        %s610 = scalar_lea.vmem %s3, %s609
        %p611 = scmp.lt.s32.totalorder %s32, 3
        %s612 = scalar_select %p611, %s32, 3
        %s613 = smul.addr %s612, 4
        %s614 = smul.addr %s613, 4
        %s615 = scalar_lea.vmem %s4, %s614
        %p616 = scmp.lt.s32.totalorder %s32, 3
        %s617 = scalar_select %p616, %s32, 3
        %s618 = smul.addr %s617, 4
        %s619 = smul.addr %s618, 4
        %s620 = scalar_lea.vmem %s5, %s619
        %p621 = scmp.lt.s32.totalorder %s32, 3
        %s622 = scalar_select %p621, %s32, 3
        %s623 = smul.addr %s622, 4
        %s624 = smul.addr %s623, 4
        %s625 = scalar_lea.vmem %s6, %s624
        %p626 = scmp.lt.s32.totalorder %s32, 3
        %s627 = scalar_select %p626, %s32, 3
        %s628 = smul.addr %s627, 16
        %s629 = smul.addr %s628, 4
        %s630 = scalar_lea.vmem %s7, %s629
        %p631 = scmp.lt.s32.totalorder %s32, 3
        %s632 = scalar_select %p631, %s32, 3
        %s633 = smul.addr %s632, 2
        %s634 = smul.addr %s633, 8
        %s635 = scalar_lea.vmem %s8, %s634
        %s636 = smul.u32 2, %s33
        %p638 = scmp.eq.s32.totalorder %s32, 0
        // Predicated region
        $region77: #{tpu_custom_call.1} parent=67 // pred_check
          %p639 = pneg %p638
        $region78: #{tpu_custom_call.1} parent=67 // pred_check_branch
          %641 = sbr.rel (%p639) target = $region80
        $region79: #{tpu_custom_call.1} parent=67 // pred_region
          %v642 = vld [vmem:[%s592] sm:$0xff]
          %v643 = vld [vmem:[%s592 + $0x8] sm:$0xff]
          %s644 = smul.u32 %s33, 16
          %s645 = scalar_lea.vmem [#allocation2], %s644
          %vm646 = vcmask 261120
          %647 = vst.msk [vmem:[%s645] sm:$0xff] %vm646, %v642
          %648 = vst.msk [vmem:[%s645 + $0x8] sm:$0xff] %vm646, %v643
        $region80: #{tpu_custom_call.1} parent=67 // pred_fallthru
          _
        %v649 = vld [vmem:[%s635] sm:$0xff]
        %v650 = vld [vmem:[%s635 + $0x8] sm:$0x7]
        %s651 = smul.u32 %s33, 16
        %s652 = scalar_lea.vmem [#allocation2], %s651
        %v653 = vld [vmem:[%s652] sm:$0xff]
        %v654 = vld [vmem:[%s652 + $0x8] sm:$0xff]
        %vm655 = vcmask 261120
        %v656 = vsel %vm655, %v653, 0.0
        %657 = vadd.xlane.f32.xlu0 %v656
        %v658 = vpop.xlane.xlu0 %657
        %v659 = vsel %vm655, %v654, 0.0
        %660 = vadd.xlane.f32.xlu0 %v659
        %v661 = vpop.xlane.xlu0 %660
        %v662 = vrcp.pop 32.0
        %v663 = vmul.f32 32.0, %v662
        %v664 = vsub.f32 1.0, %v663
        %v665 = vmul.f32 %v662, %v664
        %v666 = vadd.f32 %v662, %v665
        %vm667 = vweird.f32 %v662
        %v668 = vsel %vm667, %v662, %v666
        %v669 = vmul.f32 %v658, %v668
        %v670 = vmul.f32 %v661, %v668
        %v671 = vsub.f32 %v653, %v669
        %v672 = vsub.f32 %v654, %v670
        %v673 = vmul.f32 %v671, %v671
        %v674 = vmul.f32 %v672, %v672
        %v675 = vsel %vm655, %v673, 0.0
        %676 = vadd.xlane.f32.xlu0 %v675
        %v677 = vpop.xlane.xlu0 %676
        %v678 = vsel %vm655, %v674, 0.0
        %679 = vadd.xlane.f32.xlu0 %v678
        %v680 = vpop.xlane.xlu0 %679
        %v681 = vmul.f32 %v677, %v668
        %v682 = vmul.f32 %v680, %v668
        %v683 = vadd.f32 %v681, 1e-05
        %v684 = vadd.f32 %v682, 1e-05
        %v685 = vrsqrt.pop %v683
        %v686 = vmul.f32 %v685, %v683
        %v687 = vmul.f32 %v686, %v685
        %v688 = vmul.f32 0.5, %v687
        %v689 = vsub.f32 1.5, %v688
        %v690 = vmul.f32 %v685, %v689
        %vm691 = vweird.f32 %v683
        %vm692 = vweird.f32 %v685
        %vm693 = vmor %vm691, %vm692
        %v694 = vsel %vm693, %v685, %v690
        %v695 = vrsqrt.pop %v684
        %v696 = vmul.f32 %v695, %v684
        %v697 = vmul.f32 %v696, %v695
        %v698 = vmul.f32 0.5, %v697
        %v699 = vsub.f32 1.5, %v698
        %v700 = vmul.f32 %v695, %v699
        %vm701 = vweird.f32 %v684
        %vm702 = vweird.f32 %v695
        %vm703 = vmor %vm701, %vm702
        %v704 = vsel %vm703, %v695, %v700
        %v705 = vmul.f32 %v671, %v694
        %v706 = vmul.f32 %v672, %v704
        %v707 = vperm.slane %v649, 0
        %v708 = vmul.f32 %v705, %v707
        %v709 = vmul.f32 %v706, %v707
        %v710 = vperm.slane %v649, 1
        %v711 = vadd.f32 %v708, %v710
        %v712 = vadd.f32 %v709, %v710
        %v713 = vpack.c.bf16 %v712, %v711
        %v714 = vld [vmem:[%s605] sm:$0xf]
        %v715 = vld [vmem:[%s605 + $0x4] sm:$0xf]
        %v716 = vld [vmem:[%s605 + $0x8] sm:$0xf]
        %v717 = vld [vmem:[%s605 + $0xc] sm:$0xf]
        %v718 = vperm.slane %v649, 4
        %v723 = vunpack.c.l.b16 %v714
        %v724 = vunpack.c.l.b16 %v715
        %v725 = vunpack.c.l.b16 %v716
        %v726 = vunpack.c.l.b16 %v717
        %v727 = vpack.c.b16 %v724, %v723
        %v728 = vpack.c.b16 %v726, %v725
        %v732 = vsel %vm655, %v713, 0
        %734 = vmatpush.bf16.msra.mxu0 0
        %735 = vmatpush.bf16.msra.mxu0 0
        %736 = vmatpush.bf16.msra.mxu0 0
        %737 = vmatpush.bf16.msra.mxu0 0
        %738 = vmatpush.bf16.msra.mxu0 0
        %739 = vmatpush.bf16.msra.mxu0 0
        %740 = vmatpush.bf16.msra.mxu0 %v728
        %741 = vmatpush.bf16.msra.mxu0 %v727
        %742 = vmatmul.bf16.gmra.mxu0 %v732
        %v743 = vpop.f32.mrf.mxu0
        %v744 = vadd.f32 %v718, %v743
        %v745 = vpop.f32.mrf.mxu0
        %v746 = vadd.f32 %v718, %v745
        %747 = vdwg.mxu0
        %p748 = scmp.lt.s32.totalorder %s32, 0
        %s749 = ssub.s32 0, %s32
        %s750 = scalar_select %p748, %s749, %s32
        %s751 = sand.u32 %s750, 1
        %s752 = ssub.s32 0, %s751
        %s753 = scalar_select %p748, %s752, %s751
        %p754 = scmp.ne.s32.totalorder %s753, 0
        %p755 = scmp.lt.s32.totalorder %s753, 0
        %p756 = pnand %p755, %p754
        %p757 = pneg %p756
        %s758 = sadd.s32 %s753, 2
        %s759 = scalar_select %p757, %s758, %s753
        %p760 = scmp.eq.s32.totalorder %s759, 0
        // Predicated region
        $region81: #{tpu_custom_call.1} parent=67 // pred_check
          %p761 = pneg %p760
        $region82: #{tpu_custom_call.1} parent=67 // pred_check_branch
          %763 = sbr.rel (%p761) target = $region84
        $region83: #{tpu_custom_call.1} parent=67 // pred_region
          %v764 = vld [vmem:[%s610] sm:$0xf]
          %v765 = vld [vmem:[%s610 + $0x4] sm:$0xf]
          %v766 = vld [vmem:[%s610 + $0x8] sm:$0xf]
          %v767 = vld [vmem:[%s610 + $0xc] sm:$0xf]
          %v768 = vperm.slane %v649, 5
          %v773 = vunpack.c.l.b16 %v764
          %v774 = vunpack.c.l.b16 %v765
          %v775 = vunpack.c.l.b16 %v766
          %v776 = vunpack.c.l.b16 %v767
          %v777 = vpack.c.b16 %v774, %v773
          %v778 = vpack.c.b16 %v776, %v775
          %781 = vmatpush.bf16.msra.mxu0 0
          %782 = vmatpush.bf16.msra.mxu0 0
          %783 = vmatpush.bf16.msra.mxu0 0
          %784 = vmatpush.bf16.msra.mxu0 0
          %785 = vmatpush.bf16.msra.mxu0 0
          %786 = vmatpush.bf16.msra.mxu0 0
          %787 = vmatpush.bf16.msra.mxu0 %v778
          %788 = vmatpush.bf16.msra.mxu0 %v777
          %789 = vmatmul.bf16.gmra.mxu0 %v732
          %v790 = vpop.f32.mrf.mxu0
          %v791 = vadd.f32 %v768, %v790
          %v792 = vpop.f32.mrf.mxu0
          %v793 = vadd.f32 %v768, %v792
          %794 = vdwg.mxu0
          %v795 = vld [vmem:[%s615] sm:$0xf]
          %v796 = vld [vmem:[%s615 + $0x4] sm:$0xf]
          %v797 = vld [vmem:[%s615 + $0x8] sm:$0xf]
          %v798 = vld [vmem:[%s615 + $0xc] sm:$0xf]
          %v799 = vperm.slane %v649, 6
          %v804 = vunpack.c.l.b16 %v795
          %v805 = vunpack.c.l.b16 %v796
          %v806 = vunpack.c.l.b16 %v797
          %v807 = vunpack.c.l.b16 %v798
          %v808 = vpack.c.b16 %v805, %v804
          %v809 = vpack.c.b16 %v807, %v806
          %812 = vmatpush.bf16.msra.mxu0 0
          %813 = vmatpush.bf16.msra.mxu0 0
          %814 = vmatpush.bf16.msra.mxu0 0
          %815 = vmatpush.bf16.msra.mxu0 0
          %816 = vmatpush.bf16.msra.mxu0 0
          %817 = vmatpush.bf16.msra.mxu0 0
          %818 = vmatpush.bf16.msra.mxu0 %v809
          %819 = vmatpush.bf16.msra.mxu0 %v808
          %820 = vmatmul.bf16.gmra.mxu0 %v732
          %v821 = vpop.f32.mrf.mxu0
          %v822 = vadd.f32 %v799, %v821
          %v823 = vpop.f32.mrf.mxu0
          %v824 = vadd.f32 %v799, %v823
          %825 = vdwg.mxu0
          %v826 = vlaneseq
          %v827 = vshrl.u32 %v826, 7
          %v828 = vlaneseq
          %v829 = vand.u32 %v828, 127
          %vm830 = vcmp.gt.s32.totalorder %v829, %v827
          %v831 = vsel %vm830, -1e+30, 0.0
          %v832 = vpack.c.bf16 %v744, %v744
          %834 = vrot.lane.b32.xlu0 %v832, 120
          %v835 = vpop.permute.xlu0 %834
          %836 = vrot.lane.b32.xlu0 %v832, 112
          %v837 = vpop.permute.xlu0 %836
          %838 = vrot.lane.b32.xlu0 %v832, 104
          %v839 = vpop.permute.xlu0 %838
          %v842 = vpack.i.b16 %v835, %v832
          %v843 = vshrl.u32 %v832, 16
          %v844 = vshrl.u32 %v835, 16
          %v845 = vpack.i.b16 %v844, %v843
          %v848 = vpack.i.b16 %v839, %v837
          %v849 = vshrl.u32 %v837, 16
          %v850 = vshrl.u32 %v839, 16
          %v851 = vpack.i.b16 %v850, %v849
          %v854 = vunpack.c.l.s4 1983009808
          %v855 = vunpack.c.0.s8 %v854
          %v856 = vperm.slane %v842, %v855
          %v859 = vunpack.c.l.s4 1983009808
          %v860 = vunpack.c.0.s8 %v859
          %v861 = vperm.slane %v848, %v860
          %v862 = vrot.slane %v861, 4
          %vm863 = vcmask 1047556
          %v864 = vsel %vm863, %v862, %v856
          %v865 = vrot.slane %v856, 4
          %v866 = vsel %vm863, %v861, %v865
          %v868 = vunpack.c.l.s4 1934713408
          %v869 = vunpack.c.0.s8 %v868
          %v870 = vperm.slane %v864, %v869
          %v872 = vunpack.c.l.s4 1934713408
          %v873 = vunpack.c.0.s8 %v872
          %v874 = vperm.slane %v866, %v873
          %v875 = vrot.slane %v870, 4
          %v876 = vsel %vm863, 0, %v875
          %v877 = vrot.slane %v874, 4
          %v878 = vsel %vm863, 0, %v877
          %v881 = vunpack.c.l.s4 1983009808
          %v882 = vunpack.c.0.s8 %v881
          %v883 = vperm.slane %v845, %v882
          %v886 = vunpack.c.l.s4 1983009808
          %v887 = vunpack.c.0.s8 %v886
          %v888 = vperm.slane %v851, %v887
          %v889 = vrot.slane %v888, 4
          %v890 = vsel %vm863, %v889, %v883
          %v891 = vrot.slane %v883, 4
          %v892 = vsel %vm863, %v888, %v891
          %v894 = vunpack.c.l.s4 1934713408
          %v895 = vunpack.c.0.s8 %v894
          %v896 = vperm.slane %v890, %v895
          %v898 = vunpack.c.l.s4 1934713408
          %v899 = vunpack.c.0.s8 %v898
          %v900 = vperm.slane %v892, %v899
          %v901 = vrot.slane %v896, 4
          %v902 = vsel %vm863, 0, %v901
          %v903 = vrot.slane %v900, 4
          %v904 = vsel %vm863, 0, %v903
          %v905 = vsel %vm863, %v877, %v870
          %v907 = vunpack.c.l.s4 1983009808
          %v908 = vunpack.c.0.s8 %v907
          %v909 = vperm.slane %v905, %v908
          %v910 = vrot.slane %v878, 4
          %v911 = vsel %vm863, %v910, %v876
          %v913 = vunpack.c.l.s4 1983009808
          %v914 = vunpack.c.0.s8 %v913
          %v915 = vperm.slane %v911, %v914
          %v916 = vrot.slane %v915, 4
          %v917 = vsel %vm863, %v916, %v909
          %v919 = vunpack.c.l.s4 1934713408
          %v920 = vunpack.c.0.s8 %v919
          %v921 = vperm.slane %v917, %v920
          %v922 = vrot.slane %v921, 4
          %v923 = vsel %vm863, 0, %v922
          %v924 = vsel %vm863, %v903, %v896
          %v926 = vunpack.c.l.s4 1983009808
          %v927 = vunpack.c.0.s8 %v926
          %v928 = vperm.slane %v924, %v927
          %v929 = vrot.slane %v904, 4
          %v930 = vsel %vm863, %v929, %v902
          %v932 = vunpack.c.l.s4 1983009808
          %v933 = vunpack.c.0.s8 %v932
          %v934 = vperm.slane %v930, %v933
          %v935 = vrot.slane %v934, 4
          %v936 = vsel %vm863, %v935, %v928
          %v938 = vunpack.c.l.s4 1934713408
          %v939 = vunpack.c.0.s8 %v938
          %v940 = vperm.slane %v936, %v939
          %v941 = vrot.slane %v940, 4
          %v942 = vsel %vm863, 0, %v941
          %v945 = vpack.i.b16 %v940, %v921
          %v946 = vshrl.u32 %v921, 16
          %v947 = vshrl.u32 %v940, 16
          %v948 = vpack.i.b16 %v947, %v946
          %v951 = vpack.i.b16 %v942, %v923
          %v952 = vshrl.u32 %v923, 16
          %v953 = vshrl.u32 %v942, 16
          %v954 = vpack.i.b16 %v953, %v952
          %v955 = vpack.c.bf16 %v791, %v791
          %957 = vrot.lane.b32.xlu0 %v955, 120
          %v958 = vpop.permute.xlu0 %957
          %959 = vrot.lane.b32.xlu0 %v955, 112
          %v960 = vpop.permute.xlu0 %959
          %961 = vrot.lane.b32.xlu0 %v955, 104
          %v962 = vpop.permute.xlu0 %961
          %v965 = vpack.i.b16 %v958, %v955
          %v966 = vshrl.u32 %v955, 16
          %v967 = vshrl.u32 %v958, 16
          %v968 = vpack.i.b16 %v967, %v966
          %v971 = vpack.i.b16 %v962, %v960
          %v972 = vshrl.u32 %v960, 16
          %v973 = vshrl.u32 %v962, 16
          %v974 = vpack.i.b16 %v973, %v972
          %v977 = vunpack.c.l.s4 1983009808
          %v978 = vunpack.c.0.s8 %v977
          %v979 = vperm.slane %v965, %v978
          %v982 = vunpack.c.l.s4 1983009808
          %v983 = vunpack.c.0.s8 %v982
          %v984 = vperm.slane %v971, %v983
          %v985 = vrot.slane %v984, 4
          %v986 = vsel %vm863, %v985, %v979
          %v987 = vrot.slane %v979, 4
          %v988 = vsel %vm863, %v984, %v987
          %v990 = vunpack.c.l.s4 1934713408
          %v991 = vunpack.c.0.s8 %v990
          %v992 = vperm.slane %v986, %v991
          %v994 = vunpack.c.l.s4 1934713408
          %v995 = vunpack.c.0.s8 %v994
          %v996 = vperm.slane %v988, %v995
          %v997 = vrot.slane %v992, 4
          %v998 = vsel %vm863, 0, %v997
          %v999 = vrot.slane %v996, 4
          %v1000 = vsel %vm863, 0, %v999
          %v1003 = vunpack.c.l.s4 1983009808
          %v1004 = vunpack.c.0.s8 %v1003
          %v1005 = vperm.slane %v968, %v1004
          %v1008 = vunpack.c.l.s4 1983009808
          %v1009 = vunpack.c.0.s8 %v1008
          %v1010 = vperm.slane %v974, %v1009
          %v1011 = vrot.slane %v1010, 4
          %v1012 = vsel %vm863, %v1011, %v1005
          %v1013 = vrot.slane %v1005, 4
          %v1014 = vsel %vm863, %v1010, %v1013
          %v1016 = vunpack.c.l.s4 1934713408
          %v1017 = vunpack.c.0.s8 %v1016
          %v1018 = vperm.slane %v1012, %v1017
          %v1020 = vunpack.c.l.s4 1934713408
          %v1021 = vunpack.c.0.s8 %v1020
          %v1022 = vperm.slane %v1014, %v1021
          %v1023 = vrot.slane %v1018, 4
          %v1024 = vsel %vm863, 0, %v1023
          %v1025 = vrot.slane %v1022, 4
          %v1026 = vsel %vm863, 0, %v1025
          %v1027 = vsel %vm863, %v999, %v992
          %v1029 = vunpack.c.l.s4 1983009808
          %v1030 = vunpack.c.0.s8 %v1029
          %v1031 = vperm.slane %v1027, %v1030
          %v1032 = vrot.slane %v1000, 4
          %v1033 = vsel %vm863, %v1032, %v998
          %v1035 = vunpack.c.l.s4 1983009808
          %v1036 = vunpack.c.0.s8 %v1035
          %v1037 = vperm.slane %v1033, %v1036
          %v1038 = vrot.slane %v1037, 4
          %v1039 = vsel %vm863, %v1038, %v1031
          %v1041 = vunpack.c.l.s4 1934713408
          %v1042 = vunpack.c.0.s8 %v1041
          %v1043 = vperm.slane %v1039, %v1042
          %v1044 = vrot.slane %v1043, 4
          %v1045 = vsel %vm863, 0, %v1044
          %v1046 = vsel %vm863, %v1025, %v1018
          %v1048 = vunpack.c.l.s4 1983009808
          %v1049 = vunpack.c.0.s8 %v1048
          %v1050 = vperm.slane %v1046, %v1049
          %v1051 = vrot.slane %v1026, 4
          %v1052 = vsel %vm863, %v1051, %v1024
          %v1054 = vunpack.c.l.s4 1983009808
          %v1055 = vunpack.c.0.s8 %v1054
          %v1056 = vperm.slane %v1052, %v1055
          %v1057 = vrot.slane %v1056, 4
          %v1058 = vsel %vm863, %v1057, %v1050
          %v1060 = vunpack.c.l.s4 1934713408
          %v1061 = vunpack.c.0.s8 %v1060
          %v1062 = vperm.slane %v1058, %v1061
          %v1063 = vrot.slane %v1062, 4
          %v1064 = vsel %vm863, 0, %v1063
          %v1067 = vpack.i.b16 %v1062, %v1043
          %v1068 = vshrl.u32 %v1043, 16
          %v1069 = vshrl.u32 %v1062, 16
          %v1070 = vpack.i.b16 %v1069, %v1068
          %v1073 = vpack.i.b16 %v1064, %v1045
          %v1074 = vshrl.u32 %v1045, 16
          %v1075 = vshrl.u32 %v1064, 16
          %v1076 = vpack.i.b16 %v1075, %v1074
          %v1077 = vpack.c.bf16 %v822, %v822
          %1079 = vrot.lane.b32.xlu0 %v1077, 120
          %v1080 = vpop.permute.xlu0 %1079
          %1081 = vrot.lane.b32.xlu0 %v1077, 112
          %v1082 = vpop.permute.xlu0 %1081
          %1083 = vrot.lane.b32.xlu0 %v1077, 104
          %v1084 = vpop.permute.xlu0 %1083
          %v1087 = vpack.i.b16 %v1080, %v1077
          %v1088 = vshrl.u32 %v1077, 16
          %v1089 = vshrl.u32 %v1080, 16
          %v1090 = vpack.i.b16 %v1089, %v1088
          %v1093 = vpack.i.b16 %v1084, %v1082
          %v1094 = vshrl.u32 %v1082, 16
          %v1095 = vshrl.u32 %v1084, 16
          %v1096 = vpack.i.b16 %v1095, %v1094
          %v1099 = vunpack.c.l.s4 1983009808
          %v1100 = vunpack.c.0.s8 %v1099
          %v1101 = vperm.slane %v1087, %v1100
          %v1104 = vunpack.c.l.s4 1983009808
          %v1105 = vunpack.c.0.s8 %v1104
          %v1106 = vperm.slane %v1093, %v1105
          %v1107 = vrot.slane %v1106, 4
          %v1108 = vsel %vm863, %v1107, %v1101
          %v1109 = vrot.slane %v1101, 4
          %v1110 = vsel %vm863, %v1106, %v1109
          %v1112 = vunpack.c.l.s4 1934713408
          %v1113 = vunpack.c.0.s8 %v1112
          %v1114 = vperm.slane %v1108, %v1113
          %v1116 = vunpack.c.l.s4 1934713408
          %v1117 = vunpack.c.0.s8 %v1116
          %v1118 = vperm.slane %v1110, %v1117
          %v1119 = vrot.slane %v1114, 4
          %v1120 = vsel %vm863, 0, %v1119
          %v1121 = vrot.slane %v1118, 4
          %v1122 = vsel %vm863, 0, %v1121
          %v1125 = vunpack.c.l.s4 1983009808
          %v1126 = vunpack.c.0.s8 %v1125
          %v1127 = vperm.slane %v1090, %v1126
          %v1130 = vunpack.c.l.s4 1983009808
          %v1131 = vunpack.c.0.s8 %v1130
          %v1132 = vperm.slane %v1096, %v1131
          %v1133 = vrot.slane %v1132, 4
          %v1134 = vsel %vm863, %v1133, %v1127
          %v1135 = vrot.slane %v1127, 4
          %v1136 = vsel %vm863, %v1132, %v1135
          %v1138 = vunpack.c.l.s4 1934713408
          %v1139 = vunpack.c.0.s8 %v1138
          %v1140 = vperm.slane %v1134, %v1139
          %v1142 = vunpack.c.l.s4 1934713408
          %v1143 = vunpack.c.0.s8 %v1142
          %v1144 = vperm.slane %v1136, %v1143
          %v1145 = vrot.slane %v1140, 4
          %v1146 = vsel %vm863, 0, %v1145
          %v1147 = vrot.slane %v1144, 4
          %v1148 = vsel %vm863, 0, %v1147
          %v1149 = vsel %vm863, %v1121, %v1114
          %v1151 = vunpack.c.l.s4 1983009808
          %v1152 = vunpack.c.0.s8 %v1151
          %v1153 = vperm.slane %v1149, %v1152
          %v1154 = vrot.slane %v1122, 4
          %v1155 = vsel %vm863, %v1154, %v1120
          %v1157 = vunpack.c.l.s4 1983009808
          %v1158 = vunpack.c.0.s8 %v1157
          %v1159 = vperm.slane %v1155, %v1158
          %v1160 = vrot.slane %v1159, 4
          %v1161 = vsel %vm863, %v1160, %v1153
          %v1163 = vunpack.c.l.s4 1934713408
          %v1164 = vunpack.c.0.s8 %v1163
          %v1165 = vperm.slane %v1161, %v1164
          %v1166 = vrot.slane %v1165, 4
          %v1167 = vsel %vm863, 0, %v1166
          %v1168 = vsel %vm863, %v1147, %v1140
          %v1170 = vunpack.c.l.s4 1983009808
          %v1171 = vunpack.c.0.s8 %v1170
          %v1172 = vperm.slane %v1168, %v1171
          %v1173 = vrot.slane %v1148, 4
          %v1174 = vsel %vm863, %v1173, %v1146
          %v1176 = vunpack.c.l.s4 1983009808
          %v1177 = vunpack.c.0.s8 %v1176
          %v1178 = vperm.slane %v1174, %v1177
          %v1179 = vrot.slane %v1178, 4
          %v1180 = vsel %vm863, %v1179, %v1172
          %v1182 = vunpack.c.l.s4 1934713408
          %v1183 = vunpack.c.0.s8 %v1182
          %v1184 = vperm.slane %v1180, %v1183
          %v1185 = vrot.slane %v1184, 4
          %v1186 = vsel %vm863, 0, %v1185
          %v1189 = vpack.i.b16 %v1184, %v1165
          %v1190 = vshrl.u32 %v1165, 16
          %v1191 = vshrl.u32 %v1184, 16
          %v1192 = vpack.i.b16 %v1191, %v1190
          %v1195 = vpack.i.b16 %v1186, %v1167
          %v1196 = vshrl.u32 %v1167, 16
          %v1197 = vshrl.u32 %v1186, 16
          %v1198 = vpack.i.b16 %v1197, %v1196
          %vm1199 = vcmask 64512
          %v1201 = vsel %vm1199, %v945, 0
          %v1204 = vsel %vm1199, %v1067, 0
          %1206 = vmatpush.bf16.xpose.msra.mxu0 0
          %1207 = vmatpush.bf16.xpose.msra.mxu0 0
          %1208 = vmatpush.bf16.xpose.msra.mxu0 0
          %1209 = vmatpush.bf16.xpose.msra.mxu0 0
          %1210 = vmatpush.bf16.xpose.msra.mxu0 0
          %1211 = vmatpush.bf16.xpose.msra.mxu0 0
          %1212 = vmatpush.bf16.xpose.msra.mxu0 0
          %1213 = vmatpush.bf16.xpose.msra.mxu0 %v1204
          %1214 = vmatmul.bf16.gmra.mxu0 %v1201
          %v1215 = vpop.f32.mrf.mxu0
          %v1216 = vadd.f32 %v831, %v1215
          %v1217 = vpop.f32.mrf.mxu0
          %1218 = vdwg.mxu0
          %v1220 = vsel %vm1199, %v948, 0
          %v1223 = vsel %vm1199, %v1070, 0
          %1225 = vmatpush.bf16.xpose.msra.mxu0 0
          %1226 = vmatpush.bf16.xpose.msra.mxu0 0
          %1227 = vmatpush.bf16.xpose.msra.mxu0 0
          %1228 = vmatpush.bf16.xpose.msra.mxu0 0
          %1229 = vmatpush.bf16.xpose.msra.mxu0 0
          %1230 = vmatpush.bf16.xpose.msra.mxu0 0
          %1231 = vmatpush.bf16.xpose.msra.mxu0 0
          %1232 = vmatpush.bf16.xpose.msra.mxu0 %v1223
          %1233 = vmatmul.bf16.gmra.mxu0 %v1220
          %v1234 = vpop.f32.mrf.mxu0
          %v1235 = vadd.f32 %v831, %v1234
          %v1236 = vpop.f32.mrf.mxu0
          %1237 = vdwg.mxu0
          %v1239 = vsel %vm1199, %v951, 0
          %v1242 = vsel %vm1199, %v1073, 0
          %1244 = vmatpush.bf16.xpose.msra.mxu0 0
          %1245 = vmatpush.bf16.xpose.msra.mxu0 0
          %1246 = vmatpush.bf16.xpose.msra.mxu0 0
          %1247 = vmatpush.bf16.xpose.msra.mxu0 0
          %1248 = vmatpush.bf16.xpose.msra.mxu0 0
          %1249 = vmatpush.bf16.xpose.msra.mxu0 0
          %1250 = vmatpush.bf16.xpose.msra.mxu0 0
          %1251 = vmatpush.bf16.xpose.msra.mxu0 %v1242
          %1252 = vmatmul.bf16.gmra.mxu0 %v1239
          %v1253 = vpop.f32.mrf.mxu0
          %v1254 = vadd.f32 %v831, %v1253
          %v1255 = vpop.f32.mrf.mxu0
          %1256 = vdwg.mxu0
          %v1258 = vsel %vm1199, %v954, 0
          %v1261 = vsel %vm1199, %v1076, 0
          %1263 = vmatpush.bf16.xpose.msra.mxu0 0
          %1264 = vmatpush.bf16.xpose.msra.mxu0 0
          %1265 = vmatpush.bf16.xpose.msra.mxu0 0
          %1266 = vmatpush.bf16.xpose.msra.mxu0 0
          %1267 = vmatpush.bf16.xpose.msra.mxu0 0
          %1268 = vmatpush.bf16.xpose.msra.mxu0 0
          %1269 = vmatpush.bf16.xpose.msra.mxu0 0
          %1270 = vmatpush.bf16.xpose.msra.mxu0 %v1261
          %1271 = vmatmul.bf16.gmra.mxu0 %v1258
          %v1272 = vpop.f32.mrf.mxu0
          %v1273 = vadd.f32 %v831, %v1272
          %v1274 = vpop.f32.mrf.mxu0
          %1275 = vdwg.mxu0
          %v1276 = vsel %vm1199, %v1216, -inf
          %1277 = vmax.xlane.f32.xlu0 %v1276
          %v1278 = vpop.xlane.xlu0 %1277
          %v1279 = vsel %vm1199, %v1235, -inf
          %1280 = vmax.xlane.f32.xlu0 %v1279
          %v1281 = vpop.xlane.xlu0 %1280
          %v1282 = vsel %vm1199, %v1254, -inf
          %1283 = vmax.xlane.f32.xlu0 %v1282
          %v1284 = vpop.xlane.xlu0 %1283
          %v1285 = vsel %vm1199, %v1273, -inf
          %1286 = vmax.xlane.f32.xlu0 %v1285
          %v1287 = vpop.xlane.xlu0 %1286
          %v1288 = vsub.f32 %v1216, %v1278
          %v1289 = vsub.f32 %v1235, %v1281
          %v1290 = vsub.f32 %v1254, %v1284
          %v1291 = vsub.f32 %v1273, %v1287
          %v1292 = vmul.f32 %v1288, 1.442695
          %v1293 = vpow.pop %v1292
          %v1294 = vmul.f32 %v1289, 1.442695
          %v1295 = vpow.pop %v1294
          %v1296 = vmul.f32 %v1290, 1.442695
          %v1297 = vpow.pop %v1296
          %v1298 = vmul.f32 %v1291, 1.442695
          %v1299 = vpow.pop %v1298
          %v1300 = vsel %vm1199, %v1293, 0.0
          %1301 = vadd.xlane.f32.xlu0 %v1300
          %v1302 = vpop.xlane.xlu0 %1301
          %v1303 = vsel %vm1199, %v1295, 0.0
          %1304 = vadd.xlane.f32.xlu0 %v1303
          %v1305 = vpop.xlane.xlu0 %1304
          %v1306 = vsel %vm1199, %v1297, 0.0
          %1307 = vadd.xlane.f32.xlu0 %v1306
          %v1308 = vpop.xlane.xlu0 %1307
          %v1309 = vsel %vm1199, %v1299, 0.0
          %1310 = vadd.xlane.f32.xlu0 %v1309
          %v1311 = vpop.xlane.xlu0 %1310
          %v1312 = vrcp.pop %v1302
          %v1313 = vrcp.pop %v1305
          %v1314 = vrcp.pop %v1308
          %v1315 = vrcp.pop %v1311
          %v1316 = vmul.f32 %v1293, %v1312
          %v1317 = vmul.f32 %v1295, %v1313
          %v1318 = vmul.f32 %v1297, %v1314
          %v1319 = vmul.f32 %v1299, %v1315
          %v1320 = vpack.c.bf16 %v1316, %v1316
          %v1321 = vpack.c.bf16 %v1317, %v1317
          %v1322 = vpack.c.bf16 %v1318, %v1318
          %v1323 = vpack.c.bf16 %v1319, %v1319
          %v1325 = vsel %vm1199, %v1320, 0
          %vm1327 = vcmask 1043456
          %v1329 = vsel %vm1327, %v1189, 0
          %1331 = vmatpush.bf16.msra.mxu0 0
          %1332 = vmatpush.bf16.msra.mxu0 0
          %1333 = vmatpush.bf16.msra.mxu0 0
          %1334 = vmatpush.bf16.msra.mxu0 0
          %1335 = vmatpush.bf16.msra.mxu0 0
          %1336 = vmatpush.bf16.msra.mxu0 0
          %1337 = vmatpush.bf16.msra.mxu0 0
          %1338 = vmatpush.bf16.msra.mxu0 %v1329
          %1339 = vmatmul.bf16.gmra.mxu0 %v1325
          %v1340 = vpop.f32.mrf.mxu0
          %v1341 = vadd.f32 0.0, %v1340
          %v1342 = vpop.f32.mrf.mxu0
          %1343 = vdwg.mxu0
          %v1345 = vsel %vm1199, %v1321, 0
          %v1348 = vsel %vm1327, %v1192, 0
          %1350 = vmatpush.bf16.msra.mxu0 0
          %1351 = vmatpush.bf16.msra.mxu0 0
          %1352 = vmatpush.bf16.msra.mxu0 0
          %1353 = vmatpush.bf16.msra.mxu0 0
          %1354 = vmatpush.bf16.msra.mxu0 0
          %1355 = vmatpush.bf16.msra.mxu0 0
          %1356 = vmatpush.bf16.msra.mxu0 0
          %1357 = vmatpush.bf16.msra.mxu0 %v1348
          %1358 = vmatmul.bf16.gmra.mxu0 %v1345
          %v1359 = vpop.f32.mrf.mxu0
          %v1360 = vadd.f32 0.0, %v1359
          %v1361 = vpop.f32.mrf.mxu0
          %1362 = vdwg.mxu0
          %v1364 = vsel %vm1199, %v1322, 0
          %v1367 = vsel %vm1327, %v1195, 0
          %1369 = vmatpush.bf16.msra.mxu0 0
          %1370 = vmatpush.bf16.msra.mxu0 0
          %1371 = vmatpush.bf16.msra.mxu0 0
          %1372 = vmatpush.bf16.msra.mxu0 0
          %1373 = vmatpush.bf16.msra.mxu0 0
          %1374 = vmatpush.bf16.msra.mxu0 0
          %1375 = vmatpush.bf16.msra.mxu0 0
          %1376 = vmatpush.bf16.msra.mxu0 %v1367
          %1377 = vmatmul.bf16.gmra.mxu0 %v1364
          %v1378 = vpop.f32.mrf.mxu0
          %v1379 = vadd.f32 0.0, %v1378
          %v1380 = vpop.f32.mrf.mxu0
          %1381 = vdwg.mxu0
          %v1383 = vsel %vm1199, %v1323, 0
          %v1386 = vsel %vm1327, %v1198, 0
          %1388 = vmatpush.bf16.msra.mxu0 0
          %1389 = vmatpush.bf16.msra.mxu0 0
          %1390 = vmatpush.bf16.msra.mxu0 0
          %1391 = vmatpush.bf16.msra.mxu0 0
          %1392 = vmatpush.bf16.msra.mxu0 0
          %1393 = vmatpush.bf16.msra.mxu0 0
          %1394 = vmatpush.bf16.msra.mxu0 0
          %1395 = vmatpush.bf16.msra.mxu0 %v1386
          %1396 = vmatmul.bf16.gmra.mxu0 %v1383
          %v1397 = vpop.f32.mrf.mxu0
          %v1398 = vadd.f32 0.0, %v1397
          %v1399 = vpop.f32.mrf.mxu0
          %1400 = vdwg.mxu0
          %v1401 = vpack.c.bf16 %v1341, %v1341
          %v1402 = vpack.c.bf16 %v1360, %v1360
          %v1403 = vpack.c.bf16 %v1379, %v1379
          %v1404 = vpack.c.bf16 %v1398, %v1398
          %v1407 = vpack.i.b16 %v1402, %v1401
          %v1408 = vshrl.u32 %v1401, 16
          %v1409 = vshrl.u32 %v1402, 16
          %v1410 = vpack.i.b16 %v1409, %v1408
          %v1413 = vpack.i.b16 %v1404, %v1403
          %v1414 = vshrl.u32 %v1403, 16
          %v1415 = vshrl.u32 %v1404, 16
          %v1416 = vpack.i.b16 %v1415, %v1414
          %v1419 = vunpack.c.l.s4 1983009808
          %v1420 = vunpack.c.0.s8 %v1419
          %v1421 = vperm.slane %v1407, %v1420
          %v1424 = vunpack.c.l.s4 1983009808
          %v1425 = vunpack.c.0.s8 %v1424
          %v1426 = vperm.slane %v1413, %v1425
          %v1427 = vrot.slane %v1426, 4
          %v1428 = vsel %vm863, %v1427, %v1421
          %v1429 = vrot.slane %v1421, 4
          %v1430 = vsel %vm863, %v1426, %v1429
          %v1432 = vunpack.c.l.s4 1934713408
          %v1433 = vunpack.c.0.s8 %v1432
          %v1434 = vperm.slane %v1428, %v1433
          %v1436 = vunpack.c.l.s4 1934713408
          %v1437 = vunpack.c.0.s8 %v1436
          %v1438 = vperm.slane %v1430, %v1437
          %v1439 = vrot.slane %v1434, 4
          %v1440 = vsel %vm863, 0, %v1439
          %v1441 = vrot.slane %v1438, 4
          %v1442 = vsel %vm863, 0, %v1441
          %v1445 = vunpack.c.l.s4 1983009808
          %v1446 = vunpack.c.0.s8 %v1445
          %v1447 = vperm.slane %v1410, %v1446
          %v1450 = vunpack.c.l.s4 1983009808
          %v1451 = vunpack.c.0.s8 %v1450
          %v1452 = vperm.slane %v1416, %v1451
          %v1453 = vrot.slane %v1452, 4
          %v1454 = vsel %vm863, %v1453, %v1447
          %v1455 = vrot.slane %v1447, 4
          %v1456 = vsel %vm863, %v1452, %v1455
          %v1458 = vunpack.c.l.s4 1934713408
          %v1459 = vunpack.c.0.s8 %v1458
          %v1460 = vperm.slane %v1454, %v1459
          %v1462 = vunpack.c.l.s4 1934713408
          %v1463 = vunpack.c.0.s8 %v1462
          %v1464 = vperm.slane %v1456, %v1463
          %v1465 = vrot.slane %v1460, 4
          %v1466 = vsel %vm863, 0, %v1465
          %v1467 = vrot.slane %v1464, 4
          %v1468 = vsel %vm863, 0, %v1467
          %v1469 = vsel %vm863, %v1441, %v1434
          %v1471 = vunpack.c.l.s4 1983009808
          %v1472 = vunpack.c.0.s8 %v1471
          %v1473 = vperm.slane %v1469, %v1472
          %v1474 = vrot.slane %v1442, 4
          %v1475 = vsel %vm863, %v1474, %v1440
          %v1477 = vunpack.c.l.s4 1983009808
          %v1478 = vunpack.c.0.s8 %v1477
          %v1479 = vperm.slane %v1475, %v1478
          %v1480 = vrot.slane %v1479, 4
          %v1481 = vsel %vm863, %v1480, %v1473
          %v1483 = vunpack.c.l.s4 1934713408
          %v1484 = vunpack.c.0.s8 %v1483
          %v1485 = vperm.slane %v1481, %v1484
          %v1486 = vrot.slane %v1485, 4
          %v1487 = vsel %vm863, 0, %v1486
          %v1488 = vsel %vm863, %v1467, %v1460
          %v1490 = vunpack.c.l.s4 1983009808
          %v1491 = vunpack.c.0.s8 %v1490
          %v1492 = vperm.slane %v1488, %v1491
          %v1493 = vrot.slane %v1468, 4
          %v1494 = vsel %vm863, %v1493, %v1466
          %v1496 = vunpack.c.l.s4 1983009808
          %v1497 = vunpack.c.0.s8 %v1496
          %v1498 = vperm.slane %v1494, %v1497
          %v1499 = vrot.slane %v1498, 4
          %v1500 = vsel %vm863, %v1499, %v1492
          %v1502 = vunpack.c.l.s4 1934713408
          %v1503 = vunpack.c.0.s8 %v1502
          %v1504 = vperm.slane %v1500, %v1503
          %v1505 = vrot.slane %v1504, 4
          %v1506 = vsel %vm863, 0, %v1505
          %v1509 = vpack.i.b16 %v1504, %v1485
          %v1510 = vshrl.u32 %v1485, 16
          %v1511 = vshrl.u32 %v1504, 16
          %v1512 = vpack.i.b16 %v1511, %v1510
          %v1515 = vpack.i.b16 %v1506, %v1487
          %v1516 = vshrl.u32 %v1487, 16
          %v1517 = vshrl.u32 %v1506, 16
          %v1518 = vpack.i.b16 %v1517, %v1516
          %v1519 = vunpack.c.l.b16 %v1512
          %v1520 = vpack.c.b16 %v1519, %v1519
          %1521 = vrot.lane.b32.xlu0 %v1520, 8
          %v1522 = vpop.permute.xlu0 %1521
          %v1523 = vunpack.c.l.b16 %v1515
          %v1524 = vpack.c.b16 %v1523, %v1523
          %1525 = vrot.lane.b32.xlu0 %v1524, 16
          %v1526 = vpop.permute.xlu0 %1525
          %v1527 = vunpack.c.l.b16 %v1518
          %v1528 = vpack.c.b16 %v1527, %v1527
          %1529 = vrot.lane.b32.xlu0 %v1528, 24
          %v1530 = vpop.permute.xlu0 %1529
          %v1533 = vsel %vm1199, %v1509, %v1522
          %vm1534 = vcmask 130048
          %v1536 = vsel %vm1534, %v1533, %v1526
          %vm1537 = vcmask 195584
          %v1539 = vsel %vm1537, %v1536, %v1530
          %vm1541 = vcmask 257024
          %1542 = vst.msk [vmem:[#allocation3] sm:$0xf] %vm1541, %v1539
          %v1543 = vpack.c.bf16 %v746, %v746
          %1545 = vrot.lane.b32.xlu0 %v1543, 120
          %v1546 = vpop.permute.xlu0 %1545
          %1547 = vrot.lane.b32.xlu0 %v1543, 112
          %v1548 = vpop.permute.xlu0 %1547
          %1549 = vrot.lane.b32.xlu0 %v1543, 104
          %v1550 = vpop.permute.xlu0 %1549
          %v1553 = vpack.i.b16 %v1546, %v1543
          %v1554 = vshrl.u32 %v1543, 16
          %v1555 = vshrl.u32 %v1546, 16
          %v1556 = vpack.i.b16 %v1555, %v1554
          %v1559 = vpack.i.b16 %v1550, %v1548
          %v1560 = vshrl.u32 %v1548, 16
          %v1561 = vshrl.u32 %v1550, 16
          %v1562 = vpack.i.b16 %v1561, %v1560
          %v1565 = vunpack.c.l.s4 1983009808
          %v1566 = vunpack.c.0.s8 %v1565
          %v1567 = vperm.slane %v1553, %v1566
          %v1570 = vunpack.c.l.s4 1983009808
          %v1571 = vunpack.c.0.s8 %v1570
          %v1572 = vperm.slane %v1559, %v1571
          %v1573 = vrot.slane %v1572, 4
          %v1574 = vsel %vm863, %v1573, %v1567
          %v1575 = vrot.slane %v1567, 4
          %v1576 = vsel %vm863, %v1572, %v1575
          %v1578 = vunpack.c.l.s4 1934713408
          %v1579 = vunpack.c.0.s8 %v1578
          %v1580 = vperm.slane %v1574, %v1579
          %v1582 = vunpack.c.l.s4 1934713408
          %v1583 = vunpack.c.0.s8 %v1582
          %v1584 = vperm.slane %v1576, %v1583
          %v1585 = vrot.slane %v1580, 4
          %v1586 = vsel %vm863, 0, %v1585
          %v1587 = vrot.slane %v1584, 4
          %v1588 = vsel %vm863, 0, %v1587
          %v1591 = vunpack.c.l.s4 1983009808
          %v1592 = vunpack.c.0.s8 %v1591
          %v1593 = vperm.slane %v1556, %v1592
          %v1596 = vunpack.c.l.s4 1983009808
          %v1597 = vunpack.c.0.s8 %v1596
          %v1598 = vperm.slane %v1562, %v1597
          %v1599 = vrot.slane %v1598, 4
          %v1600 = vsel %vm863, %v1599, %v1593
          %v1601 = vrot.slane %v1593, 4
          %v1602 = vsel %vm863, %v1598, %v1601
          %v1604 = vunpack.c.l.s4 1934713408
          %v1605 = vunpack.c.0.s8 %v1604
          %v1606 = vperm.slane %v1600, %v1605
          %v1608 = vunpack.c.l.s4 1934713408
          %v1609 = vunpack.c.0.s8 %v1608
          %v1610 = vperm.slane %v1602, %v1609
          %v1611 = vrot.slane %v1606, 4
          %v1612 = vsel %vm863, 0, %v1611
          %v1613 = vrot.slane %v1610, 4
          %v1614 = vsel %vm863, 0, %v1613
          %v1615 = vsel %vm863, %v1587, %v1580
          %v1617 = vunpack.c.l.s4 1983009808
          %v1618 = vunpack.c.0.s8 %v1617
          %v1619 = vperm.slane %v1615, %v1618
          %v1620 = vrot.slane %v1588, 4
          %v1621 = vsel %vm863, %v1620, %v1586
          %v1623 = vunpack.c.l.s4 1983009808
          %v1624 = vunpack.c.0.s8 %v1623
          %v1625 = vperm.slane %v1621, %v1624
          %v1626 = vrot.slane %v1625, 4
          %v1627 = vsel %vm863, %v1626, %v1619
          %v1629 = vunpack.c.l.s4 1934713408
          %v1630 = vunpack.c.0.s8 %v1629
          %v1631 = vperm.slane %v1627, %v1630
          %v1632 = vrot.slane %v1631, 4
          %v1633 = vsel %vm863, 0, %v1632
          %v1634 = vsel %vm863, %v1613, %v1606
          %v1636 = vunpack.c.l.s4 1983009808
          %v1637 = vunpack.c.0.s8 %v1636
          %v1638 = vperm.slane %v1634, %v1637
          %v1639 = vrot.slane %v1614, 4
          %v1640 = vsel %vm863, %v1639, %v1612
          %v1642 = vunpack.c.l.s4 1983009808
          %v1643 = vunpack.c.0.s8 %v1642
          %v1644 = vperm.slane %v1640, %v1643
          %v1645 = vrot.slane %v1644, 4
          %v1646 = vsel %vm863, %v1645, %v1638
          %v1648 = vunpack.c.l.s4 1934713408
          %v1649 = vunpack.c.0.s8 %v1648
          %v1650 = vperm.slane %v1646, %v1649
          %v1651 = vrot.slane %v1650, 4
          %v1652 = vsel %vm863, 0, %v1651
          %v1655 = vpack.i.b16 %v1650, %v1631
          %v1656 = vshrl.u32 %v1631, 16
          %v1657 = vshrl.u32 %v1650, 16
          %v1658 = vpack.i.b16 %v1657, %v1656
          %v1661 = vpack.i.b16 %v1652, %v1633
          %v1662 = vshrl.u32 %v1633, 16
          %v1663 = vshrl.u32 %v1652, 16
          %v1664 = vpack.i.b16 %v1663, %v1662
          %v1665 = vpack.c.bf16 %v793, %v793
          %1667 = vrot.lane.b32.xlu0 %v1665, 120
          %v1668 = vpop.permute.xlu0 %1667
          %1669 = vrot.lane.b32.xlu0 %v1665, 112
          %v1670 = vpop.permute.xlu0 %1669
          %1671 = vrot.lane.b32.xlu0 %v1665, 104
          %v1672 = vpop.permute.xlu0 %1671
          %v1675 = vpack.i.b16 %v1668, %v1665
          %v1676 = vshrl.u32 %v1665, 16
          %v1677 = vshrl.u32 %v1668, 16
          %v1678 = vpack.i.b16 %v1677, %v1676
          %v1681 = vpack.i.b16 %v1672, %v1670
          %v1682 = vshrl.u32 %v1670, 16
          %v1683 = vshrl.u32 %v1672, 16
          %v1684 = vpack.i.b16 %v1683, %v1682
          %v1687 = vunpack.c.l.s4 1983009808
          %v1688 = vunpack.c.0.s8 %v1687
          %v1689 = vperm.slane %v1675, %v1688
          %v1692 = vunpack.c.l.s4 1983009808
          %v1693 = vunpack.c.0.s8 %v1692
          %v1694 = vperm.slane %v1681, %v1693
          %v1695 = vrot.slane %v1694, 4
          %v1696 = vsel %vm863, %v1695, %v1689
          %v1697 = vrot.slane %v1689, 4
          %v1698 = vsel %vm863, %v1694, %v1697
          %v1700 = vunpack.c.l.s4 1934713408
          %v1701 = vunpack.c.0.s8 %v1700
          %v1702 = vperm.slane %v1696, %v1701
          %v1704 = vunpack.c.l.s4 1934713408
          %v1705 = vunpack.c.0.s8 %v1704
          %v1706 = vperm.slane %v1698, %v1705
          %v1707 = vrot.slane %v1702, 4
          %v1708 = vsel %vm863, 0, %v1707
          %v1709 = vrot.slane %v1706, 4
          %v1710 = vsel %vm863, 0, %v1709
          %v1713 = vunpack.c.l.s4 1983009808
          %v1714 = vunpack.c.0.s8 %v1713
          %v1715 = vperm.slane %v1678, %v1714
          %v1718 = vunpack.c.l.s4 1983009808
          %v1719 = vunpack.c.0.s8 %v1718
          %v1720 = vperm.slane %v1684, %v1719
          %v1721 = vrot.slane %v1720, 4
          %v1722 = vsel %vm863, %v1721, %v1715
          %v1723 = vrot.slane %v1715, 4
          %v1724 = vsel %vm863, %v1720, %v1723
          %v1726 = vunpack.c.l.s4 1934713408
          %v1727 = vunpack.c.0.s8 %v1726
          %v1728 = vperm.slane %v1722, %v1727
          %v1730 = vunpack.c.l.s4 1934713408
          %v1731 = vunpack.c.0.s8 %v1730
          %v1732 = vperm.slane %v1724, %v1731
          %v1733 = vrot.slane %v1728, 4
          %v1734 = vsel %vm863, 0, %v1733
          %v1735 = vrot.slane %v1732, 4
          %v1736 = vsel %vm863, 0, %v1735
          %v1737 = vsel %vm863, %v1709, %v1702
          %v1739 = vunpack.c.l.s4 1983009808
          %v1740 = vunpack.c.0.s8 %v1739
          %v1741 = vperm.slane %v1737, %v1740
          %v1742 = vrot.slane %v1710, 4
          %v1743 = vsel %vm863, %v1742, %v1708
          %v1745 = vunpack.c.l.s4 1983009808
          %v1746 = vunpack.c.0.s8 %v1745
          %v1747 = vperm.slane %v1743, %v1746
          %v1748 = vrot.slane %v1747, 4
          %v1749 = vsel %vm863, %v1748, %v1741
          %v1751 = vunpack.c.l.s4 1934713408
          %v1752 = vunpack.c.0.s8 %v1751
          %v1753 = vperm.slane %v1749, %v1752
          %v1754 = vrot.slane %v1753, 4
          %v1755 = vsel %vm863, 0, %v1754
          %v1756 = vsel %vm863, %v1735, %v1728
          %v1758 = vunpack.c.l.s4 1983009808
          %v1759 = vunpack.c.0.s8 %v1758
          %v1760 = vperm.slane %v1756, %v1759
          %v1761 = vrot.slane %v1736, 4
          %v1762 = vsel %vm863, %v1761, %v1734
          %v1764 = vunpack.c.l.s4 1983009808
          %v1765 = vunpack.c.0.s8 %v1764
          %v1766 = vperm.slane %v1762, %v1765
          %v1767 = vrot.slane %v1766, 4
          %v1768 = vsel %vm863, %v1767, %v1760
          %v1770 = vunpack.c.l.s4 1934713408
          %v1771 = vunpack.c.0.s8 %v1770
          %v1772 = vperm.slane %v1768, %v1771
          %v1773 = vrot.slane %v1772, 4
          %v1774 = vsel %vm863, 0, %v1773
          %v1777 = vpack.i.b16 %v1772, %v1753
          %v1778 = vshrl.u32 %v1753, 16
          %v1779 = vshrl.u32 %v1772, 16
          %v1780 = vpack.i.b16 %v1779, %v1778
          %v1783 = vpack.i.b16 %v1774, %v1755
          %v1784 = vshrl.u32 %v1755, 16
          %v1785 = vshrl.u32 %v1774, 16
          %v1786 = vpack.i.b16 %v1785, %v1784
          %v1787 = vpack.c.bf16 %v824, %v824
          %1789 = vrot.lane.b32.xlu0 %v1787, 120
          %v1790 = vpop.permute.xlu0 %1789
          %1791 = vrot.lane.b32.xlu0 %v1787, 112
          %v1792 = vpop.permute.xlu0 %1791
          %1793 = vrot.lane.b32.xlu0 %v1787, 104
          %v1794 = vpop.permute.xlu0 %1793
          %v1797 = vpack.i.b16 %v1790, %v1787
          %v1798 = vshrl.u32 %v1787, 16
          %v1799 = vshrl.u32 %v1790, 16
          %v1800 = vpack.i.b16 %v1799, %v1798
          %v1803 = vpack.i.b16 %v1794, %v1792
          %v1804 = vshrl.u32 %v1792, 16
          %v1805 = vshrl.u32 %v1794, 16
          %v1806 = vpack.i.b16 %v1805, %v1804
          %v1809 = vunpack.c.l.s4 1983009808
          %v1810 = vunpack.c.0.s8 %v1809
          %v1811 = vperm.slane %v1797, %v1810
          %v1814 = vunpack.c.l.s4 1983009808
          %v1815 = vunpack.c.0.s8 %v1814
          %v1816 = vperm.slane %v1803, %v1815
          %v1817 = vrot.slane %v1816, 4
          %v1818 = vsel %vm863, %v1817, %v1811
          %v1819 = vrot.slane %v1811, 4
          %v1820 = vsel %vm863, %v1816, %v1819
          %v1822 = vunpack.c.l.s4 1934713408
          %v1823 = vunpack.c.0.s8 %v1822
          %v1824 = vperm.slane %v1818, %v1823
          %v1826 = vunpack.c.l.s4 1934713408
          %v1827 = vunpack.c.0.s8 %v1826
          %v1828 = vperm.slane %v1820, %v1827
          %v1829 = vrot.slane %v1824, 4
          %v1830 = vsel %vm863, 0, %v1829
          %v1831 = vrot.slane %v1828, 4
          %v1832 = vsel %vm863, 0, %v1831
          %v1835 = vunpack.c.l.s4 1983009808
          %v1836 = vunpack.c.0.s8 %v1835
          %v1837 = vperm.slane %v1800, %v1836
          %v1840 = vunpack.c.l.s4 1983009808
          %v1841 = vunpack.c.0.s8 %v1840
          %v1842 = vperm.slane %v1806, %v1841
          %v1843 = vrot.slane %v1842, 4
          %v1844 = vsel %vm863, %v1843, %v1837
          %v1845 = vrot.slane %v1837, 4
          %v1846 = vsel %vm863, %v1842, %v1845
          %v1848 = vunpack.c.l.s4 1934713408
          %v1849 = vunpack.c.0.s8 %v1848
          %v1850 = vperm.slane %v1844, %v1849
          %v1852 = vunpack.c.l.s4 1934713408
          %v1853 = vunpack.c.0.s8 %v1852
          %v1854 = vperm.slane %v1846, %v1853
          %v1855 = vrot.slane %v1850, 4
          %v1856 = vsel %vm863, 0, %v1855
          %v1857 = vrot.slane %v1854, 4
          %v1858 = vsel %vm863, 0, %v1857
          %v1859 = vsel %vm863, %v1831, %v1824
          %v1861 = vunpack.c.l.s4 1983009808
          %v1862 = vunpack.c.0.s8 %v1861
          %v1863 = vperm.slane %v1859, %v1862
          %v1864 = vrot.slane %v1832, 4
          %v1865 = vsel %vm863, %v1864, %v1830
          %v1867 = vunpack.c.l.s4 1983009808
          %v1868 = vunpack.c.0.s8 %v1867
          %v1869 = vperm.slane %v1865, %v1868
          %v1870 = vrot.slane %v1869, 4
          %v1871 = vsel %vm863, %v1870, %v1863
          %v1873 = vunpack.c.l.s4 1934713408
          %v1874 = vunpack.c.0.s8 %v1873
          %v1875 = vperm.slane %v1871, %v1874
          %v1876 = vrot.slane %v1875, 4
          %v1877 = vsel %vm863, 0, %v1876
          %v1878 = vsel %vm863, %v1857, %v1850
          %v1880 = vunpack.c.l.s4 1983009808
          %v1881 = vunpack.c.0.s8 %v1880
          %v1882 = vperm.slane %v1878, %v1881
          %v1883 = vrot.slane %v1858, 4
          %v1884 = vsel %vm863, %v1883, %v1856
          %v1886 = vunpack.c.l.s4 1983009808
          %v1887 = vunpack.c.0.s8 %v1886
          %v1888 = vperm.slane %v1884, %v1887
          %v1889 = vrot.slane %v1888, 4
          %v1890 = vsel %vm863, %v1889, %v1882
          %v1892 = vunpack.c.l.s4 1934713408
          %v1893 = vunpack.c.0.s8 %v1892
          %v1894 = vperm.slane %v1890, %v1893
          %v1895 = vrot.slane %v1894, 4
          %v1896 = vsel %vm863, 0, %v1895
          %v1899 = vpack.i.b16 %v1894, %v1875
          %v1900 = vshrl.u32 %v1875, 16
          %v1901 = vshrl.u32 %v1894, 16
          %v1902 = vpack.i.b16 %v1901, %v1900
          %v1905 = vpack.i.b16 %v1896, %v1877
          %v1906 = vshrl.u32 %v1877, 16
          %v1907 = vshrl.u32 %v1896, 16
          %v1908 = vpack.i.b16 %v1907, %v1906
          %v1910 = vsel %vm1199, %v1655, 0
          %v1913 = vsel %vm1199, %v1777, 0
          %1915 = vmatpush.bf16.xpose.msra.mxu0 0
          %1916 = vmatpush.bf16.xpose.msra.mxu0 0
          %1917 = vmatpush.bf16.xpose.msra.mxu0 0
          %1918 = vmatpush.bf16.xpose.msra.mxu0 0
          %1919 = vmatpush.bf16.xpose.msra.mxu0 0
          %1920 = vmatpush.bf16.xpose.msra.mxu0 0
          %1921 = vmatpush.bf16.xpose.msra.mxu0 0
          %1922 = vmatpush.bf16.xpose.msra.mxu0 %v1913
          %1923 = vmatmul.bf16.gmra.mxu0 %v1910
          %v1924 = vpop.f32.mrf.mxu0
          %v1925 = vadd.f32 %v831, %v1924
          %v1926 = vpop.f32.mrf.mxu0
          %1927 = vdwg.mxu0
          %v1929 = vsel %vm1199, %v1658, 0
          %v1932 = vsel %vm1199, %v1780, 0
          %1934 = vmatpush.bf16.xpose.msra.mxu0 0
          %1935 = vmatpush.bf16.xpose.msra.mxu0 0
          %1936 = vmatpush.bf16.xpose.msra.mxu0 0
          %1937 = vmatpush.bf16.xpose.msra.mxu0 0
          %1938 = vmatpush.bf16.xpose.msra.mxu0 0
          %1939 = vmatpush.bf16.xpose.msra.mxu0 0
          %1940 = vmatpush.bf16.xpose.msra.mxu0 0
          %1941 = vmatpush.bf16.xpose.msra.mxu0 %v1932
          %1942 = vmatmul.bf16.gmra.mxu0 %v1929
          %v1943 = vpop.f32.mrf.mxu0
          %v1944 = vadd.f32 %v831, %v1943
          %v1945 = vpop.f32.mrf.mxu0
          %1946 = vdwg.mxu0
          %v1948 = vsel %vm1199, %v1661, 0
          %v1951 = vsel %vm1199, %v1783, 0
          %1953 = vmatpush.bf16.xpose.msra.mxu0 0
          %1954 = vmatpush.bf16.xpose.msra.mxu0 0
          %1955 = vmatpush.bf16.xpose.msra.mxu0 0
          %1956 = vmatpush.bf16.xpose.msra.mxu0 0
          %1957 = vmatpush.bf16.xpose.msra.mxu0 0
          %1958 = vmatpush.bf16.xpose.msra.mxu0 0
          %1959 = vmatpush.bf16.xpose.msra.mxu0 0
          %1960 = vmatpush.bf16.xpose.msra.mxu0 %v1951
          %1961 = vmatmul.bf16.gmra.mxu0 %v1948
          %v1962 = vpop.f32.mrf.mxu0
          %v1963 = vadd.f32 %v831, %v1962
          %v1964 = vpop.f32.mrf.mxu0
          %1965 = vdwg.mxu0
          %v1967 = vsel %vm1199, %v1664, 0
          %v1970 = vsel %vm1199, %v1786, 0
          %1972 = vmatpush.bf16.xpose.msra.mxu0 0
          %1973 = vmatpush.bf16.xpose.msra.mxu0 0
          %1974 = vmatpush.bf16.xpose.msra.mxu0 0
          %1975 = vmatpush.bf16.xpose.msra.mxu0 0
          %1976 = vmatpush.bf16.xpose.msra.mxu0 0
          %1977 = vmatpush.bf16.xpose.msra.mxu0 0
          %1978 = vmatpush.bf16.xpose.msra.mxu0 0
          %1979 = vmatpush.bf16.xpose.msra.mxu0 %v1970
          %1980 = vmatmul.bf16.gmra.mxu0 %v1967
          %v1981 = vpop.f32.mrf.mxu0
          %v1982 = vadd.f32 %v831, %v1981
          %v1983 = vpop.f32.mrf.mxu0
          %1984 = vdwg.mxu0
          %v1985 = vsel %vm1199, %v1925, -inf
          %1986 = vmax.xlane.f32.xlu0 %v1985
          %v1987 = vpop.xlane.xlu0 %1986
          %v1988 = vsel %vm1199, %v1944, -inf
          %1989 = vmax.xlane.f32.xlu0 %v1988
          %v1990 = vpop.xlane.xlu0 %1989
          %v1991 = vsel %vm1199, %v1963, -inf
          %1992 = vmax.xlane.f32.xlu0 %v1991
          %v1993 = vpop.xlane.xlu0 %1992
          %v1994 = vsel %vm1199, %v1982, -inf
          %1995 = vmax.xlane.f32.xlu0 %v1994
          %v1996 = vpop.xlane.xlu0 %1995
          %v1997 = vsub.f32 %v1925, %v1987
          %v1998 = vsub.f32 %v1944, %v1990
          %v1999 = vsub.f32 %v1963, %v1993
          %v2000 = vsub.f32 %v1982, %v1996
          %v2001 = vmul.f32 %v1997, 1.442695
          %v2002 = vpow.pop %v2001
          %v2003 = vmul.f32 %v1998, 1.442695
          %v2004 = vpow.pop %v2003
          %v2005 = vmul.f32 %v1999, 1.442695
          %v2006 = vpow.pop %v2005
          %v2007 = vmul.f32 %v2000, 1.442695
          %v2008 = vpow.pop %v2007
          %v2009 = vsel %vm1199, %v2002, 0.0
          %2010 = vadd.xlane.f32.xlu0 %v2009
          %v2011 = vpop.xlane.xlu0 %2010
          %v2012 = vsel %vm1199, %v2004, 0.0
          %2013 = vadd.xlane.f32.xlu0 %v2012
          %v2014 = vpop.xlane.xlu0 %2013
          %v2015 = vsel %vm1199, %v2006, 0.0
          %2016 = vadd.xlane.f32.xlu0 %v2015
          %v2017 = vpop.xlane.xlu0 %2016
          %v2018 = vsel %vm1199, %v2008, 0.0
          %2019 = vadd.xlane.f32.xlu0 %v2018
          %v2020 = vpop.xlane.xlu0 %2019
          %v2021 = vrcp.pop %v2011
          %v2022 = vrcp.pop %v2014
          %v2023 = vrcp.pop %v2017
          %v2024 = vrcp.pop %v2020
          %v2025 = vmul.f32 %v2002, %v2021
          %v2026 = vmul.f32 %v2004, %v2022
          %v2027 = vmul.f32 %v2006, %v2023
          %v2028 = vmul.f32 %v2008, %v2024
          %v2029 = vpack.c.bf16 %v2025, %v2025
          %v2030 = vpack.c.bf16 %v2026, %v2026
          %v2031 = vpack.c.bf16 %v2027, %v2027
          %v2032 = vpack.c.bf16 %v2028, %v2028
          %v2034 = vsel %vm1199, %v2029, 0
          %v2037 = vsel %vm1327, %v1899, 0
          %2039 = vmatpush.bf16.msra.mxu0 0
          %2040 = vmatpush.bf16.msra.mxu0 0
          %2041 = vmatpush.bf16.msra.mxu0 0
          %2042 = vmatpush.bf16.msra.mxu0 0
          %2043 = vmatpush.bf16.msra.mxu0 0
          %2044 = vmatpush.bf16.msra.mxu0 0
          %2045 = vmatpush.bf16.msra.mxu0 0
          %2046 = vmatpush.bf16.msra.mxu0 %v2037
          %2047 = vmatmul.bf16.gmra.mxu0 %v2034
          %v2048 = vpop.f32.mrf.mxu0
          %v2049 = vadd.f32 0.0, %v2048
          %v2050 = vpop.f32.mrf.mxu0
          %2051 = vdwg.mxu0
          %v2053 = vsel %vm1199, %v2030, 0
          %v2056 = vsel %vm1327, %v1902, 0
          %2058 = vmatpush.bf16.msra.mxu0 0
          %2059 = vmatpush.bf16.msra.mxu0 0
          %2060 = vmatpush.bf16.msra.mxu0 0
          %2061 = vmatpush.bf16.msra.mxu0 0
          %2062 = vmatpush.bf16.msra.mxu0 0
          %2063 = vmatpush.bf16.msra.mxu0 0
          %2064 = vmatpush.bf16.msra.mxu0 0
          %2065 = vmatpush.bf16.msra.mxu0 %v2056
          %2066 = vmatmul.bf16.gmra.mxu0 %v2053
          %v2067 = vpop.f32.mrf.mxu0
          %v2068 = vadd.f32 0.0, %v2067
          %v2069 = vpop.f32.mrf.mxu0
          %2070 = vdwg.mxu0
          %v2072 = vsel %vm1199, %v2031, 0
          %v2075 = vsel %vm1327, %v1905, 0
          %2077 = vmatpush.bf16.msra.mxu0 0
          %2078 = vmatpush.bf16.msra.mxu0 0
          %2079 = vmatpush.bf16.msra.mxu0 0
          %2080 = vmatpush.bf16.msra.mxu0 0
          %2081 = vmatpush.bf16.msra.mxu0 0
          %2082 = vmatpush.bf16.msra.mxu0 0
          %2083 = vmatpush.bf16.msra.mxu0 0
          %2084 = vmatpush.bf16.msra.mxu0 %v2075
          %2085 = vmatmul.bf16.gmra.mxu0 %v2072
          %v2086 = vpop.f32.mrf.mxu0
          %v2087 = vadd.f32 0.0, %v2086
          %v2088 = vpop.f32.mrf.mxu0
          %2089 = vdwg.mxu0
          %v2091 = vsel %vm1199, %v2032, 0
          %v2094 = vsel %vm1327, %v1908, 0
          %2096 = vmatpush.bf16.msra.mxu0 0
          %2097 = vmatpush.bf16.msra.mxu0 0
          %2098 = vmatpush.bf16.msra.mxu0 0
          %2099 = vmatpush.bf16.msra.mxu0 0
          %2100 = vmatpush.bf16.msra.mxu0 0
          %2101 = vmatpush.bf16.msra.mxu0 0
          %2102 = vmatpush.bf16.msra.mxu0 0
          %2103 = vmatpush.bf16.msra.mxu0 %v2094
          %2104 = vmatmul.bf16.gmra.mxu0 %v2091
          %v2105 = vpop.f32.mrf.mxu0
          %v2106 = vadd.f32 0.0, %v2105
          %v2107 = vpop.f32.mrf.mxu0
          %2108 = vdwg.mxu0
          %v2109 = vpack.c.bf16 %v2049, %v2049
          %v2110 = vpack.c.bf16 %v2068, %v2068
          %v2111 = vpack.c.bf16 %v2087, %v2087
          %v2112 = vpack.c.bf16 %v2106, %v2106
          %v2115 = vpack.i.b16 %v2110, %v2109
          %v2116 = vshrl.u32 %v2109, 16
          %v2117 = vshrl.u32 %v2110, 16
          %v2118 = vpack.i.b16 %v2117, %v2116
          %v2121 = vpack.i.b16 %v2112, %v2111
          %v2122 = vshrl.u32 %v2111, 16
          %v2123 = vshrl.u32 %v2112, 16
          %v2124 = vpack.i.b16 %v2123, %v2122
          %v2127 = vunpack.c.l.s4 1983009808
          %v2128 = vunpack.c.0.s8 %v2127
          %v2129 = vperm.slane %v2115, %v2128
          %v2132 = vunpack.c.l.s4 1983009808
          %v2133 = vunpack.c.0.s8 %v2132
          %v2134 = vperm.slane %v2121, %v2133
          %v2135 = vrot.slane %v2134, 4
          %v2136 = vsel %vm863, %v2135, %v2129
          %v2137 = vrot.slane %v2129, 4
          %v2138 = vsel %vm863, %v2134, %v2137
          %v2140 = vunpack.c.l.s4 1934713408
          %v2141 = vunpack.c.0.s8 %v2140
          %v2142 = vperm.slane %v2136, %v2141
          %v2144 = vunpack.c.l.s4 1934713408
          %v2145 = vunpack.c.0.s8 %v2144
          %v2146 = vperm.slane %v2138, %v2145
          %v2147 = vrot.slane %v2142, 4
          %v2148 = vsel %vm863, 0, %v2147
          %v2149 = vrot.slane %v2146, 4
          %v2150 = vsel %vm863, 0, %v2149
          %v2153 = vunpack.c.l.s4 1983009808
          %v2154 = vunpack.c.0.s8 %v2153
          %v2155 = vperm.slane %v2118, %v2154
          %v2158 = vunpack.c.l.s4 1983009808
          %v2159 = vunpack.c.0.s8 %v2158
          %v2160 = vperm.slane %v2124, %v2159
          %v2161 = vrot.slane %v2160, 4
          %v2162 = vsel %vm863, %v2161, %v2155
          %v2163 = vrot.slane %v2155, 4
          %v2164 = vsel %vm863, %v2160, %v2163
          %v2166 = vunpack.c.l.s4 1934713408
          %v2167 = vunpack.c.0.s8 %v2166
          %v2168 = vperm.slane %v2162, %v2167
          %v2170 = vunpack.c.l.s4 1934713408
          %v2171 = vunpack.c.0.s8 %v2170
          %v2172 = vperm.slane %v2164, %v2171
          %v2173 = vrot.slane %v2168, 4
          %v2174 = vsel %vm863, 0, %v2173
          %v2175 = vrot.slane %v2172, 4
          %v2176 = vsel %vm863, 0, %v2175
          %v2177 = vsel %vm863, %v2149, %v2142
          %v2179 = vunpack.c.l.s4 1983009808
          %v2180 = vunpack.c.0.s8 %v2179
          %v2181 = vperm.slane %v2177, %v2180
          %v2182 = vrot.slane %v2150, 4
          %v2183 = vsel %vm863, %v2182, %v2148
          %v2185 = vunpack.c.l.s4 1983009808
          %v2186 = vunpack.c.0.s8 %v2185
          %v2187 = vperm.slane %v2183, %v2186
          %v2188 = vrot.slane %v2187, 4
          %v2189 = vsel %vm863, %v2188, %v2181
          %v2191 = vunpack.c.l.s4 1934713408
          %v2192 = vunpack.c.0.s8 %v2191
          %v2193 = vperm.slane %v2189, %v2192
          %v2194 = vrot.slane %v2193, 4
          %v2195 = vsel %vm863, 0, %v2194
          %v2196 = vsel %vm863, %v2175, %v2168
          %v2198 = vunpack.c.l.s4 1983009808
          %v2199 = vunpack.c.0.s8 %v2198
          %v2200 = vperm.slane %v2196, %v2199
          %v2201 = vrot.slane %v2176, 4
          %v2202 = vsel %vm863, %v2201, %v2174
          %v2204 = vunpack.c.l.s4 1983009808
          %v2205 = vunpack.c.0.s8 %v2204
          %v2206 = vperm.slane %v2202, %v2205
          %v2207 = vrot.slane %v2206, 4
          %v2208 = vsel %vm863, %v2207, %v2200
          %v2210 = vunpack.c.l.s4 1934713408
          %v2211 = vunpack.c.0.s8 %v2210
          %v2212 = vperm.slane %v2208, %v2211
          %v2213 = vrot.slane %v2212, 4
          %v2214 = vsel %vm863, 0, %v2213
          %v2217 = vpack.i.b16 %v2212, %v2193
          %v2218 = vshrl.u32 %v2193, 16
          %v2219 = vshrl.u32 %v2212, 16
          %v2220 = vpack.i.b16 %v2219, %v2218
          %v2223 = vpack.i.b16 %v2214, %v2195
          %v2224 = vshrl.u32 %v2195, 16
          %v2225 = vshrl.u32 %v2214, 16
          %v2226 = vpack.i.b16 %v2225, %v2224
          %v2227 = vunpack.c.l.b16 %v2220
          %v2228 = vpack.c.b16 %v2227, %v2227
          %2229 = vrot.lane.b32.xlu0 %v2228, 8
          %v2230 = vpop.permute.xlu0 %2229
          %v2231 = vunpack.c.l.b16 %v2223
          %v2232 = vpack.c.b16 %v2231, %v2231
          %2233 = vrot.lane.b32.xlu0 %v2232, 16
          %v2234 = vpop.permute.xlu0 %2233
          %v2235 = vunpack.c.l.b16 %v2226
          %v2236 = vpack.c.b16 %v2235, %v2235
          %2237 = vrot.lane.b32.xlu0 %v2236, 24
          %v2238 = vpop.permute.xlu0 %2237
          %v2241 = vsel %vm1199, %v2217, %v2230
          %v2243 = vsel %vm1534, %v2241, %v2234
          %v2245 = vsel %vm1537, %v2243, %v2238
          %s2247 = scalar_lea.vmem [#allocation3], 4
          %2248 = vst.msk [vmem:[%s2247] sm:$0xf] %vm1541, %v2245
        $region84: #{tpu_custom_call.1} parent=67 // pred_fallthru
          _
        %p2249 = scmp.ne.s32.totalorder %s759, 0
        // Predicated region
        $region85: #{tpu_custom_call.1} parent=67 // pred_check
          %p2250 = pneg %p2249
        $region86: #{tpu_custom_call.1} parent=67 // pred_check_branch
          %2252 = sbr.rel (%p2250) target = $region88
        $region87: #{tpu_custom_call.1} parent=67 // pred_region
          %v2253 = vld [vmem:[%s599] sm:$0xff]
          %v2254 = vld [vmem:[%s599 + $0x8] sm:$0xff]
          %v2255 = vld [vmem:[%s599 + $0x10] sm:$0xff]
          %v2256 = vld [vmem:[%s599 + $0x18] sm:$0xff]
          %v2257 = vsel %vm655, %v2253, 0.0
          %2258 = vadd.xlane.f32.xlu0 %v2257
          %v2259 = vpop.xlane.xlu0 %2258
          %v2260 = vsel %vm655, %v2254, 0.0
          %2261 = vadd.xlane.f32.xlu0 %v2260
          %v2262 = vpop.xlane.xlu0 %2261
          %v2263 = vsel %vm655, %v2255, 0.0
          %2264 = vadd.xlane.f32.xlu0 %v2263
          %v2265 = vpop.xlane.xlu0 %2264
          %v2266 = vsel %vm655, %v2256, 0.0
          %2267 = vadd.xlane.f32.xlu0 %v2266
          %v2268 = vpop.xlane.xlu0 %2267
          %v2269 = vmul.f32 %v2259, %v668
          %v2270 = vmul.f32 %v2262, %v668
          %v2271 = vmul.f32 %v2265, %v668
          %v2272 = vmul.f32 %v2268, %v668
          %v2273 = vsub.f32 %v2253, %v2269
          %v2274 = vsub.f32 %v2254, %v2270
          %v2275 = vsub.f32 %v2255, %v2271
          %v2276 = vsub.f32 %v2256, %v2272
          %v2277 = vmul.f32 %v2273, %v2273
          %v2278 = vmul.f32 %v2274, %v2274
          %v2279 = vmul.f32 %v2275, %v2275
          %v2280 = vmul.f32 %v2276, %v2276
          %v2281 = vsel %vm655, %v2277, 0.0
          %2282 = vadd.xlane.f32.xlu0 %v2281
          %v2283 = vpop.xlane.xlu0 %2282
          %v2284 = vsel %vm655, %v2278, 0.0
          %2285 = vadd.xlane.f32.xlu0 %v2284
          %v2286 = vpop.xlane.xlu0 %2285
          %v2287 = vsel %vm655, %v2279, 0.0
          %2288 = vadd.xlane.f32.xlu0 %v2287
          %v2289 = vpop.xlane.xlu0 %2288
          %v2290 = vsel %vm655, %v2280, 0.0
          %2291 = vadd.xlane.f32.xlu0 %v2290
          %v2292 = vpop.xlane.xlu0 %2291
          %v2293 = vmul.f32 %v2283, %v668
          %v2294 = vmul.f32 %v2286, %v668
          %v2295 = vmul.f32 %v2289, %v668
          %v2296 = vmul.f32 %v2292, %v668
          %v2297 = vadd.f32 %v2293, 1e-05
          %v2298 = vadd.f32 %v2294, 1e-05
          %v2299 = vadd.f32 %v2295, 1e-05
          %v2300 = vadd.f32 %v2296, 1e-05
          %v2301 = vrsqrt.pop %v2297
          %v2302 = vmul.f32 %v2301, %v2297
          %v2303 = vmul.f32 %v2302, %v2301
          %v2304 = vmul.f32 0.5, %v2303
          %v2305 = vsub.f32 1.5, %v2304
          %v2306 = vmul.f32 %v2301, %v2305
          %vm2307 = vweird.f32 %v2297
          %vm2308 = vweird.f32 %v2301
          %vm2309 = vmor %vm2307, %vm2308
          %v2310 = vsel %vm2309, %v2301, %v2306
          %v2311 = vrsqrt.pop %v2298
          %v2312 = vmul.f32 %v2311, %v2298
          %v2313 = vmul.f32 %v2312, %v2311
          %v2314 = vmul.f32 0.5, %v2313
          %v2315 = vsub.f32 1.5, %v2314
          %v2316 = vmul.f32 %v2311, %v2315
          %vm2317 = vweird.f32 %v2298
          %vm2318 = vweird.f32 %v2311
          %vm2319 = vmor %vm2317, %vm2318
          %v2320 = vsel %vm2319, %v2311, %v2316
          %v2321 = vrsqrt.pop %v2299
          %v2322 = vmul.f32 %v2321, %v2299
          %v2323 = vmul.f32 %v2322, %v2321
          %v2324 = vmul.f32 0.5, %v2323
          %v2325 = vsub.f32 1.5, %v2324
          %v2326 = vmul.f32 %v2321, %v2325
          %vm2327 = vweird.f32 %v2299
          %vm2328 = vweird.f32 %v2321
          %vm2329 = vmor %vm2327, %vm2328
          %v2330 = vsel %vm2329, %v2321, %v2326
          %v2331 = vrsqrt.pop %v2300
          %v2332 = vmul.f32 %v2331, %v2300
          %v2333 = vmul.f32 %v2332, %v2331
          %v2334 = vmul.f32 0.5, %v2333
          %v2335 = vsub.f32 1.5, %v2334
          %v2336 = vmul.f32 %v2331, %v2335
          %vm2337 = vweird.f32 %v2300
          %vm2338 = vweird.f32 %v2331
          %vm2339 = vmor %vm2337, %vm2338
          %v2340 = vsel %vm2339, %v2331, %v2336
          %v2341 = vmul.f32 %v2273, %v2310
          %v2342 = vmul.f32 %v2274, %v2320
          %v2343 = vmul.f32 %v2275, %v2330
          %v2344 = vmul.f32 %v2276, %v2340
          %v2345 = vperm.slane %v649, 2
          %v2346 = vmul.f32 %v2341, %v2345
          %v2347 = vmul.f32 %v2342, %v2345
          %v2348 = vmul.f32 %v2343, %v2345
          %v2349 = vmul.f32 %v2344, %v2345
          %v2350 = vperm.slane %v649, 3
          %v2351 = vadd.f32 %v2346, %v2350
          %v2352 = vadd.f32 %v2347, %v2350
          %v2353 = vadd.f32 %v2348, %v2350
          %v2354 = vadd.f32 %v2349, %v2350
          %v2355 = vpack.c.bf16 %v2352, %v2351
          %v2356 = vpack.c.bf16 %v2354, %v2353
          %v2357 = vld [vmem:[%s610] sm:$0xf]
          %v2358 = vld [vmem:[%s610 + $0x4] sm:$0xf]
          %v2359 = vld [vmem:[%s610 + $0x8] sm:$0xf]
          %v2360 = vld [vmem:[%s610 + $0xc] sm:$0xf]
          %v2361 = vperm.slane %v649, 5
          %v2366 = vunpack.c.l.b16 %v2357
          %v2367 = vunpack.c.l.b16 %v2358
          %v2368 = vunpack.c.l.b16 %v2359
          %v2369 = vunpack.c.l.b16 %v2360
          %v2370 = vpack.c.b16 %v2367, %v2366
          %v2371 = vpack.c.b16 %v2369, %v2368
          %v2375 = vsel %vm655, %v2355, 0
          %v2378 = vsel %vm655, %v2356, 0
          %2380 = vmatpush.bf16.msra.mxu0 0
          %2381 = vmatpush.bf16.msra.mxu0 0
          %2382 = vmatpush.bf16.msra.mxu0 0
          %2383 = vmatpush.bf16.msra.mxu0 0
          %2384 = vmatpush.bf16.msra.mxu0 0
          %2385 = vmatpush.bf16.msra.mxu0 0
          %2386 = vmatpush.bf16.msra.mxu0 %v2371
          %2387 = vmatpush.bf16.msra.mxu0 %v2370
          %2388 = vmatmul.bf16.gmra.mxu0 %v2375
          %v2389 = vpop.f32.mrf.mxu0
          %v2390 = vadd.f32 %v2361, %v2389
          %v2391 = vpop.f32.mrf.mxu0
          %v2392 = vadd.f32 %v2361, %v2391
          %2393 = vmatmul.bf16.gmra.mxu0 %v2378
          %v2394 = vpop.f32.mrf.mxu0
          %v2395 = vadd.f32 %v2361, %v2394
          %v2396 = vpop.f32.mrf.mxu0
          %v2397 = vadd.f32 %v2361, %v2396
          %2398 = vdwg.mxu0
          %v2399 = vld [vmem:[%s615] sm:$0xf]
          %v2400 = vld [vmem:[%s615 + $0x4] sm:$0xf]
          %v2401 = vld [vmem:[%s615 + $0x8] sm:$0xf]
          %v2402 = vld [vmem:[%s615 + $0xc] sm:$0xf]
          %v2403 = vperm.slane %v649, 6
          %v2408 = vunpack.c.l.b16 %v2399
          %v2409 = vunpack.c.l.b16 %v2400
          %v2410 = vunpack.c.l.b16 %v2401
          %v2411 = vunpack.c.l.b16 %v2402
          %v2412 = vpack.c.b16 %v2409, %v2408
          %v2413 = vpack.c.b16 %v2411, %v2410
          %2416 = vmatpush.bf16.msra.mxu0 0
          %2417 = vmatpush.bf16.msra.mxu0 0
          %2418 = vmatpush.bf16.msra.mxu0 0
          %2419 = vmatpush.bf16.msra.mxu0 0
          %2420 = vmatpush.bf16.msra.mxu0 0
          %2421 = vmatpush.bf16.msra.mxu0 0
          %2422 = vmatpush.bf16.msra.mxu0 %v2413
          %2423 = vmatpush.bf16.msra.mxu0 %v2412
          %2424 = vmatmul.bf16.gmra.mxu0 %v2375
          %v2425 = vpop.f32.mrf.mxu0
          %v2426 = vadd.f32 %v2403, %v2425
          %v2427 = vpop.f32.mrf.mxu0
          %v2428 = vadd.f32 %v2403, %v2427
          %2429 = vmatmul.bf16.gmra.mxu0 %v2378
          %v2430 = vpop.f32.mrf.mxu0
          %v2431 = vadd.f32 %v2403, %v2430
          %v2432 = vpop.f32.mrf.mxu0
          %v2433 = vadd.f32 %v2403, %v2432
          %2434 = vdwg.mxu0
          %v2435 = vpack.c.bf16 %v744, %v744
          %2437 = vrot.lane.b32.xlu0 %v2435, 120
          %v2438 = vpop.permute.xlu0 %2437
          %2439 = vrot.lane.b32.xlu0 %v2435, 112
          %v2440 = vpop.permute.xlu0 %2439
          %2441 = vrot.lane.b32.xlu0 %v2435, 104
          %v2442 = vpop.permute.xlu0 %2441
          %v2445 = vpack.i.b16 %v2438, %v2435
          %v2446 = vshrl.u32 %v2435, 16
          %v2447 = vshrl.u32 %v2438, 16
          %v2448 = vpack.i.b16 %v2447, %v2446
          %v2451 = vpack.i.b16 %v2442, %v2440
          %v2452 = vshrl.u32 %v2440, 16
          %v2453 = vshrl.u32 %v2442, 16
          %v2454 = vpack.i.b16 %v2453, %v2452
          %v2457 = vunpack.c.l.s4 1983009808
          %v2458 = vunpack.c.0.s8 %v2457
          %v2459 = vperm.slane %v2445, %v2458
          %v2462 = vunpack.c.l.s4 1983009808
          %v2463 = vunpack.c.0.s8 %v2462
          %v2464 = vperm.slane %v2451, %v2463
          %v2465 = vrot.slane %v2464, 4
          %vm2466 = vcmask 1047556
          %v2467 = vsel %vm2466, %v2465, %v2459
          %v2468 = vrot.slane %v2459, 4
          %v2469 = vsel %vm2466, %v2464, %v2468
          %v2471 = vunpack.c.l.s4 1934713408
          %v2472 = vunpack.c.0.s8 %v2471
          %v2473 = vperm.slane %v2467, %v2472
          %v2475 = vunpack.c.l.s4 1934713408
          %v2476 = vunpack.c.0.s8 %v2475
          %v2477 = vperm.slane %v2469, %v2476
          %v2478 = vrot.slane %v2473, 4
          %v2479 = vsel %vm2466, 0, %v2478
          %v2480 = vrot.slane %v2477, 4
          %v2481 = vsel %vm2466, 0, %v2480
          %v2484 = vunpack.c.l.s4 1983009808
          %v2485 = vunpack.c.0.s8 %v2484
          %v2486 = vperm.slane %v2448, %v2485
          %v2489 = vunpack.c.l.s4 1983009808
          %v2490 = vunpack.c.0.s8 %v2489
          %v2491 = vperm.slane %v2454, %v2490
          %v2492 = vrot.slane %v2491, 4
          %v2493 = vsel %vm2466, %v2492, %v2486
          %v2494 = vrot.slane %v2486, 4
          %v2495 = vsel %vm2466, %v2491, %v2494
          %v2497 = vunpack.c.l.s4 1934713408
          %v2498 = vunpack.c.0.s8 %v2497
          %v2499 = vperm.slane %v2493, %v2498
          %v2501 = vunpack.c.l.s4 1934713408
          %v2502 = vunpack.c.0.s8 %v2501
          %v2503 = vperm.slane %v2495, %v2502
          %v2504 = vrot.slane %v2499, 4
          %v2505 = vsel %vm2466, 0, %v2504
          %v2506 = vrot.slane %v2503, 4
          %v2507 = vsel %vm2466, 0, %v2506
          %v2508 = vsel %vm2466, %v2480, %v2473
          %v2510 = vunpack.c.l.s4 1983009808
          %v2511 = vunpack.c.0.s8 %v2510
          %v2512 = vperm.slane %v2508, %v2511
          %v2513 = vrot.slane %v2481, 4
          %v2514 = vsel %vm2466, %v2513, %v2479
          %v2516 = vunpack.c.l.s4 1983009808
          %v2517 = vunpack.c.0.s8 %v2516
          %v2518 = vperm.slane %v2514, %v2517
          %v2519 = vrot.slane %v2518, 4
          %v2520 = vsel %vm2466, %v2519, %v2512
          %v2522 = vunpack.c.l.s4 1934713408
          %v2523 = vunpack.c.0.s8 %v2522
          %v2524 = vperm.slane %v2520, %v2523
          %v2525 = vrot.slane %v2524, 4
          %v2526 = vsel %vm2466, 0, %v2525
          %v2527 = vsel %vm2466, %v2506, %v2499
          %v2529 = vunpack.c.l.s4 1983009808
          %v2530 = vunpack.c.0.s8 %v2529
          %v2531 = vperm.slane %v2527, %v2530
          %v2532 = vrot.slane %v2507, 4
          %v2533 = vsel %vm2466, %v2532, %v2505
          %v2535 = vunpack.c.l.s4 1983009808
          %v2536 = vunpack.c.0.s8 %v2535
          %v2537 = vperm.slane %v2533, %v2536
          %v2538 = vrot.slane %v2537, 4
          %v2539 = vsel %vm2466, %v2538, %v2531
          %v2541 = vunpack.c.l.s4 1934713408
          %v2542 = vunpack.c.0.s8 %v2541
          %v2543 = vperm.slane %v2539, %v2542
          %v2544 = vrot.slane %v2543, 4
          %v2545 = vsel %vm2466, 0, %v2544
          %v2548 = vpack.i.b16 %v2543, %v2524
          %v2549 = vshrl.u32 %v2524, 16
          %v2550 = vshrl.u32 %v2543, 16
          %v2551 = vpack.i.b16 %v2550, %v2549
          %v2554 = vpack.i.b16 %v2545, %v2526
          %v2555 = vshrl.u32 %v2526, 16
          %v2556 = vshrl.u32 %v2545, 16
          %v2557 = vpack.i.b16 %v2556, %v2555
          %v2558 = vpack.c.bf16 %v2390, %v2390
          %v2559 = vpack.c.bf16 %v2392, %v2392
          %2562 = vrot.lane.b32.xlu0 %v2558, 120
          %v2563 = vpop.permute.xlu0 %2562
          %2564 = vrot.lane.b32.xlu0 %v2559, 120
          %v2565 = vpop.permute.xlu0 %2564
          %2566 = vrot.lane.b32.xlu0 %v2558, 112
          %v2567 = vpop.permute.xlu0 %2566
          %2568 = vrot.lane.b32.xlu0 %v2559, 112
          %v2569 = vpop.permute.xlu0 %2568
          %2570 = vrot.lane.b32.xlu0 %v2558, 104
          %v2571 = vpop.permute.xlu0 %2570
          %2572 = vrot.lane.b32.xlu0 %v2559, 104
          %v2573 = vpop.permute.xlu0 %2572
          %v2576 = vpack.i.b16 %v2563, %v2558
          %v2577 = vshrl.u32 %v2558, 16
          %v2578 = vshrl.u32 %v2563, 16
          %v2579 = vpack.i.b16 %v2578, %v2577
          %v2582 = vpack.i.b16 %v2571, %v2567
          %v2583 = vshrl.u32 %v2567, 16
          %v2584 = vshrl.u32 %v2571, 16
          %v2585 = vpack.i.b16 %v2584, %v2583
          %v2588 = vpack.i.b16 %v2565, %v2559
          %v2589 = vshrl.u32 %v2559, 16
          %v2590 = vshrl.u32 %v2565, 16
          %v2591 = vpack.i.b16 %v2590, %v2589
          %v2594 = vpack.i.b16 %v2573, %v2569
          %v2595 = vshrl.u32 %v2569, 16
          %v2596 = vshrl.u32 %v2573, 16
          %v2597 = vpack.i.b16 %v2596, %v2595
          %v2600 = vunpack.c.l.s4 1983009808
          %v2601 = vunpack.c.0.s8 %v2600
          %v2602 = vperm.slane %v2576, %v2601
          %v2605 = vunpack.c.l.s4 1983009808
          %v2606 = vunpack.c.0.s8 %v2605
          %v2607 = vperm.slane %v2582, %v2606
          %v2608 = vrot.slane %v2607, 4
          %v2609 = vsel %vm2466, %v2608, %v2602
          %v2610 = vrot.slane %v2602, 4
          %v2611 = vsel %vm2466, %v2607, %v2610
          %v2613 = vunpack.c.l.s4 1934713408
          %v2614 = vunpack.c.0.s8 %v2613
          %v2615 = vperm.slane %v2609, %v2614
          %v2617 = vunpack.c.l.s4 1934713408
          %v2618 = vunpack.c.0.s8 %v2617
          %v2619 = vperm.slane %v2611, %v2618
          %v2620 = vrot.slane %v2615, 4
          %v2621 = vsel %vm2466, 0, %v2620
          %v2622 = vrot.slane %v2619, 4
          %v2623 = vsel %vm2466, 0, %v2622
          %v2626 = vunpack.c.l.s4 1983009808
          %v2627 = vunpack.c.0.s8 %v2626
          %v2628 = vperm.slane %v2579, %v2627
          %v2631 = vunpack.c.l.s4 1983009808
          %v2632 = vunpack.c.0.s8 %v2631
          %v2633 = vperm.slane %v2585, %v2632
          %v2634 = vrot.slane %v2633, 4
          %v2635 = vsel %vm2466, %v2634, %v2628
          %v2636 = vrot.slane %v2628, 4
          %v2637 = vsel %vm2466, %v2633, %v2636
          %v2639 = vunpack.c.l.s4 1934713408
          %v2640 = vunpack.c.0.s8 %v2639
          %v2641 = vperm.slane %v2635, %v2640
          %v2643 = vunpack.c.l.s4 1934713408
          %v2644 = vunpack.c.0.s8 %v2643
          %v2645 = vperm.slane %v2637, %v2644
          %v2646 = vrot.slane %v2641, 4
          %v2647 = vsel %vm2466, 0, %v2646
          %v2648 = vrot.slane %v2645, 4
          %v2649 = vsel %vm2466, 0, %v2648
          %v2652 = vunpack.c.l.s4 1983009808
          %v2653 = vunpack.c.0.s8 %v2652
          %v2654 = vperm.slane %v2588, %v2653
          %v2657 = vunpack.c.l.s4 1983009808
          %v2658 = vunpack.c.0.s8 %v2657
          %v2659 = vperm.slane %v2594, %v2658
          %v2660 = vrot.slane %v2659, 4
          %v2661 = vsel %vm2466, %v2660, %v2654
          %v2662 = vrot.slane %v2654, 4
          %v2663 = vsel %vm2466, %v2659, %v2662
          %v2665 = vunpack.c.l.s4 1934713408
          %v2666 = vunpack.c.0.s8 %v2665
          %v2667 = vperm.slane %v2661, %v2666
          %v2669 = vunpack.c.l.s4 1934713408
          %v2670 = vunpack.c.0.s8 %v2669
          %v2671 = vperm.slane %v2663, %v2670
          %v2672 = vrot.slane %v2667, 4
          %v2673 = vsel %vm2466, 0, %v2672
          %v2674 = vrot.slane %v2671, 4
          %v2675 = vsel %vm2466, 0, %v2674
          %v2678 = vunpack.c.l.s4 1983009808
          %v2679 = vunpack.c.0.s8 %v2678
          %v2680 = vperm.slane %v2591, %v2679
          %v2683 = vunpack.c.l.s4 1983009808
          %v2684 = vunpack.c.0.s8 %v2683
          %v2685 = vperm.slane %v2597, %v2684
          %v2686 = vrot.slane %v2685, 4
          %v2687 = vsel %vm2466, %v2686, %v2680
          %v2688 = vrot.slane %v2680, 4
          %v2689 = vsel %vm2466, %v2685, %v2688
          %v2691 = vunpack.c.l.s4 1934713408
          %v2692 = vunpack.c.0.s8 %v2691
          %v2693 = vperm.slane %v2687, %v2692
          %v2695 = vunpack.c.l.s4 1934713408
          %v2696 = vunpack.c.0.s8 %v2695
          %v2697 = vperm.slane %v2689, %v2696
          %v2698 = vrot.slane %v2693, 4
          %v2699 = vsel %vm2466, 0, %v2698
          %v2700 = vrot.slane %v2697, 4
          %v2701 = vsel %vm2466, 0, %v2700
          %v2702 = vsel %vm2466, %v2622, %v2615
          %v2704 = vunpack.c.l.s4 1983009808
          %v2705 = vunpack.c.0.s8 %v2704
          %v2706 = vperm.slane %v2702, %v2705
          %v2707 = vrot.slane %v2623, 4
          %v2708 = vsel %vm2466, %v2707, %v2621
          %v2710 = vunpack.c.l.s4 1983009808
          %v2711 = vunpack.c.0.s8 %v2710
          %v2712 = vperm.slane %v2708, %v2711
          %v2713 = vrot.slane %v2712, 4
          %v2714 = vsel %vm2466, %v2713, %v2706
          %v2716 = vunpack.c.l.s4 1934713408
          %v2717 = vunpack.c.0.s8 %v2716
          %v2718 = vperm.slane %v2714, %v2717
          %v2719 = vrot.slane %v2718, 4
          %v2720 = vsel %vm2466, 0, %v2719
          %v2721 = vsel %vm2466, %v2648, %v2641
          %v2723 = vunpack.c.l.s4 1983009808
          %v2724 = vunpack.c.0.s8 %v2723
          %v2725 = vperm.slane %v2721, %v2724
          %v2726 = vrot.slane %v2649, 4
          %v2727 = vsel %vm2466, %v2726, %v2647
          %v2729 = vunpack.c.l.s4 1983009808
          %v2730 = vunpack.c.0.s8 %v2729
          %v2731 = vperm.slane %v2727, %v2730
          %v2732 = vrot.slane %v2731, 4
          %v2733 = vsel %vm2466, %v2732, %v2725
          %v2735 = vunpack.c.l.s4 1934713408
          %v2736 = vunpack.c.0.s8 %v2735
          %v2737 = vperm.slane %v2733, %v2736
          %v2738 = vrot.slane %v2737, 4
          %v2739 = vsel %vm2466, 0, %v2738
          %v2740 = vsel %vm2466, %v2674, %v2667
          %v2742 = vunpack.c.l.s4 1983009808
          %v2743 = vunpack.c.0.s8 %v2742
          %v2744 = vperm.slane %v2740, %v2743
          %v2745 = vrot.slane %v2675, 4
          %v2746 = vsel %vm2466, %v2745, %v2673
          %v2748 = vunpack.c.l.s4 1983009808
          %v2749 = vunpack.c.0.s8 %v2748
          %v2750 = vperm.slane %v2746, %v2749
          %v2751 = vrot.slane %v2750, 4
          %v2752 = vsel %vm2466, %v2751, %v2744
          %v2754 = vunpack.c.l.s4 1934713408
          %v2755 = vunpack.c.0.s8 %v2754
          %v2756 = vperm.slane %v2752, %v2755
          %v2757 = vrot.slane %v2756, 4
          %v2758 = vsel %vm2466, 0, %v2757
          %v2759 = vsel %vm2466, %v2700, %v2693
          %v2761 = vunpack.c.l.s4 1983009808
          %v2762 = vunpack.c.0.s8 %v2761
          %v2763 = vperm.slane %v2759, %v2762
          %v2764 = vrot.slane %v2701, 4
          %v2765 = vsel %vm2466, %v2764, %v2699
          %v2767 = vunpack.c.l.s4 1983009808
          %v2768 = vunpack.c.0.s8 %v2767
          %v2769 = vperm.slane %v2765, %v2768
          %v2770 = vrot.slane %v2769, 4
          %v2771 = vsel %vm2466, %v2770, %v2763
          %v2773 = vunpack.c.l.s4 1934713408
          %v2774 = vunpack.c.0.s8 %v2773
          %v2775 = vperm.slane %v2771, %v2774
          %v2776 = vrot.slane %v2775, 4
          %v2777 = vsel %vm2466, 0, %v2776
          %v2780 = vpack.i.b16 %v2737, %v2718
          %v2781 = vshrl.u32 %v2718, 16
          %v2782 = vshrl.u32 %v2737, 16
          %v2783 = vpack.i.b16 %v2782, %v2781
          %v2786 = vpack.i.b16 %v2739, %v2720
          %v2787 = vshrl.u32 %v2720, 16
          %v2788 = vshrl.u32 %v2739, 16
          %v2789 = vpack.i.b16 %v2788, %v2787
          %v2792 = vpack.i.b16 %v2775, %v2756
          %v2793 = vshrl.u32 %v2756, 16
          %v2794 = vshrl.u32 %v2775, 16
          %v2795 = vpack.i.b16 %v2794, %v2793
          %v2798 = vpack.i.b16 %v2777, %v2758
          %v2799 = vshrl.u32 %v2758, 16
          %v2800 = vshrl.u32 %v2777, 16
          %v2801 = vpack.i.b16 %v2800, %v2799
          %v2802 = vpack.c.bf16 %v2426, %v2426
          %v2803 = vpack.c.bf16 %v2428, %v2428
          %2806 = vrot.lane.b32.xlu0 %v2802, 120
          %v2807 = vpop.permute.xlu0 %2806
          %2808 = vrot.lane.b32.xlu0 %v2803, 120
          %v2809 = vpop.permute.xlu0 %2808
          %2810 = vrot.lane.b32.xlu0 %v2802, 112
          %v2811 = vpop.permute.xlu0 %2810
          %2812 = vrot.lane.b32.xlu0 %v2803, 112
          %v2813 = vpop.permute.xlu0 %2812
          %2814 = vrot.lane.b32.xlu0 %v2802, 104
          %v2815 = vpop.permute.xlu0 %2814
          %2816 = vrot.lane.b32.xlu0 %v2803, 104
          %v2817 = vpop.permute.xlu0 %2816
          %v2820 = vpack.i.b16 %v2807, %v2802
          %v2821 = vshrl.u32 %v2802, 16
          %v2822 = vshrl.u32 %v2807, 16
          %v2823 = vpack.i.b16 %v2822, %v2821
          %v2826 = vpack.i.b16 %v2815, %v2811
          %v2827 = vshrl.u32 %v2811, 16
          %v2828 = vshrl.u32 %v2815, 16
          %v2829 = vpack.i.b16 %v2828, %v2827
          %v2832 = vpack.i.b16 %v2809, %v2803
          %v2833 = vshrl.u32 %v2803, 16
          %v2834 = vshrl.u32 %v2809, 16
          %v2835 = vpack.i.b16 %v2834, %v2833
          %v2838 = vpack.i.b16 %v2817, %v2813
          %v2839 = vshrl.u32 %v2813, 16
          %v2840 = vshrl.u32 %v2817, 16
          %v2841 = vpack.i.b16 %v2840, %v2839
          %v2844 = vunpack.c.l.s4 1983009808
          %v2845 = vunpack.c.0.s8 %v2844
          %v2846 = vperm.slane %v2820, %v2845
          %v2849 = vunpack.c.l.s4 1983009808
          %v2850 = vunpack.c.0.s8 %v2849
          %v2851 = vperm.slane %v2826, %v2850
          %v2852 = vrot.slane %v2851, 4
          %v2853 = vsel %vm2466, %v2852, %v2846
          %v2854 = vrot.slane %v2846, 4
          %v2855 = vsel %vm2466, %v2851, %v2854
          %v2857 = vunpack.c.l.s4 1934713408
          %v2858 = vunpack.c.0.s8 %v2857
          %v2859 = vperm.slane %v2853, %v2858
          %v2861 = vunpack.c.l.s4 1934713408
          %v2862 = vunpack.c.0.s8 %v2861
          %v2863 = vperm.slane %v2855, %v2862
          %v2864 = vrot.slane %v2859, 4
          %v2865 = vsel %vm2466, 0, %v2864
          %v2866 = vrot.slane %v2863, 4
          %v2867 = vsel %vm2466, 0, %v2866
          %v2870 = vunpack.c.l.s4 1983009808
          %v2871 = vunpack.c.0.s8 %v2870
          %v2872 = vperm.slane %v2823, %v2871
          %v2875 = vunpack.c.l.s4 1983009808
          %v2876 = vunpack.c.0.s8 %v2875
          %v2877 = vperm.slane %v2829, %v2876
          %v2878 = vrot.slane %v2877, 4
          %v2879 = vsel %vm2466, %v2878, %v2872
          %v2880 = vrot.slane %v2872, 4
          %v2881 = vsel %vm2466, %v2877, %v2880
          %v2883 = vunpack.c.l.s4 1934713408
          %v2884 = vunpack.c.0.s8 %v2883
          %v2885 = vperm.slane %v2879, %v2884
          %v2887 = vunpack.c.l.s4 1934713408
          %v2888 = vunpack.c.0.s8 %v2887
          %v2889 = vperm.slane %v2881, %v2888
          %v2890 = vrot.slane %v2885, 4
          %v2891 = vsel %vm2466, 0, %v2890
          %v2892 = vrot.slane %v2889, 4
          %v2893 = vsel %vm2466, 0, %v2892
          %v2896 = vunpack.c.l.s4 1983009808
          %v2897 = vunpack.c.0.s8 %v2896
          %v2898 = vperm.slane %v2832, %v2897
          %v2901 = vunpack.c.l.s4 1983009808
          %v2902 = vunpack.c.0.s8 %v2901
          %v2903 = vperm.slane %v2838, %v2902
          %v2904 = vrot.slane %v2903, 4
          %v2905 = vsel %vm2466, %v2904, %v2898
          %v2906 = vrot.slane %v2898, 4
          %v2907 = vsel %vm2466, %v2903, %v2906
          %v2909 = vunpack.c.l.s4 1934713408
          %v2910 = vunpack.c.0.s8 %v2909
          %v2911 = vperm.slane %v2905, %v2910
          %v2913 = vunpack.c.l.s4 1934713408
          %v2914 = vunpack.c.0.s8 %v2913
          %v2915 = vperm.slane %v2907, %v2914
          %v2916 = vrot.slane %v2911, 4
          %v2917 = vsel %vm2466, 0, %v2916
          %v2918 = vrot.slane %v2915, 4
          %v2919 = vsel %vm2466, 0, %v2918
          %v2922 = vunpack.c.l.s4 1983009808
          %v2923 = vunpack.c.0.s8 %v2922
          %v2924 = vperm.slane %v2835, %v2923
          %v2927 = vunpack.c.l.s4 1983009808
          %v2928 = vunpack.c.0.s8 %v2927
          %v2929 = vperm.slane %v2841, %v2928
          %v2930 = vrot.slane %v2929, 4
          %v2931 = vsel %vm2466, %v2930, %v2924
          %v2932 = vrot.slane %v2924, 4
          %v2933 = vsel %vm2466, %v2929, %v2932
          %v2935 = vunpack.c.l.s4 1934713408
          %v2936 = vunpack.c.0.s8 %v2935
          %v2937 = vperm.slane %v2931, %v2936
          %v2939 = vunpack.c.l.s4 1934713408
          %v2940 = vunpack.c.0.s8 %v2939
          %v2941 = vperm.slane %v2933, %v2940
          %v2942 = vrot.slane %v2937, 4
          %v2943 = vsel %vm2466, 0, %v2942
          %v2944 = vrot.slane %v2941, 4
          %v2945 = vsel %vm2466, 0, %v2944
          %v2946 = vsel %vm2466, %v2866, %v2859
          %v2948 = vunpack.c.l.s4 1983009808
          %v2949 = vunpack.c.0.s8 %v2948
          %v2950 = vperm.slane %v2946, %v2949
          %v2951 = vrot.slane %v2867, 4
          %v2952 = vsel %vm2466, %v2951, %v2865
          %v2954 = vunpack.c.l.s4 1983009808
          %v2955 = vunpack.c.0.s8 %v2954
          %v2956 = vperm.slane %v2952, %v2955
          %v2957 = vrot.slane %v2956, 4
          %v2958 = vsel %vm2466, %v2957, %v2950
          %v2960 = vunpack.c.l.s4 1934713408
          %v2961 = vunpack.c.0.s8 %v2960
          %v2962 = vperm.slane %v2958, %v2961
          %v2963 = vrot.slane %v2962, 4
          %v2964 = vsel %vm2466, 0, %v2963
          %v2965 = vsel %vm2466, %v2892, %v2885
          %v2967 = vunpack.c.l.s4 1983009808
          %v2968 = vunpack.c.0.s8 %v2967
          %v2969 = vperm.slane %v2965, %v2968
          %v2970 = vrot.slane %v2893, 4
          %v2971 = vsel %vm2466, %v2970, %v2891
          %v2973 = vunpack.c.l.s4 1983009808
          %v2974 = vunpack.c.0.s8 %v2973
          %v2975 = vperm.slane %v2971, %v2974
          %v2976 = vrot.slane %v2975, 4
          %v2977 = vsel %vm2466, %v2976, %v2969
          %v2979 = vunpack.c.l.s4 1934713408
          %v2980 = vunpack.c.0.s8 %v2979
          %v2981 = vperm.slane %v2977, %v2980
          %v2982 = vrot.slane %v2981, 4
          %v2983 = vsel %vm2466, 0, %v2982
          %v2984 = vsel %vm2466, %v2918, %v2911
          %v2986 = vunpack.c.l.s4 1983009808
          %v2987 = vunpack.c.0.s8 %v2986
          %v2988 = vperm.slane %v2984, %v2987
          %v2989 = vrot.slane %v2919, 4
          %v2990 = vsel %vm2466, %v2989, %v2917
          %v2992 = vunpack.c.l.s4 1983009808
          %v2993 = vunpack.c.0.s8 %v2992
          %v2994 = vperm.slane %v2990, %v2993
          %v2995 = vrot.slane %v2994, 4
          %v2996 = vsel %vm2466, %v2995, %v2988
          %v2998 = vunpack.c.l.s4 1934713408
          %v2999 = vunpack.c.0.s8 %v2998
          %v3000 = vperm.slane %v2996, %v2999
          %v3001 = vrot.slane %v3000, 4
          %v3002 = vsel %vm2466, 0, %v3001
          %v3003 = vsel %vm2466, %v2944, %v2937
          %v3005 = vunpack.c.l.s4 1983009808
          %v3006 = vunpack.c.0.s8 %v3005
          %v3007 = vperm.slane %v3003, %v3006
          %v3008 = vrot.slane %v2945, 4
          %v3009 = vsel %vm2466, %v3008, %v2943
          %v3011 = vunpack.c.l.s4 1983009808
          %v3012 = vunpack.c.0.s8 %v3011
          %v3013 = vperm.slane %v3009, %v3012
          %v3014 = vrot.slane %v3013, 4
          %v3015 = vsel %vm2466, %v3014, %v3007
          %v3017 = vunpack.c.l.s4 1934713408
          %v3018 = vunpack.c.0.s8 %v3017
          %v3019 = vperm.slane %v3015, %v3018
          %v3020 = vrot.slane %v3019, 4
          %v3021 = vsel %vm2466, 0, %v3020
          %v3024 = vpack.i.b16 %v2981, %v2962
          %v3025 = vshrl.u32 %v2962, 16
          %v3026 = vshrl.u32 %v2981, 16
          %v3027 = vpack.i.b16 %v3026, %v3025
          %v3030 = vpack.i.b16 %v2983, %v2964
          %v3031 = vshrl.u32 %v2964, 16
          %v3032 = vshrl.u32 %v2983, 16
          %v3033 = vpack.i.b16 %v3032, %v3031
          %v3036 = vpack.i.b16 %v3019, %v3000
          %v3037 = vshrl.u32 %v3000, 16
          %v3038 = vshrl.u32 %v3019, 16
          %v3039 = vpack.i.b16 %v3038, %v3037
          %v3042 = vpack.i.b16 %v3021, %v3002
          %v3043 = vshrl.u32 %v3002, 16
          %v3044 = vshrl.u32 %v3021, 16
          %v3045 = vpack.i.b16 %v3044, %v3043
          %v3046 = vunpack.c.l.b16 %v2780
          %v3047 = vunpack.c.l.b16 %v2792
          %v3048 = vpack.c.b16 %v3047, %v3046
          %vm3049 = vcmask 64512
          %v3051 = vsel %vm3049, %v2548, 0
          %v3054 = vsel %vm3049, %v3048, 0
          %3056 = vmatpush.bf16.xpose.msra.mxu0 0
          %3057 = vmatpush.bf16.xpose.msra.mxu0 0
          %3058 = vmatpush.bf16.xpose.msra.mxu0 0
          %3059 = vmatpush.bf16.xpose.msra.mxu0 0
          %3060 = vmatpush.bf16.xpose.msra.mxu0 0
          %3061 = vmatpush.bf16.xpose.msra.mxu0 0
          %3062 = vmatpush.bf16.xpose.msra.mxu0 0
          %3063 = vmatpush.bf16.xpose.msra.mxu0 %v3054
          %3064 = vmatmul.bf16.gmra.mxu0 %v3051
          %v3065 = vpop.f32.mrf.mxu0
          %v3066 = vadd.f32 0.0, %v3065
          %v3067 = vpop.f32.mrf.mxu0
          %3068 = vdwg.mxu0
          %v3069 = vunpack.c.l.b16 %v2783
          %v3070 = vunpack.c.l.b16 %v2795
          %v3071 = vpack.c.b16 %v3070, %v3069
          %v3073 = vsel %vm3049, %v2551, 0
          %v3076 = vsel %vm3049, %v3071, 0
          %3078 = vmatpush.bf16.xpose.msra.mxu0 0
          %3079 = vmatpush.bf16.xpose.msra.mxu0 0
          %3080 = vmatpush.bf16.xpose.msra.mxu0 0
          %3081 = vmatpush.bf16.xpose.msra.mxu0 0
          %3082 = vmatpush.bf16.xpose.msra.mxu0 0
          %3083 = vmatpush.bf16.xpose.msra.mxu0 0
          %3084 = vmatpush.bf16.xpose.msra.mxu0 0
          %3085 = vmatpush.bf16.xpose.msra.mxu0 %v3076
          %3086 = vmatmul.bf16.gmra.mxu0 %v3073
          %v3087 = vpop.f32.mrf.mxu0
          %v3088 = vadd.f32 0.0, %v3087
          %v3089 = vpop.f32.mrf.mxu0
          %3090 = vdwg.mxu0
          %v3091 = vunpack.c.l.b16 %v2786
          %v3092 = vunpack.c.l.b16 %v2798
          %v3093 = vpack.c.b16 %v3092, %v3091
          %v3095 = vsel %vm3049, %v2554, 0
          %v3098 = vsel %vm3049, %v3093, 0
          %3100 = vmatpush.bf16.xpose.msra.mxu0 0
          %3101 = vmatpush.bf16.xpose.msra.mxu0 0
          %3102 = vmatpush.bf16.xpose.msra.mxu0 0
          %3103 = vmatpush.bf16.xpose.msra.mxu0 0
          %3104 = vmatpush.bf16.xpose.msra.mxu0 0
          %3105 = vmatpush.bf16.xpose.msra.mxu0 0
          %3106 = vmatpush.bf16.xpose.msra.mxu0 0
          %3107 = vmatpush.bf16.xpose.msra.mxu0 %v3098
          %3108 = vmatmul.bf16.gmra.mxu0 %v3095
          %v3109 = vpop.f32.mrf.mxu0
          %v3110 = vadd.f32 0.0, %v3109
          %v3111 = vpop.f32.mrf.mxu0
          %3112 = vdwg.mxu0
          %v3113 = vunpack.c.l.b16 %v2789
          %v3114 = vunpack.c.l.b16 %v2801
          %v3115 = vpack.c.b16 %v3114, %v3113
          %v3117 = vsel %vm3049, %v2557, 0
          %v3120 = vsel %vm3049, %v3115, 0
          %3122 = vmatpush.bf16.xpose.msra.mxu0 0
          %3123 = vmatpush.bf16.xpose.msra.mxu0 0
          %3124 = vmatpush.bf16.xpose.msra.mxu0 0
          %3125 = vmatpush.bf16.xpose.msra.mxu0 0
          %3126 = vmatpush.bf16.xpose.msra.mxu0 0
          %3127 = vmatpush.bf16.xpose.msra.mxu0 0
          %3128 = vmatpush.bf16.xpose.msra.mxu0 0
          %3129 = vmatpush.bf16.xpose.msra.mxu0 %v3120
          %3130 = vmatmul.bf16.gmra.mxu0 %v3117
          %v3131 = vpop.f32.mrf.mxu0
          %v3132 = vadd.f32 0.0, %v3131
          %v3133 = vpop.f32.mrf.mxu0
          %3134 = vdwg.mxu0
          %vm3135 = vcmask 130048
          %v3136 = vsel %vm3135, %v3066, -inf
          %3137 = vmax.xlane.f32.xlu0 %v3136
          %v3138 = vpop.xlane.xlu0 %3137
          %v3139 = vsel %vm3135, %v3088, -inf
          %3140 = vmax.xlane.f32.xlu0 %v3139
          %v3141 = vpop.xlane.xlu0 %3140
          %v3142 = vsel %vm3135, %v3110, -inf
          %3143 = vmax.xlane.f32.xlu0 %v3142
          %v3144 = vpop.xlane.xlu0 %3143
          %v3145 = vsel %vm3135, %v3132, -inf
          %3146 = vmax.xlane.f32.xlu0 %v3145
          %v3147 = vpop.xlane.xlu0 %3146
          %v3148 = vsub.f32 %v3066, %v3138
          %v3149 = vsub.f32 %v3088, %v3141
          %v3150 = vsub.f32 %v3110, %v3144
          %v3151 = vsub.f32 %v3132, %v3147
          %v3152 = vmul.f32 %v3148, 1.442695
          %v3153 = vpow.pop %v3152
          %v3154 = vmul.f32 %v3149, 1.442695
          %v3155 = vpow.pop %v3154
          %v3156 = vmul.f32 %v3150, 1.442695
          %v3157 = vpow.pop %v3156
          %v3158 = vmul.f32 %v3151, 1.442695
          %v3159 = vpow.pop %v3158
          %v3160 = vsel %vm3135, %v3153, 0.0
          %3161 = vadd.xlane.f32.xlu0 %v3160
          %v3162 = vpop.xlane.xlu0 %3161
          %v3163 = vsel %vm3135, %v3155, 0.0
          %3164 = vadd.xlane.f32.xlu0 %v3163
          %v3165 = vpop.xlane.xlu0 %3164
          %v3166 = vsel %vm3135, %v3157, 0.0
          %3167 = vadd.xlane.f32.xlu0 %v3166
          %v3168 = vpop.xlane.xlu0 %3167
          %v3169 = vsel %vm3135, %v3159, 0.0
          %3170 = vadd.xlane.f32.xlu0 %v3169
          %v3171 = vpop.xlane.xlu0 %3170
          %v3172 = vrcp.pop %v3162
          %v3173 = vrcp.pop %v3165
          %v3174 = vrcp.pop %v3168
          %v3175 = vrcp.pop %v3171
          %v3176 = vmul.f32 %v3153, %v3172
          %v3177 = vmul.f32 %v3155, %v3173
          %v3178 = vmul.f32 %v3157, %v3174
          %v3179 = vmul.f32 %v3159, %v3175
          %v3180 = vpack.c.bf16 %v3176, %v3176
          %v3181 = vpack.c.bf16 %v3177, %v3177
          %v3182 = vpack.c.bf16 %v3178, %v3178
          %v3183 = vpack.c.bf16 %v3179, %v3179
          %v3184 = vunpack.c.l.b16 %v3024
          %v3185 = vunpack.c.l.b16 %v3036
          %v3186 = vpack.c.b16 %v3185, %v3184
          %v3189 = vsel %vm3135, %v3180, 0
          %3191 = vmatpush.bf16.msra.mxu0 0
          %3192 = vmatpush.bf16.msra.mxu0 0
          %3193 = vmatpush.bf16.msra.mxu0 0
          %3194 = vmatpush.bf16.msra.mxu0 0
          %3195 = vmatpush.bf16.msra.mxu0 0
          %3196 = vmatpush.bf16.msra.mxu0 0
          %3197 = vmatpush.bf16.msra.mxu0 0
          %3198 = vmatpush.bf16.msra.mxu0 %v3186
          %3199 = vmatmul.bf16.gmra.mxu0 %v3189
          %v3200 = vpop.f32.mrf.mxu0
          %v3201 = vadd.f32 0.0, %v3200
          %v3202 = vpop.f32.mrf.mxu0
          %3203 = vdwg.mxu0
          %v3204 = vunpack.c.l.b16 %v3027
          %v3205 = vunpack.c.l.b16 %v3039
          %v3206 = vpack.c.b16 %v3205, %v3204
          %v3209 = vsel %vm3135, %v3181, 0
          %3211 = vmatpush.bf16.msra.mxu0 0
          %3212 = vmatpush.bf16.msra.mxu0 0
          %3213 = vmatpush.bf16.msra.mxu0 0
          %3214 = vmatpush.bf16.msra.mxu0 0
          %3215 = vmatpush.bf16.msra.mxu0 0
          %3216 = vmatpush.bf16.msra.mxu0 0
          %3217 = vmatpush.bf16.msra.mxu0 0
          %3218 = vmatpush.bf16.msra.mxu0 %v3206
          %3219 = vmatmul.bf16.gmra.mxu0 %v3209
          %v3220 = vpop.f32.mrf.mxu0
          %v3221 = vadd.f32 0.0, %v3220
          %v3222 = vpop.f32.mrf.mxu0
          %3223 = vdwg.mxu0
          %v3224 = vunpack.c.l.b16 %v3030
          %v3225 = vunpack.c.l.b16 %v3042
          %v3226 = vpack.c.b16 %v3225, %v3224
          %v3229 = vsel %vm3135, %v3182, 0
          %3231 = vmatpush.bf16.msra.mxu0 0
          %3232 = vmatpush.bf16.msra.mxu0 0
          %3233 = vmatpush.bf16.msra.mxu0 0
          %3234 = vmatpush.bf16.msra.mxu0 0
          %3235 = vmatpush.bf16.msra.mxu0 0
          %3236 = vmatpush.bf16.msra.mxu0 0
          %3237 = vmatpush.bf16.msra.mxu0 0
          %3238 = vmatpush.bf16.msra.mxu0 %v3226
          %3239 = vmatmul.bf16.gmra.mxu0 %v3229
          %v3240 = vpop.f32.mrf.mxu0
          %v3241 = vadd.f32 0.0, %v3240
          %v3242 = vpop.f32.mrf.mxu0
          %3243 = vdwg.mxu0
          %v3244 = vunpack.c.l.b16 %v3033
          %v3245 = vunpack.c.l.b16 %v3045
          %v3246 = vpack.c.b16 %v3245, %v3244
          %v3249 = vsel %vm3135, %v3183, 0
          %3251 = vmatpush.bf16.msra.mxu0 0
          %3252 = vmatpush.bf16.msra.mxu0 0
          %3253 = vmatpush.bf16.msra.mxu0 0
          %3254 = vmatpush.bf16.msra.mxu0 0
          %3255 = vmatpush.bf16.msra.mxu0 0
          %3256 = vmatpush.bf16.msra.mxu0 0
          %3257 = vmatpush.bf16.msra.mxu0 0
          %3258 = vmatpush.bf16.msra.mxu0 %v3246
          %3259 = vmatmul.bf16.gmra.mxu0 %v3249
          %v3260 = vpop.f32.mrf.mxu0
          %v3261 = vadd.f32 0.0, %v3260
          %v3262 = vpop.f32.mrf.mxu0
          %3263 = vdwg.mxu0
          %v3264 = vpack.c.bf16 %v3201, %v3201
          %v3265 = vpack.c.bf16 %v3221, %v3221
          %v3266 = vpack.c.bf16 %v3241, %v3241
          %v3267 = vpack.c.bf16 %v3261, %v3261
          %v3270 = vpack.i.b16 %v3265, %v3264
          %v3271 = vshrl.u32 %v3264, 16
          %v3272 = vshrl.u32 %v3265, 16
          %v3273 = vpack.i.b16 %v3272, %v3271
          %v3276 = vpack.i.b16 %v3267, %v3266
          %v3277 = vshrl.u32 %v3266, 16
          %v3278 = vshrl.u32 %v3267, 16
          %v3279 = vpack.i.b16 %v3278, %v3277
          %v3282 = vunpack.c.l.s4 1983009808
          %v3283 = vunpack.c.0.s8 %v3282
          %v3284 = vperm.slane %v3270, %v3283
          %v3287 = vunpack.c.l.s4 1983009808
          %v3288 = vunpack.c.0.s8 %v3287
          %v3289 = vperm.slane %v3276, %v3288
          %v3290 = vrot.slane %v3289, 4
          %v3291 = vsel %vm2466, %v3290, %v3284
          %v3292 = vrot.slane %v3284, 4
          %v3293 = vsel %vm2466, %v3289, %v3292
          %v3295 = vunpack.c.l.s4 1934713408
          %v3296 = vunpack.c.0.s8 %v3295
          %v3297 = vperm.slane %v3291, %v3296
          %v3299 = vunpack.c.l.s4 1934713408
          %v3300 = vunpack.c.0.s8 %v3299
          %v3301 = vperm.slane %v3293, %v3300
          %v3302 = vrot.slane %v3297, 4
          %v3303 = vsel %vm2466, 0, %v3302
          %v3304 = vrot.slane %v3301, 4
          %v3305 = vsel %vm2466, 0, %v3304
          %v3308 = vunpack.c.l.s4 1983009808
          %v3309 = vunpack.c.0.s8 %v3308
          %v3310 = vperm.slane %v3273, %v3309
          %v3313 = vunpack.c.l.s4 1983009808
          %v3314 = vunpack.c.0.s8 %v3313
          %v3315 = vperm.slane %v3279, %v3314
          %v3316 = vrot.slane %v3315, 4
          %v3317 = vsel %vm2466, %v3316, %v3310
          %v3318 = vrot.slane %v3310, 4
          %v3319 = vsel %vm2466, %v3315, %v3318
          %v3321 = vunpack.c.l.s4 1934713408
          %v3322 = vunpack.c.0.s8 %v3321
          %v3323 = vperm.slane %v3317, %v3322
          %v3325 = vunpack.c.l.s4 1934713408
          %v3326 = vunpack.c.0.s8 %v3325
          %v3327 = vperm.slane %v3319, %v3326
          %v3328 = vrot.slane %v3323, 4
          %v3329 = vsel %vm2466, 0, %v3328
          %v3330 = vrot.slane %v3327, 4
          %v3331 = vsel %vm2466, 0, %v3330
          %v3332 = vsel %vm2466, %v3304, %v3297
          %v3334 = vunpack.c.l.s4 1983009808
          %v3335 = vunpack.c.0.s8 %v3334
          %v3336 = vperm.slane %v3332, %v3335
          %v3337 = vrot.slane %v3305, 4
          %v3338 = vsel %vm2466, %v3337, %v3303
          %v3340 = vunpack.c.l.s4 1983009808
          %v3341 = vunpack.c.0.s8 %v3340
          %v3342 = vperm.slane %v3338, %v3341
          %v3343 = vrot.slane %v3342, 4
          %v3344 = vsel %vm2466, %v3343, %v3336
          %v3346 = vunpack.c.l.s4 1934713408
          %v3347 = vunpack.c.0.s8 %v3346
          %v3348 = vperm.slane %v3344, %v3347
          %v3349 = vrot.slane %v3348, 4
          %v3350 = vsel %vm2466, 0, %v3349
          %v3351 = vsel %vm2466, %v3330, %v3323
          %v3353 = vunpack.c.l.s4 1983009808
          %v3354 = vunpack.c.0.s8 %v3353
          %v3355 = vperm.slane %v3351, %v3354
          %v3356 = vrot.slane %v3331, 4
          %v3357 = vsel %vm2466, %v3356, %v3329
          %v3359 = vunpack.c.l.s4 1983009808
          %v3360 = vunpack.c.0.s8 %v3359
          %v3361 = vperm.slane %v3357, %v3360
          %v3362 = vrot.slane %v3361, 4
          %v3363 = vsel %vm2466, %v3362, %v3355
          %v3365 = vunpack.c.l.s4 1934713408
          %v3366 = vunpack.c.0.s8 %v3365
          %v3367 = vperm.slane %v3363, %v3366
          %v3368 = vrot.slane %v3367, 4
          %v3369 = vsel %vm2466, 0, %v3368
          %v3372 = vpack.i.b16 %v3367, %v3348
          %v3373 = vshrl.u32 %v3348, 16
          %v3374 = vshrl.u32 %v3367, 16
          %v3375 = vpack.i.b16 %v3374, %v3373
          %v3378 = vpack.i.b16 %v3369, %v3350
          %v3379 = vshrl.u32 %v3350, 16
          %v3380 = vshrl.u32 %v3369, 16
          %v3381 = vpack.i.b16 %v3380, %v3379
          %v3382 = vunpack.c.l.b16 %v3375
          %v3383 = vpack.c.b16 %v3382, %v3382
          %3384 = vrot.lane.b32.xlu0 %v3383, 8
          %v3385 = vpop.permute.xlu0 %3384
          %v3386 = vunpack.c.l.b16 %v3378
          %v3387 = vpack.c.b16 %v3386, %v3386
          %3388 = vrot.lane.b32.xlu0 %v3387, 16
          %v3389 = vpop.permute.xlu0 %3388
          %v3390 = vunpack.c.l.b16 %v3381
          %v3391 = vpack.c.b16 %v3390, %v3390
          %3392 = vrot.lane.b32.xlu0 %v3391, 24
          %v3393 = vpop.permute.xlu0 %3392
          %v3396 = vsel %vm3049, %v3372, %v3385
          %v3398 = vsel %vm3135, %v3396, %v3389
          %vm3399 = vcmask 195584
          %v3401 = vsel %vm3399, %v3398, %v3393
          %vm3403 = vcmask 257024
          %3404 = vst.msk [vmem:[#allocation3] sm:$0xf] %vm3403, %v3401
          %v3405 = vpack.c.bf16 %v746, %v746
          %3407 = vrot.lane.b32.xlu0 %v3405, 120
          %v3408 = vpop.permute.xlu0 %3407
          %3409 = vrot.lane.b32.xlu0 %v3405, 112
          %v3410 = vpop.permute.xlu0 %3409
          %3411 = vrot.lane.b32.xlu0 %v3405, 104
          %v3412 = vpop.permute.xlu0 %3411
          %v3415 = vpack.i.b16 %v3408, %v3405
          %v3416 = vshrl.u32 %v3405, 16
          %v3417 = vshrl.u32 %v3408, 16
          %v3418 = vpack.i.b16 %v3417, %v3416
          %v3421 = vpack.i.b16 %v3412, %v3410
          %v3422 = vshrl.u32 %v3410, 16
          %v3423 = vshrl.u32 %v3412, 16
          %v3424 = vpack.i.b16 %v3423, %v3422
          %v3427 = vunpack.c.l.s4 1983009808
          %v3428 = vunpack.c.0.s8 %v3427
          %v3429 = vperm.slane %v3415, %v3428
          %v3432 = vunpack.c.l.s4 1983009808
          %v3433 = vunpack.c.0.s8 %v3432
          %v3434 = vperm.slane %v3421, %v3433
          %v3435 = vrot.slane %v3434, 4
          %v3436 = vsel %vm2466, %v3435, %v3429
          %v3437 = vrot.slane %v3429, 4
          %v3438 = vsel %vm2466, %v3434, %v3437
          %v3440 = vunpack.c.l.s4 1934713408
          %v3441 = vunpack.c.0.s8 %v3440
          %v3442 = vperm.slane %v3436, %v3441
          %v3444 = vunpack.c.l.s4 1934713408
          %v3445 = vunpack.c.0.s8 %v3444
          %v3446 = vperm.slane %v3438, %v3445
          %v3447 = vrot.slane %v3442, 4
          %v3448 = vsel %vm2466, 0, %v3447
          %v3449 = vrot.slane %v3446, 4
          %v3450 = vsel %vm2466, 0, %v3449
          %v3453 = vunpack.c.l.s4 1983009808
          %v3454 = vunpack.c.0.s8 %v3453
          %v3455 = vperm.slane %v3418, %v3454
          %v3458 = vunpack.c.l.s4 1983009808
          %v3459 = vunpack.c.0.s8 %v3458
          %v3460 = vperm.slane %v3424, %v3459
          %v3461 = vrot.slane %v3460, 4
          %v3462 = vsel %vm2466, %v3461, %v3455
          %v3463 = vrot.slane %v3455, 4
          %v3464 = vsel %vm2466, %v3460, %v3463
          %v3466 = vunpack.c.l.s4 1934713408
          %v3467 = vunpack.c.0.s8 %v3466
          %v3468 = vperm.slane %v3462, %v3467
          %v3470 = vunpack.c.l.s4 1934713408
          %v3471 = vunpack.c.0.s8 %v3470
          %v3472 = vperm.slane %v3464, %v3471
          %v3473 = vrot.slane %v3468, 4
          %v3474 = vsel %vm2466, 0, %v3473
          %v3475 = vrot.slane %v3472, 4
          %v3476 = vsel %vm2466, 0, %v3475
          %v3477 = vsel %vm2466, %v3449, %v3442
          %v3479 = vunpack.c.l.s4 1983009808
          %v3480 = vunpack.c.0.s8 %v3479
          %v3481 = vperm.slane %v3477, %v3480
          %v3482 = vrot.slane %v3450, 4
          %v3483 = vsel %vm2466, %v3482, %v3448
          %v3485 = vunpack.c.l.s4 1983009808
          %v3486 = vunpack.c.0.s8 %v3485
          %v3487 = vperm.slane %v3483, %v3486
          %v3488 = vrot.slane %v3487, 4
          %v3489 = vsel %vm2466, %v3488, %v3481
          %v3491 = vunpack.c.l.s4 1934713408
          %v3492 = vunpack.c.0.s8 %v3491
          %v3493 = vperm.slane %v3489, %v3492
          %v3494 = vrot.slane %v3493, 4
          %v3495 = vsel %vm2466, 0, %v3494
          %v3496 = vsel %vm2466, %v3475, %v3468
          %v3498 = vunpack.c.l.s4 1983009808
          %v3499 = vunpack.c.0.s8 %v3498
          %v3500 = vperm.slane %v3496, %v3499
          %v3501 = vrot.slane %v3476, 4
          %v3502 = vsel %vm2466, %v3501, %v3474
          %v3504 = vunpack.c.l.s4 1983009808
          %v3505 = vunpack.c.0.s8 %v3504
          %v3506 = vperm.slane %v3502, %v3505
          %v3507 = vrot.slane %v3506, 4
          %v3508 = vsel %vm2466, %v3507, %v3500
          %v3510 = vunpack.c.l.s4 1934713408
          %v3511 = vunpack.c.0.s8 %v3510
          %v3512 = vperm.slane %v3508, %v3511
          %v3513 = vrot.slane %v3512, 4
          %v3514 = vsel %vm2466, 0, %v3513
          %v3517 = vpack.i.b16 %v3512, %v3493
          %v3518 = vshrl.u32 %v3493, 16
          %v3519 = vshrl.u32 %v3512, 16
          %v3520 = vpack.i.b16 %v3519, %v3518
          %v3523 = vpack.i.b16 %v3514, %v3495
          %v3524 = vshrl.u32 %v3495, 16
          %v3525 = vshrl.u32 %v3514, 16
          %v3526 = vpack.i.b16 %v3525, %v3524
          %v3527 = vpack.c.bf16 %v2395, %v2395
          %v3528 = vpack.c.bf16 %v2397, %v2397
          %3531 = vrot.lane.b32.xlu0 %v3527, 120
          %v3532 = vpop.permute.xlu0 %3531
          %3533 = vrot.lane.b32.xlu0 %v3528, 120
          %v3534 = vpop.permute.xlu0 %3533
          %3535 = vrot.lane.b32.xlu0 %v3527, 112
          %v3536 = vpop.permute.xlu0 %3535
          %3537 = vrot.lane.b32.xlu0 %v3528, 112
          %v3538 = vpop.permute.xlu0 %3537
          %3539 = vrot.lane.b32.xlu0 %v3527, 104
          %v3540 = vpop.permute.xlu0 %3539
          %3541 = vrot.lane.b32.xlu0 %v3528, 104
          %v3542 = vpop.permute.xlu0 %3541
          %v3545 = vpack.i.b16 %v3532, %v3527
          %v3546 = vshrl.u32 %v3527, 16
          %v3547 = vshrl.u32 %v3532, 16
          %v3548 = vpack.i.b16 %v3547, %v3546
          %v3551 = vpack.i.b16 %v3540, %v3536
          %v3552 = vshrl.u32 %v3536, 16
          %v3553 = vshrl.u32 %v3540, 16
          %v3554 = vpack.i.b16 %v3553, %v3552
          %v3557 = vpack.i.b16 %v3534, %v3528
          %v3558 = vshrl.u32 %v3528, 16
          %v3559 = vshrl.u32 %v3534, 16
          %v3560 = vpack.i.b16 %v3559, %v3558
          %v3563 = vpack.i.b16 %v3542, %v3538
          %v3564 = vshrl.u32 %v3538, 16
          %v3565 = vshrl.u32 %v3542, 16
          %v3566 = vpack.i.b16 %v3565, %v3564
          %v3569 = vunpack.c.l.s4 1983009808
          %v3570 = vunpack.c.0.s8 %v3569
          %v3571 = vperm.slane %v3545, %v3570
          %v3574 = vunpack.c.l.s4 1983009808
          %v3575 = vunpack.c.0.s8 %v3574
          %v3576 = vperm.slane %v3551, %v3575
          %v3577 = vrot.slane %v3576, 4
          %v3578 = vsel %vm2466, %v3577, %v3571
          %v3579 = vrot.slane %v3571, 4
          %v3580 = vsel %vm2466, %v3576, %v3579
          %v3582 = vunpack.c.l.s4 1934713408
          %v3583 = vunpack.c.0.s8 %v3582
          %v3584 = vperm.slane %v3578, %v3583
          %v3586 = vunpack.c.l.s4 1934713408
          %v3587 = vunpack.c.0.s8 %v3586
          %v3588 = vperm.slane %v3580, %v3587
          %v3589 = vrot.slane %v3584, 4
          %v3590 = vsel %vm2466, 0, %v3589
          %v3591 = vrot.slane %v3588, 4
          %v3592 = vsel %vm2466, 0, %v3591
          %v3595 = vunpack.c.l.s4 1983009808
          %v3596 = vunpack.c.0.s8 %v3595
          %v3597 = vperm.slane %v3548, %v3596
          %v3600 = vunpack.c.l.s4 1983009808
          %v3601 = vunpack.c.0.s8 %v3600
          %v3602 = vperm.slane %v3554, %v3601
          %v3603 = vrot.slane %v3602, 4
          %v3604 = vsel %vm2466, %v3603, %v3597
          %v3605 = vrot.slane %v3597, 4
          %v3606 = vsel %vm2466, %v3602, %v3605
          %v3608 = vunpack.c.l.s4 1934713408
          %v3609 = vunpack.c.0.s8 %v3608
          %v3610 = vperm.slane %v3604, %v3609
          %v3612 = vunpack.c.l.s4 1934713408
          %v3613 = vunpack.c.0.s8 %v3612
          %v3614 = vperm.slane %v3606, %v3613
          %v3615 = vrot.slane %v3610, 4
          %v3616 = vsel %vm2466, 0, %v3615
          %v3617 = vrot.slane %v3614, 4
          %v3618 = vsel %vm2466, 0, %v3617
          %v3621 = vunpack.c.l.s4 1983009808
          %v3622 = vunpack.c.0.s8 %v3621
          %v3623 = vperm.slane %v3557, %v3622
          %v3626 = vunpack.c.l.s4 1983009808
          %v3627 = vunpack.c.0.s8 %v3626
          %v3628 = vperm.slane %v3563, %v3627
          %v3629 = vrot.slane %v3628, 4
          %v3630 = vsel %vm2466, %v3629, %v3623
          %v3631 = vrot.slane %v3623, 4
          %v3632 = vsel %vm2466, %v3628, %v3631
          %v3634 = vunpack.c.l.s4 1934713408
          %v3635 = vunpack.c.0.s8 %v3634
          %v3636 = vperm.slane %v3630, %v3635
          %v3638 = vunpack.c.l.s4 1934713408
          %v3639 = vunpack.c.0.s8 %v3638
          %v3640 = vperm.slane %v3632, %v3639
          %v3641 = vrot.slane %v3636, 4
          %v3642 = vsel %vm2466, 0, %v3641
          %v3643 = vrot.slane %v3640, 4
          %v3644 = vsel %vm2466, 0, %v3643
          %v3647 = vunpack.c.l.s4 1983009808
          %v3648 = vunpack.c.0.s8 %v3647
          %v3649 = vperm.slane %v3560, %v3648
          %v3652 = vunpack.c.l.s4 1983009808
          %v3653 = vunpack.c.0.s8 %v3652
          %v3654 = vperm.slane %v3566, %v3653
          %v3655 = vrot.slane %v3654, 4
          %v3656 = vsel %vm2466, %v3655, %v3649
          %v3657 = vrot.slane %v3649, 4
          %v3658 = vsel %vm2466, %v3654, %v3657
          %v3660 = vunpack.c.l.s4 1934713408
          %v3661 = vunpack.c.0.s8 %v3660
          %v3662 = vperm.slane %v3656, %v3661
          %v3664 = vunpack.c.l.s4 1934713408
          %v3665 = vunpack.c.0.s8 %v3664
          %v3666 = vperm.slane %v3658, %v3665
          %v3667 = vrot.slane %v3662, 4
          %v3668 = vsel %vm2466, 0, %v3667
          %v3669 = vrot.slane %v3666, 4
          %v3670 = vsel %vm2466, 0, %v3669
          %v3671 = vsel %vm2466, %v3591, %v3584
          %v3673 = vunpack.c.l.s4 1983009808
          %v3674 = vunpack.c.0.s8 %v3673
          %v3675 = vperm.slane %v3671, %v3674
          %v3676 = vrot.slane %v3592, 4
          %v3677 = vsel %vm2466, %v3676, %v3590
          %v3679 = vunpack.c.l.s4 1983009808
          %v3680 = vunpack.c.0.s8 %v3679
          %v3681 = vperm.slane %v3677, %v3680
          %v3682 = vrot.slane %v3681, 4
          %v3683 = vsel %vm2466, %v3682, %v3675
          %v3685 = vunpack.c.l.s4 1934713408
          %v3686 = vunpack.c.0.s8 %v3685
          %v3687 = vperm.slane %v3683, %v3686
          %v3688 = vrot.slane %v3687, 4
          %v3689 = vsel %vm2466, 0, %v3688
          %v3690 = vsel %vm2466, %v3617, %v3610
          %v3692 = vunpack.c.l.s4 1983009808
          %v3693 = vunpack.c.0.s8 %v3692
          %v3694 = vperm.slane %v3690, %v3693
          %v3695 = vrot.slane %v3618, 4
          %v3696 = vsel %vm2466, %v3695, %v3616
          %v3698 = vunpack.c.l.s4 1983009808
          %v3699 = vunpack.c.0.s8 %v3698
          %v3700 = vperm.slane %v3696, %v3699
          %v3701 = vrot.slane %v3700, 4
          %v3702 = vsel %vm2466, %v3701, %v3694
          %v3704 = vunpack.c.l.s4 1934713408
          %v3705 = vunpack.c.0.s8 %v3704
          %v3706 = vperm.slane %v3702, %v3705
          %v3707 = vrot.slane %v3706, 4
          %v3708 = vsel %vm2466, 0, %v3707
          %v3709 = vsel %vm2466, %v3643, %v3636
          %v3711 = vunpack.c.l.s4 1983009808
          %v3712 = vunpack.c.0.s8 %v3711
          %v3713 = vperm.slane %v3709, %v3712
          %v3714 = vrot.slane %v3644, 4
          %v3715 = vsel %vm2466, %v3714, %v3642
          %v3717 = vunpack.c.l.s4 1983009808
          %v3718 = vunpack.c.0.s8 %v3717
          %v3719 = vperm.slane %v3715, %v3718
          %v3720 = vrot.slane %v3719, 4
          %v3721 = vsel %vm2466, %v3720, %v3713
          %v3723 = vunpack.c.l.s4 1934713408
          %v3724 = vunpack.c.0.s8 %v3723
          %v3725 = vperm.slane %v3721, %v3724
          %v3726 = vrot.slane %v3725, 4
          %v3727 = vsel %vm2466, 0, %v3726
          %v3728 = vsel %vm2466, %v3669, %v3662
          %v3730 = vunpack.c.l.s4 1983009808
          %v3731 = vunpack.c.0.s8 %v3730
          %v3732 = vperm.slane %v3728, %v3731
          %v3733 = vrot.slane %v3670, 4
          %v3734 = vsel %vm2466, %v3733, %v3668
          %v3736 = vunpack.c.l.s4 1983009808
          %v3737 = vunpack.c.0.s8 %v3736
          %v3738 = vperm.slane %v3734, %v3737
          %v3739 = vrot.slane %v3738, 4
          %v3740 = vsel %vm2466, %v3739, %v3732
          %v3742 = vunpack.c.l.s4 1934713408
          %v3743 = vunpack.c.0.s8 %v3742
          %v3744 = vperm.slane %v3740, %v3743
          %v3745 = vrot.slane %v3744, 4
          %v3746 = vsel %vm2466, 0, %v3745
          %v3749 = vpack.i.b16 %v3706, %v3687
          %v3750 = vshrl.u32 %v3687, 16
          %v3751 = vshrl.u32 %v3706, 16
          %v3752 = vpack.i.b16 %v3751, %v3750
          %v3755 = vpack.i.b16 %v3708, %v3689
          %v3756 = vshrl.u32 %v3689, 16
          %v3757 = vshrl.u32 %v3708, 16
          %v3758 = vpack.i.b16 %v3757, %v3756
          %v3761 = vpack.i.b16 %v3744, %v3725
          %v3762 = vshrl.u32 %v3725, 16
          %v3763 = vshrl.u32 %v3744, 16
          %v3764 = vpack.i.b16 %v3763, %v3762
          %v3767 = vpack.i.b16 %v3746, %v3727
          %v3768 = vshrl.u32 %v3727, 16
          %v3769 = vshrl.u32 %v3746, 16
          %v3770 = vpack.i.b16 %v3769, %v3768
          %v3771 = vpack.c.bf16 %v2431, %v2431
          %v3772 = vpack.c.bf16 %v2433, %v2433
          %3775 = vrot.lane.b32.xlu0 %v3771, 120
          %v3776 = vpop.permute.xlu0 %3775
          %3777 = vrot.lane.b32.xlu0 %v3772, 120
          %v3778 = vpop.permute.xlu0 %3777
          %3779 = vrot.lane.b32.xlu0 %v3771, 112
          %v3780 = vpop.permute.xlu0 %3779
          %3781 = vrot.lane.b32.xlu0 %v3772, 112
          %v3782 = vpop.permute.xlu0 %3781
          %3783 = vrot.lane.b32.xlu0 %v3771, 104
          %v3784 = vpop.permute.xlu0 %3783
          %3785 = vrot.lane.b32.xlu0 %v3772, 104
          %v3786 = vpop.permute.xlu0 %3785
          %v3789 = vpack.i.b16 %v3776, %v3771
          %v3790 = vshrl.u32 %v3771, 16
          %v3791 = vshrl.u32 %v3776, 16
          %v3792 = vpack.i.b16 %v3791, %v3790
          %v3795 = vpack.i.b16 %v3784, %v3780
          %v3796 = vshrl.u32 %v3780, 16
          %v3797 = vshrl.u32 %v3784, 16
          %v3798 = vpack.i.b16 %v3797, %v3796
          %v3801 = vpack.i.b16 %v3778, %v3772
          %v3802 = vshrl.u32 %v3772, 16
          %v3803 = vshrl.u32 %v3778, 16
          %v3804 = vpack.i.b16 %v3803, %v3802
          %v3807 = vpack.i.b16 %v3786, %v3782
          %v3808 = vshrl.u32 %v3782, 16
          %v3809 = vshrl.u32 %v3786, 16
          %v3810 = vpack.i.b16 %v3809, %v3808
          %v3813 = vunpack.c.l.s4 1983009808
          %v3814 = vunpack.c.0.s8 %v3813
          %v3815 = vperm.slane %v3789, %v3814
          %v3818 = vunpack.c.l.s4 1983009808
          %v3819 = vunpack.c.0.s8 %v3818
          %v3820 = vperm.slane %v3795, %v3819
          %v3821 = vrot.slane %v3820, 4
          %v3822 = vsel %vm2466, %v3821, %v3815
          %v3823 = vrot.slane %v3815, 4
          %v3824 = vsel %vm2466, %v3820, %v3823
          %v3826 = vunpack.c.l.s4 1934713408
          %v3827 = vunpack.c.0.s8 %v3826
          %v3828 = vperm.slane %v3822, %v3827
          %v3830 = vunpack.c.l.s4 1934713408
          %v3831 = vunpack.c.0.s8 %v3830
          %v3832 = vperm.slane %v3824, %v3831
          %v3833 = vrot.slane %v3828, 4
          %v3834 = vsel %vm2466, 0, %v3833
          %v3835 = vrot.slane %v3832, 4
          %v3836 = vsel %vm2466, 0, %v3835
          %v3839 = vunpack.c.l.s4 1983009808
          %v3840 = vunpack.c.0.s8 %v3839
          %v3841 = vperm.slane %v3792, %v3840
          %v3844 = vunpack.c.l.s4 1983009808
          %v3845 = vunpack.c.0.s8 %v3844
          %v3846 = vperm.slane %v3798, %v3845
          %v3847 = vrot.slane %v3846, 4
          %v3848 = vsel %vm2466, %v3847, %v3841
          %v3849 = vrot.slane %v3841, 4
          %v3850 = vsel %vm2466, %v3846, %v3849
          %v3852 = vunpack.c.l.s4 1934713408
          %v3853 = vunpack.c.0.s8 %v3852
          %v3854 = vperm.slane %v3848, %v3853
          %v3856 = vunpack.c.l.s4 1934713408
          %v3857 = vunpack.c.0.s8 %v3856
          %v3858 = vperm.slane %v3850, %v3857
          %v3859 = vrot.slane %v3854, 4
          %v3860 = vsel %vm2466, 0, %v3859
          %v3861 = vrot.slane %v3858, 4
          %v3862 = vsel %vm2466, 0, %v3861
          %v3865 = vunpack.c.l.s4 1983009808
          %v3866 = vunpack.c.0.s8 %v3865
          %v3867 = vperm.slane %v3801, %v3866
          %v3870 = vunpack.c.l.s4 1983009808
          %v3871 = vunpack.c.0.s8 %v3870
          %v3872 = vperm.slane %v3807, %v3871
          %v3873 = vrot.slane %v3872, 4
          %v3874 = vsel %vm2466, %v3873, %v3867
          %v3875 = vrot.slane %v3867, 4
          %v3876 = vsel %vm2466, %v3872, %v3875
          %v3878 = vunpack.c.l.s4 1934713408
          %v3879 = vunpack.c.0.s8 %v3878
          %v3880 = vperm.slane %v3874, %v3879
          %v3882 = vunpack.c.l.s4 1934713408
          %v3883 = vunpack.c.0.s8 %v3882
          %v3884 = vperm.slane %v3876, %v3883
          %v3885 = vrot.slane %v3880, 4
          %v3886 = vsel %vm2466, 0, %v3885
          %v3887 = vrot.slane %v3884, 4
          %v3888 = vsel %vm2466, 0, %v3887
          %v3891 = vunpack.c.l.s4 1983009808
          %v3892 = vunpack.c.0.s8 %v3891
          %v3893 = vperm.slane %v3804, %v3892
          %v3896 = vunpack.c.l.s4 1983009808
          %v3897 = vunpack.c.0.s8 %v3896
          %v3898 = vperm.slane %v3810, %v3897
          %v3899 = vrot.slane %v3898, 4
          %v3900 = vsel %vm2466, %v3899, %v3893
          %v3901 = vrot.slane %v3893, 4
          %v3902 = vsel %vm2466, %v3898, %v3901
          %v3904 = vunpack.c.l.s4 1934713408
          %v3905 = vunpack.c.0.s8 %v3904
          %v3906 = vperm.slane %v3900, %v3905
          %v3908 = vunpack.c.l.s4 1934713408
          %v3909 = vunpack.c.0.s8 %v3908
          %v3910 = vperm.slane %v3902, %v3909
          %v3911 = vrot.slane %v3906, 4
          %v3912 = vsel %vm2466, 0, %v3911
          %v3913 = vrot.slane %v3910, 4
          %v3914 = vsel %vm2466, 0, %v3913
          %v3915 = vsel %vm2466, %v3835, %v3828
          %v3917 = vunpack.c.l.s4 1983009808
          %v3918 = vunpack.c.0.s8 %v3917
          %v3919 = vperm.slane %v3915, %v3918
          %v3920 = vrot.slane %v3836, 4
          %v3921 = vsel %vm2466, %v3920, %v3834
          %v3923 = vunpack.c.l.s4 1983009808
          %v3924 = vunpack.c.0.s8 %v3923
          %v3925 = vperm.slane %v3921, %v3924
          %v3926 = vrot.slane %v3925, 4
          %v3927 = vsel %vm2466, %v3926, %v3919
          %v3929 = vunpack.c.l.s4 1934713408
          %v3930 = vunpack.c.0.s8 %v3929
          %v3931 = vperm.slane %v3927, %v3930
          %v3932 = vrot.slane %v3931, 4
          %v3933 = vsel %vm2466, 0, %v3932
          %v3934 = vsel %vm2466, %v3861, %v3854
          %v3936 = vunpack.c.l.s4 1983009808
          %v3937 = vunpack.c.0.s8 %v3936
          %v3938 = vperm.slane %v3934, %v3937
          %v3939 = vrot.slane %v3862, 4
          %v3940 = vsel %vm2466, %v3939, %v3860
          %v3942 = vunpack.c.l.s4 1983009808
          %v3943 = vunpack.c.0.s8 %v3942
          %v3944 = vperm.slane %v3940, %v3943
          %v3945 = vrot.slane %v3944, 4
          %v3946 = vsel %vm2466, %v3945, %v3938
          %v3948 = vunpack.c.l.s4 1934713408
          %v3949 = vunpack.c.0.s8 %v3948
          %v3950 = vperm.slane %v3946, %v3949
          %v3951 = vrot.slane %v3950, 4
          %v3952 = vsel %vm2466, 0, %v3951
          %v3953 = vsel %vm2466, %v3887, %v3880
          %v3955 = vunpack.c.l.s4 1983009808
          %v3956 = vunpack.c.0.s8 %v3955
          %v3957 = vperm.slane %v3953, %v3956
          %v3958 = vrot.slane %v3888, 4
          %v3959 = vsel %vm2466, %v3958, %v3886
          %v3961 = vunpack.c.l.s4 1983009808
          %v3962 = vunpack.c.0.s8 %v3961
          %v3963 = vperm.slane %v3959, %v3962
          %v3964 = vrot.slane %v3963, 4
          %v3965 = vsel %vm2466, %v3964, %v3957
          %v3967 = vunpack.c.l.s4 1934713408
          %v3968 = vunpack.c.0.s8 %v3967
          %v3969 = vperm.slane %v3965, %v3968
          %v3970 = vrot.slane %v3969, 4
          %v3971 = vsel %vm2466, 0, %v3970
          %v3972 = vsel %vm2466, %v3913, %v3906
          %v3974 = vunpack.c.l.s4 1983009808
          %v3975 = vunpack.c.0.s8 %v3974
          %v3976 = vperm.slane %v3972, %v3975
          %v3977 = vrot.slane %v3914, 4
          %v3978 = vsel %vm2466, %v3977, %v3912
          %v3980 = vunpack.c.l.s4 1983009808
          %v3981 = vunpack.c.0.s8 %v3980
          %v3982 = vperm.slane %v3978, %v3981
          %v3983 = vrot.slane %v3982, 4
          %v3984 = vsel %vm2466, %v3983, %v3976
          %v3986 = vunpack.c.l.s4 1934713408
          %v3987 = vunpack.c.0.s8 %v3986
          %v3988 = vperm.slane %v3984, %v3987
          %v3989 = vrot.slane %v3988, 4
          %v3990 = vsel %vm2466, 0, %v3989
          %v3993 = vpack.i.b16 %v3950, %v3931
          %v3994 = vshrl.u32 %v3931, 16
          %v3995 = vshrl.u32 %v3950, 16
          %v3996 = vpack.i.b16 %v3995, %v3994
          %v3999 = vpack.i.b16 %v3952, %v3933
          %v4000 = vshrl.u32 %v3933, 16
          %v4001 = vshrl.u32 %v3952, 16
          %v4002 = vpack.i.b16 %v4001, %v4000
          %v4005 = vpack.i.b16 %v3988, %v3969
          %v4006 = vshrl.u32 %v3969, 16
          %v4007 = vshrl.u32 %v3988, 16
          %v4008 = vpack.i.b16 %v4007, %v4006
          %v4011 = vpack.i.b16 %v3990, %v3971
          %v4012 = vshrl.u32 %v3971, 16
          %v4013 = vshrl.u32 %v3990, 16
          %v4014 = vpack.i.b16 %v4013, %v4012
          %v4015 = vunpack.c.l.b16 %v3749
          %v4016 = vunpack.c.l.b16 %v3761
          %v4017 = vpack.c.b16 %v4016, %v4015
          %v4019 = vsel %vm3049, %v3517, 0
          %v4022 = vsel %vm3049, %v4017, 0
          %4024 = vmatpush.bf16.xpose.msra.mxu0 0
          %4025 = vmatpush.bf16.xpose.msra.mxu0 0
          %4026 = vmatpush.bf16.xpose.msra.mxu0 0
          %4027 = vmatpush.bf16.xpose.msra.mxu0 0
          %4028 = vmatpush.bf16.xpose.msra.mxu0 0
          %4029 = vmatpush.bf16.xpose.msra.mxu0 0
          %4030 = vmatpush.bf16.xpose.msra.mxu0 0
          %4031 = vmatpush.bf16.xpose.msra.mxu0 %v4022
          %4032 = vmatmul.bf16.gmra.mxu0 %v4019
          %v4033 = vpop.f32.mrf.mxu0
          %v4034 = vadd.f32 0.0, %v4033
          %v4035 = vpop.f32.mrf.mxu0
          %4036 = vdwg.mxu0
          %v4037 = vunpack.c.l.b16 %v3752
          %v4038 = vunpack.c.l.b16 %v3764
          %v4039 = vpack.c.b16 %v4038, %v4037
          %v4041 = vsel %vm3049, %v3520, 0
          %v4044 = vsel %vm3049, %v4039, 0
          %4046 = vmatpush.bf16.xpose.msra.mxu0 0
          %4047 = vmatpush.bf16.xpose.msra.mxu0 0
          %4048 = vmatpush.bf16.xpose.msra.mxu0 0
          %4049 = vmatpush.bf16.xpose.msra.mxu0 0
          %4050 = vmatpush.bf16.xpose.msra.mxu0 0
          %4051 = vmatpush.bf16.xpose.msra.mxu0 0
          %4052 = vmatpush.bf16.xpose.msra.mxu0 0
          %4053 = vmatpush.bf16.xpose.msra.mxu0 %v4044
          %4054 = vmatmul.bf16.gmra.mxu0 %v4041
          %v4055 = vpop.f32.mrf.mxu0
          %v4056 = vadd.f32 0.0, %v4055
          %v4057 = vpop.f32.mrf.mxu0
          %4058 = vdwg.mxu0
          %v4059 = vunpack.c.l.b16 %v3755
          %v4060 = vunpack.c.l.b16 %v3767
          %v4061 = vpack.c.b16 %v4060, %v4059
          %v4063 = vsel %vm3049, %v3523, 0
          %v4066 = vsel %vm3049, %v4061, 0
          %4068 = vmatpush.bf16.xpose.msra.mxu0 0
          %4069 = vmatpush.bf16.xpose.msra.mxu0 0
          %4070 = vmatpush.bf16.xpose.msra.mxu0 0
          %4071 = vmatpush.bf16.xpose.msra.mxu0 0
          %4072 = vmatpush.bf16.xpose.msra.mxu0 0
          %4073 = vmatpush.bf16.xpose.msra.mxu0 0
          %4074 = vmatpush.bf16.xpose.msra.mxu0 0
          %4075 = vmatpush.bf16.xpose.msra.mxu0 %v4066
          %4076 = vmatmul.bf16.gmra.mxu0 %v4063
          %v4077 = vpop.f32.mrf.mxu0
          %v4078 = vadd.f32 0.0, %v4077
          %v4079 = vpop.f32.mrf.mxu0
          %4080 = vdwg.mxu0
          %v4081 = vunpack.c.l.b16 %v3758
          %v4082 = vunpack.c.l.b16 %v3770
          %v4083 = vpack.c.b16 %v4082, %v4081
          %v4085 = vsel %vm3049, %v3526, 0
          %v4088 = vsel %vm3049, %v4083, 0
          %4090 = vmatpush.bf16.xpose.msra.mxu0 0
          %4091 = vmatpush.bf16.xpose.msra.mxu0 0
          %4092 = vmatpush.bf16.xpose.msra.mxu0 0
          %4093 = vmatpush.bf16.xpose.msra.mxu0 0
          %4094 = vmatpush.bf16.xpose.msra.mxu0 0
          %4095 = vmatpush.bf16.xpose.msra.mxu0 0
          %4096 = vmatpush.bf16.xpose.msra.mxu0 0
          %4097 = vmatpush.bf16.xpose.msra.mxu0 %v4088
          %4098 = vmatmul.bf16.gmra.mxu0 %v4085
          %v4099 = vpop.f32.mrf.mxu0
          %v4100 = vadd.f32 0.0, %v4099
          %v4101 = vpop.f32.mrf.mxu0
          %4102 = vdwg.mxu0
          %v4103 = vsel %vm3135, %v4034, -inf
          %4104 = vmax.xlane.f32.xlu0 %v4103
          %v4105 = vpop.xlane.xlu0 %4104
          %v4106 = vsel %vm3135, %v4056, -inf
          %4107 = vmax.xlane.f32.xlu0 %v4106
          %v4108 = vpop.xlane.xlu0 %4107
          %v4109 = vsel %vm3135, %v4078, -inf
          %4110 = vmax.xlane.f32.xlu0 %v4109
          %v4111 = vpop.xlane.xlu0 %4110
          %v4112 = vsel %vm3135, %v4100, -inf
          %4113 = vmax.xlane.f32.xlu0 %v4112
          %v4114 = vpop.xlane.xlu0 %4113
          %v4115 = vsub.f32 %v4034, %v4105
          %v4116 = vsub.f32 %v4056, %v4108
          %v4117 = vsub.f32 %v4078, %v4111
          %v4118 = vsub.f32 %v4100, %v4114
          %v4119 = vmul.f32 %v4115, 1.442695
          %v4120 = vpow.pop %v4119
          %v4121 = vmul.f32 %v4116, 1.442695
          %v4122 = vpow.pop %v4121
          %v4123 = vmul.f32 %v4117, 1.442695
          %v4124 = vpow.pop %v4123
          %v4125 = vmul.f32 %v4118, 1.442695
          %v4126 = vpow.pop %v4125
          %v4127 = vsel %vm3135, %v4120, 0.0
          %4128 = vadd.xlane.f32.xlu0 %v4127
          %v4129 = vpop.xlane.xlu0 %4128
          %v4130 = vsel %vm3135, %v4122, 0.0
          %4131 = vadd.xlane.f32.xlu0 %v4130
          %v4132 = vpop.xlane.xlu0 %4131
          %v4133 = vsel %vm3135, %v4124, 0.0
          %4134 = vadd.xlane.f32.xlu0 %v4133
          %v4135 = vpop.xlane.xlu0 %4134
          %v4136 = vsel %vm3135, %v4126, 0.0
          %4137 = vadd.xlane.f32.xlu0 %v4136
          %v4138 = vpop.xlane.xlu0 %4137
          %v4139 = vrcp.pop %v4129
          %v4140 = vrcp.pop %v4132
          %v4141 = vrcp.pop %v4135
          %v4142 = vrcp.pop %v4138
          %v4143 = vmul.f32 %v4120, %v4139
          %v4144 = vmul.f32 %v4122, %v4140
          %v4145 = vmul.f32 %v4124, %v4141
          %v4146 = vmul.f32 %v4126, %v4142
          %v4147 = vpack.c.bf16 %v4143, %v4143
          %v4148 = vpack.c.bf16 %v4144, %v4144
          %v4149 = vpack.c.bf16 %v4145, %v4145
          %v4150 = vpack.c.bf16 %v4146, %v4146
          %v4151 = vunpack.c.l.b16 %v3993
          %v4152 = vunpack.c.l.b16 %v4005
          %v4153 = vpack.c.b16 %v4152, %v4151
          %v4156 = vsel %vm3135, %v4147, 0
          %4158 = vmatpush.bf16.msra.mxu0 0
          %4159 = vmatpush.bf16.msra.mxu0 0
          %4160 = vmatpush.bf16.msra.mxu0 0
          %4161 = vmatpush.bf16.msra.mxu0 0
          %4162 = vmatpush.bf16.msra.mxu0 0
          %4163 = vmatpush.bf16.msra.mxu0 0
          %4164 = vmatpush.bf16.msra.mxu0 0
          %4165 = vmatpush.bf16.msra.mxu0 %v4153
          %4166 = vmatmul.bf16.gmra.mxu0 %v4156
          %v4167 = vpop.f32.mrf.mxu0
          %v4168 = vadd.f32 0.0, %v4167
          %v4169 = vpop.f32.mrf.mxu0
          %4170 = vdwg.mxu0
          %v4171 = vunpack.c.l.b16 %v3996
          %v4172 = vunpack.c.l.b16 %v4008
          %v4173 = vpack.c.b16 %v4172, %v4171
          %v4176 = vsel %vm3135, %v4148, 0
          %4178 = vmatpush.bf16.msra.mxu0 0
          %4179 = vmatpush.bf16.msra.mxu0 0
          %4180 = vmatpush.bf16.msra.mxu0 0
          %4181 = vmatpush.bf16.msra.mxu0 0
          %4182 = vmatpush.bf16.msra.mxu0 0
          %4183 = vmatpush.bf16.msra.mxu0 0
          %4184 = vmatpush.bf16.msra.mxu0 0
          %4185 = vmatpush.bf16.msra.mxu0 %v4173
          %4186 = vmatmul.bf16.gmra.mxu0 %v4176
          %v4187 = vpop.f32.mrf.mxu0
          %v4188 = vadd.f32 0.0, %v4187
          %v4189 = vpop.f32.mrf.mxu0
          %4190 = vdwg.mxu0
          %v4191 = vunpack.c.l.b16 %v3999
          %v4192 = vunpack.c.l.b16 %v4011
          %v4193 = vpack.c.b16 %v4192, %v4191
          %v4196 = vsel %vm3135, %v4149, 0
          %4198 = vmatpush.bf16.msra.mxu0 0
          %4199 = vmatpush.bf16.msra.mxu0 0
          %4200 = vmatpush.bf16.msra.mxu0 0
          %4201 = vmatpush.bf16.msra.mxu0 0
          %4202 = vmatpush.bf16.msra.mxu0 0
          %4203 = vmatpush.bf16.msra.mxu0 0
          %4204 = vmatpush.bf16.msra.mxu0 0
          %4205 = vmatpush.bf16.msra.mxu0 %v4193
          %4206 = vmatmul.bf16.gmra.mxu0 %v4196
          %v4207 = vpop.f32.mrf.mxu0
          %v4208 = vadd.f32 0.0, %v4207
          %v4209 = vpop.f32.mrf.mxu0
          %4210 = vdwg.mxu0
          %v4211 = vunpack.c.l.b16 %v4002
          %v4212 = vunpack.c.l.b16 %v4014
          %v4213 = vpack.c.b16 %v4212, %v4211
          %v4216 = vsel %vm3135, %v4150, 0
          %4218 = vmatpush.bf16.msra.mxu0 0
          %4219 = vmatpush.bf16.msra.mxu0 0
          %4220 = vmatpush.bf16.msra.mxu0 0
          %4221 = vmatpush.bf16.msra.mxu0 0
          %4222 = vmatpush.bf16.msra.mxu0 0
          %4223 = vmatpush.bf16.msra.mxu0 0
          %4224 = vmatpush.bf16.msra.mxu0 0
          %4225 = vmatpush.bf16.msra.mxu0 %v4213
          %4226 = vmatmul.bf16.gmra.mxu0 %v4216
          %v4227 = vpop.f32.mrf.mxu0
          %v4228 = vadd.f32 0.0, %v4227
          %v4229 = vpop.f32.mrf.mxu0
          %4230 = vdwg.mxu0
          %v4231 = vpack.c.bf16 %v4168, %v4168
          %v4232 = vpack.c.bf16 %v4188, %v4188
          %v4233 = vpack.c.bf16 %v4208, %v4208
          %v4234 = vpack.c.bf16 %v4228, %v4228
          %v4237 = vpack.i.b16 %v4232, %v4231
          %v4238 = vshrl.u32 %v4231, 16
          %v4239 = vshrl.u32 %v4232, 16
          %v4240 = vpack.i.b16 %v4239, %v4238
          %v4243 = vpack.i.b16 %v4234, %v4233
          %v4244 = vshrl.u32 %v4233, 16
          %v4245 = vshrl.u32 %v4234, 16
          %v4246 = vpack.i.b16 %v4245, %v4244
          %v4249 = vunpack.c.l.s4 1983009808
          %v4250 = vunpack.c.0.s8 %v4249
          %v4251 = vperm.slane %v4237, %v4250
          %v4254 = vunpack.c.l.s4 1983009808
          %v4255 = vunpack.c.0.s8 %v4254
          %v4256 = vperm.slane %v4243, %v4255
          %v4257 = vrot.slane %v4256, 4
          %v4258 = vsel %vm2466, %v4257, %v4251
          %v4259 = vrot.slane %v4251, 4
          %v4260 = vsel %vm2466, %v4256, %v4259
          %v4262 = vunpack.c.l.s4 1934713408
          %v4263 = vunpack.c.0.s8 %v4262
          %v4264 = vperm.slane %v4258, %v4263
          %v4266 = vunpack.c.l.s4 1934713408
          %v4267 = vunpack.c.0.s8 %v4266
          %v4268 = vperm.slane %v4260, %v4267
          %v4269 = vrot.slane %v4264, 4
          %v4270 = vsel %vm2466, 0, %v4269
          %v4271 = vrot.slane %v4268, 4
          %v4272 = vsel %vm2466, 0, %v4271
          %v4275 = vunpack.c.l.s4 1983009808
          %v4276 = vunpack.c.0.s8 %v4275
          %v4277 = vperm.slane %v4240, %v4276
          %v4280 = vunpack.c.l.s4 1983009808
          %v4281 = vunpack.c.0.s8 %v4280
          %v4282 = vperm.slane %v4246, %v4281
          %v4283 = vrot.slane %v4282, 4
          %v4284 = vsel %vm2466, %v4283, %v4277
          %v4285 = vrot.slane %v4277, 4
          %v4286 = vsel %vm2466, %v4282, %v4285
          %v4288 = vunpack.c.l.s4 1934713408
          %v4289 = vunpack.c.0.s8 %v4288
          %v4290 = vperm.slane %v4284, %v4289
          %v4292 = vunpack.c.l.s4 1934713408
          %v4293 = vunpack.c.0.s8 %v4292
          %v4294 = vperm.slane %v4286, %v4293
          %v4295 = vrot.slane %v4290, 4
          %v4296 = vsel %vm2466, 0, %v4295
          %v4297 = vrot.slane %v4294, 4
          %v4298 = vsel %vm2466, 0, %v4297
          %v4299 = vsel %vm2466, %v4271, %v4264
          %v4301 = vunpack.c.l.s4 1983009808
          %v4302 = vunpack.c.0.s8 %v4301
          %v4303 = vperm.slane %v4299, %v4302
          %v4304 = vrot.slane %v4272, 4
          %v4305 = vsel %vm2466, %v4304, %v4270
          %v4307 = vunpack.c.l.s4 1983009808
          %v4308 = vunpack.c.0.s8 %v4307
          %v4309 = vperm.slane %v4305, %v4308
          %v4310 = vrot.slane %v4309, 4
          %v4311 = vsel %vm2466, %v4310, %v4303
          %v4313 = vunpack.c.l.s4 1934713408
          %v4314 = vunpack.c.0.s8 %v4313
          %v4315 = vperm.slane %v4311, %v4314
          %v4316 = vrot.slane %v4315, 4
          %v4317 = vsel %vm2466, 0, %v4316
          %v4318 = vsel %vm2466, %v4297, %v4290
          %v4320 = vunpack.c.l.s4 1983009808
          %v4321 = vunpack.c.0.s8 %v4320
          %v4322 = vperm.slane %v4318, %v4321
          %v4323 = vrot.slane %v4298, 4
          %v4324 = vsel %vm2466, %v4323, %v4296
          %v4326 = vunpack.c.l.s4 1983009808
          %v4327 = vunpack.c.0.s8 %v4326
          %v4328 = vperm.slane %v4324, %v4327
          %v4329 = vrot.slane %v4328, 4
          %v4330 = vsel %vm2466, %v4329, %v4322
          %v4332 = vunpack.c.l.s4 1934713408
          %v4333 = vunpack.c.0.s8 %v4332
          %v4334 = vperm.slane %v4330, %v4333
          %v4335 = vrot.slane %v4334, 4
          %v4336 = vsel %vm2466, 0, %v4335
          %v4339 = vpack.i.b16 %v4334, %v4315
          %v4340 = vshrl.u32 %v4315, 16
          %v4341 = vshrl.u32 %v4334, 16
          %v4342 = vpack.i.b16 %v4341, %v4340
          %v4345 = vpack.i.b16 %v4336, %v4317
          %v4346 = vshrl.u32 %v4317, 16
          %v4347 = vshrl.u32 %v4336, 16
          %v4348 = vpack.i.b16 %v4347, %v4346
          %v4349 = vunpack.c.l.b16 %v4342
          %v4350 = vpack.c.b16 %v4349, %v4349
          %4351 = vrot.lane.b32.xlu0 %v4350, 8
          %v4352 = vpop.permute.xlu0 %4351
          %v4353 = vunpack.c.l.b16 %v4345
          %v4354 = vpack.c.b16 %v4353, %v4353
          %4355 = vrot.lane.b32.xlu0 %v4354, 16
          %v4356 = vpop.permute.xlu0 %4355
          %v4357 = vunpack.c.l.b16 %v4348
          %v4358 = vpack.c.b16 %v4357, %v4357
          %4359 = vrot.lane.b32.xlu0 %v4358, 24
          %v4360 = vpop.permute.xlu0 %4359
          %v4363 = vsel %vm3049, %v4339, %v4352
          %v4365 = vsel %vm3135, %v4363, %v4356
          %v4367 = vsel %vm3399, %v4365, %v4360
          %s4369 = scalar_lea.vmem [#allocation3], 4
          %4370 = vst.msk [vmem:[%s4369] sm:$0xf] %vm3403, %v4367
        $region88: #{tpu_custom_call.1} parent=67 // pred_fallthru
          _
        %v4371 = vld [vmem:[#allocation3] sm:$0xf]
        %v4372 = vld [vmem:[#allocation3 + $0x4] sm:$0xf]
        %v4373 = vld [vmem:[%s620] sm:$0xf]
        %v4374 = vld [vmem:[%s620 + $0x4] sm:$0xf]
        %v4375 = vld [vmem:[%s620 + $0x8] sm:$0xf]
        %v4376 = vld [vmem:[%s620 + $0xc] sm:$0xf]
        %v4377 = vperm.slane %v649, 7
        %v4380 = vunpack.c.l.b16 %v4371
        %v4381 = vunpack.c.l.b16 %v4372
        %v4382 = vpack.c.b16 %v4381, %v4380
        %v4387 = vunpack.c.l.b16 %v4373
        %v4388 = vunpack.c.l.b16 %v4374
        %v4389 = vunpack.c.l.b16 %v4375
        %v4390 = vunpack.c.l.b16 %v4376
        %v4391 = vpack.c.b16 %v4388, %v4387
        %v4392 = vpack.c.b16 %v4390, %v4389
        %v4396 = vsel %vm655, %v4382, 0
        %4398 = vmatpush.bf16.msra.mxu0 0
        %4399 = vmatpush.bf16.msra.mxu0 0
        %4400 = vmatpush.bf16.msra.mxu0 0
        %4401 = vmatpush.bf16.msra.mxu0 0
        %4402 = vmatpush.bf16.msra.mxu0 0
        %4403 = vmatpush.bf16.msra.mxu0 0
        %4404 = vmatpush.bf16.msra.mxu0 %v4392
        %4405 = vmatpush.bf16.msra.mxu0 %v4391
        %4406 = vmatmul.bf16.gmra.mxu0 %v4396
        %v4407 = vpop.f32.mrf.mxu0
        %v4408 = vadd.f32 %v4377, %v4407
        %v4409 = vpop.f32.mrf.mxu0
        %v4410 = vadd.f32 %v4377, %v4409
        %4411 = vdwg.mxu0
        %v4412 = vadd.f32 %v653, %v4408
        %v4413 = vadd.f32 %v654, %v4410
        %v4414 = vsel %vm655, %v4412, 0.0
        %4415 = vadd.xlane.f32.xlu0 %v4414
        %v4416 = vpop.xlane.xlu0 %4415
        %v4417 = vsel %vm655, %v4413, 0.0
        %4418 = vadd.xlane.f32.xlu0 %v4417
        %v4419 = vpop.xlane.xlu0 %4418
        %v4420 = vmul.f32 %v4416, %v668
        %v4421 = vmul.f32 %v4419, %v668
        %v4422 = vsub.f32 %v4412, %v4420
        %v4423 = vsub.f32 %v4413, %v4421
        %v4424 = vmul.f32 %v4422, %v4422
        %v4425 = vmul.f32 %v4423, %v4423
        %v4426 = vsel %vm655, %v4424, 0.0
        %4427 = vadd.xlane.f32.xlu0 %v4426
        %v4428 = vpop.xlane.xlu0 %4427
        %v4429 = vsel %vm655, %v4425, 0.0
        %4430 = vadd.xlane.f32.xlu0 %v4429
        %v4431 = vpop.xlane.xlu0 %4430
        %v4432 = vmul.f32 %v4428, %v668
        %v4433 = vmul.f32 %v4431, %v668
        %v4434 = vadd.f32 %v4432, 1e-05
        %v4435 = vadd.f32 %v4433, 1e-05
        %v4436 = vrsqrt.pop %v4434
        %v4437 = vmul.f32 %v4436, %v4434
        %v4438 = vmul.f32 %v4437, %v4436
        %v4439 = vmul.f32 0.5, %v4438
        %v4440 = vsub.f32 1.5, %v4439
        %v4441 = vmul.f32 %v4436, %v4440
        %vm4442 = vweird.f32 %v4434
        %vm4443 = vweird.f32 %v4436
        %vm4444 = vmor %vm4442, %vm4443
        %v4445 = vsel %vm4444, %v4436, %v4441
        %v4446 = vrsqrt.pop %v4435
        %v4447 = vmul.f32 %v4446, %v4435
        %v4448 = vmul.f32 %v4447, %v4446
        %v4449 = vmul.f32 0.5, %v4448
        %v4450 = vsub.f32 1.5, %v4449
        %v4451 = vmul.f32 %v4446, %v4450
        %vm4452 = vweird.f32 %v4435
        %vm4453 = vweird.f32 %v4446
        %vm4454 = vmor %vm4452, %vm4453
        %v4455 = vsel %vm4454, %v4446, %v4451
        %v4456 = vmul.f32 %v4422, %v4445
        %v4457 = vmul.f32 %v4423, %v4455
        %v4458 = vperm.slane %v650, 0
        %v4459 = vmul.f32 %v4456, %v4458
        %v4460 = vmul.f32 %v4457, %v4458
        %v4461 = vperm.slane %v650, 1
        %v4462 = vadd.f32 %v4459, %v4461
        %v4463 = vadd.f32 %v4460, %v4461
        %v4464 = vpack.c.bf16 %v4463, %v4462
        %v4465 = vld [vmem:[%s625] sm:$0xf]
        %v4466 = vld [vmem:[%s625 + $0x4] sm:$0xf]
        %v4467 = vld [vmem:[%s625 + $0x8] sm:$0xf]
        %v4468 = vld [vmem:[%s625 + $0xc] sm:$0xf]
        %v4469 = vld [vmem:[%s501] sm:$0x1]
        %v4471 = vperm.slane %v4469, 0
        %v4477 = vunpack.c.l.b16 %v4465
        %v4478 = vunpack.c.l.b16 %v4466
        %v4479 = vunpack.c.l.b16 %v4467
        %v4480 = vunpack.c.l.b16 %v4468
        %v4481 = vpack.c.b16 %v4478, %v4477
        %v4482 = vpack.c.b16 %v4480, %v4479
        %v4486 = vsel %vm655, %v4464, 0
        %4488 = vmatpush.bf16.msra.mxu0 0
        %4489 = vmatpush.bf16.msra.mxu0 0
        %4490 = vmatpush.bf16.msra.mxu0 0
        %4491 = vmatpush.bf16.msra.mxu0 0
        %4492 = vmatpush.bf16.msra.mxu0 0
        %4493 = vmatpush.bf16.msra.mxu0 0
        %4494 = vmatpush.bf16.msra.mxu0 %v4482
        %4495 = vmatpush.bf16.msra.mxu0 %v4481
        %4496 = vmatmul.bf16.gmra.mxu0 %v4486
        %v4497 = vpop.f32.mrf.mxu0
        %v4498 = vadd.f32 %v4471, %v4497
        %v4499 = vpop.f32.mrf.mxu0
        %v4500 = vadd.f32 %v4471, %v4499
        %4501 = vdwg.mxu0
        %v4502 = vmul.f32 %v4498, 0.5
        %v4503 = vmul.f32 %v4500, 0.5
        %v4504 = vmul.f32 %v4498, 0.70710677
        %v4505 = vmul.f32 %v4500, 0.70710677
        %v4506 = vmul.f32 %v4504, %v4504
        %v4507 = vmin.f32 16.0, %v4506
        %v4508 = vmul.f32 %v4507, 2.1237322e-06
        %v4509 = vadd.f32 %v4508, 0.00028619796
        %v4510 = vmul.f32 %v4507, %v4509
        %v4511 = vadd.f32 %v4510, 0.0036580483
        %v4512 = vmul.f32 %v4507, %v4511
        %v4513 = vadd.f32 %v4512, 0.05243302
        %v4514 = vmul.f32 %v4507, %v4513
        %v4515 = vadd.f32 %v4514, 0.18741608
        %v4516 = vmul.f32 %v4507, %v4515
        %v4517 = vadd.f32 %v4516, 1.1283791
        %v4518 = vmul.f32 %v4504, %v4517
        %v4519 = vmul.f32 %v4507, 3.8918573e-05
        %v4520 = vadd.f32 %v4519, 0.001143296
        %v4521 = vmul.f32 %v4507, %v4520
        %v4522 = vadd.f32 %v4521, 0.014752088
        %v4523 = vmul.f32 %v4507, %v4522
        %v4524 = vadd.f32 %v4523, 0.112945676
        %v4525 = vmul.f32 %v4507, %v4524
        %v4526 = vadd.f32 %v4525, 0.4994258
        %v4527 = vmul.f32 %v4507, %v4526
        %v4528 = vadd.f32 %v4527, 1.0
        %v4529 = vrcp.pop %v4528
        %v4530 = vmul.f32 %v4528, %v4529
        %v4531 = vsub.f32 1.0, %v4530
        %v4532 = vmul.f32 %v4529, %v4531
        %v4533 = vadd.f32 %v4529, %v4532
        %vm4534 = vweird.f32 %v4528
        %vm4535 = vweird.f32 %v4529
        %vm4536 = vmor %vm4534, %vm4535
        %v4537 = vsel %vm4536, %v4529, %v4533
        %v4538 = vand.u32 2147483647, %v4528
        %vm4539 = vcmp.eq.f32.partialorder %v4538, 8.507059e+37
        %v4540 = vand.u32 %v4528, 2147483648
        %v4541 = vor.u32 1.1754944e-38, %v4540
        %v4542 = vsel %vm4539, %v4541, %v4537
        %v4543 = vmul.f32 %v4518, %v4542
        %v4544 = vmin.f32 %v4543, 1.0
        %v4545 = vmax.f32 %v4544, -1.0
        %v4546 = vmul.f32 %v4505, %v4505
        %v4547 = vmin.f32 16.0, %v4546
        %v4548 = vmul.f32 %v4547, 2.1237322e-06
        %v4549 = vadd.f32 %v4548, 0.00028619796
        %v4550 = vmul.f32 %v4547, %v4549
        %v4551 = vadd.f32 %v4550, 0.0036580483
        %v4552 = vmul.f32 %v4547, %v4551
        %v4553 = vadd.f32 %v4552, 0.05243302
        %v4554 = vmul.f32 %v4547, %v4553
        %v4555 = vadd.f32 %v4554, 0.18741608
        %v4556 = vmul.f32 %v4547, %v4555
        %v4557 = vadd.f32 %v4556, 1.1283791
        %v4558 = vmul.f32 %v4505, %v4557
        %v4559 = vmul.f32 %v4547, 3.8918573e-05
        %v4560 = vadd.f32 %v4559, 0.001143296
        %v4561 = vmul.f32 %v4547, %v4560
        %v4562 = vadd.f32 %v4561, 0.014752088
        %v4563 = vmul.f32 %v4547, %v4562
        %v4564 = vadd.f32 %v4563, 0.112945676
        %v4565 = vmul.f32 %v4547, %v4564
        %v4566 = vadd.f32 %v4565, 0.4994258
        %v4567 = vmul.f32 %v4547, %v4566
        %v4568 = vadd.f32 %v4567, 1.0
        %v4569 = vrcp.pop %v4568
        %v4570 = vmul.f32 %v4568, %v4569
        %v4571 = vsub.f32 1.0, %v4570
        %v4572 = vmul.f32 %v4569, %v4571
        %v4573 = vadd.f32 %v4569, %v4572
        %vm4574 = vweird.f32 %v4568
        %vm4575 = vweird.f32 %v4569
        %vm4576 = vmor %vm4574, %vm4575
        %v4577 = vsel %vm4576, %v4569, %v4573
        %v4578 = vand.u32 2147483647, %v4568
        %vm4579 = vcmp.eq.f32.partialorder %v4578, 8.507059e+37
        %v4580 = vand.u32 %v4568, 2147483648
        %v4581 = vor.u32 1.1754944e-38, %v4580
        %v4582 = vsel %vm4579, %v4581, %v4577
        %v4583 = vmul.f32 %v4558, %v4582
        %v4584 = vmin.f32 %v4583, 1.0
        %v4585 = vmax.f32 %v4584, -1.0
        %v4586 = vadd.f32 %v4545, 1.0
        %v4587 = vadd.f32 %v4585, 1.0
        %v4588 = vmul.f32 %v4502, %v4586
        %v4589 = vmul.f32 %v4503, %v4587
        %v4590 = vpack.c.bf16 %v4589, %v4588
        %v4591 = vld [vmem:[%s630] sm:$0xf]
        %v4592 = vld [vmem:[%s630 + $0x4] sm:$0xf]
        %v4593 = vld [vmem:[%s630 + $0x8] sm:$0xf]
        %v4594 = vld [vmem:[%s630 + $0xc] sm:$0xf]
        %v4595 = vld [vmem:[%s630 + $0x10] sm:$0xf]
        %v4596 = vld [vmem:[%s630 + $0x14] sm:$0xf]
        %v4597 = vld [vmem:[%s630 + $0x18] sm:$0xf]
        %v4598 = vld [vmem:[%s630 + $0x1c] sm:$0xf]
        %v4599 = vld [vmem:[%s630 + $0x20] sm:$0xf]
        %v4600 = vld [vmem:[%s630 + $0x24] sm:$0xf]
        %v4601 = vld [vmem:[%s630 + $0x28] sm:$0xf]
        %v4602 = vld [vmem:[%s630 + $0x2c] sm:$0xf]
        %v4603 = vld [vmem:[%s630 + $0x30] sm:$0xf]
        %v4604 = vld [vmem:[%s630 + $0x34] sm:$0xf]
        %v4605 = vld [vmem:[%s630 + $0x38] sm:$0xf]
        %v4606 = vld [vmem:[%s630 + $0x3c] sm:$0xf]
        %v4607 = vperm.slane %v650, 2
        %v4624 = vunpack.c.l.b16 %v4591
        %v4625 = vunpack.c.l.b16 %v4592
        %v4626 = vunpack.c.l.b16 %v4593
        %v4627 = vunpack.c.l.b16 %v4594
        %v4628 = vunpack.c.l.b16 %v4595
        %v4629 = vunpack.c.l.b16 %v4596
        %v4630 = vunpack.c.l.b16 %v4597
        %v4631 = vunpack.c.l.b16 %v4598
        %v4632 = vunpack.c.l.b16 %v4599
        %v4633 = vunpack.c.l.b16 %v4600
        %v4634 = vunpack.c.l.b16 %v4601
        %v4635 = vunpack.c.l.b16 %v4602
        %v4636 = vunpack.c.l.b16 %v4603
        %v4637 = vunpack.c.l.b16 %v4604
        %v4638 = vunpack.c.l.b16 %v4605
        %v4639 = vunpack.c.l.b16 %v4606
        %v4640 = vpack.c.b16 %v4625, %v4624
        %v4641 = vpack.c.b16 %v4627, %v4626
        %v4642 = vpack.c.b16 %v4629, %v4628
        %v4643 = vpack.c.b16 %v4631, %v4630
        %v4644 = vpack.c.b16 %v4633, %v4632
        %v4645 = vpack.c.b16 %v4635, %v4634
        %v4646 = vpack.c.b16 %v4637, %v4636
        %v4647 = vpack.c.b16 %v4639, %v4638
        %4656 = vmatpush.bf16.msra.mxu0 %v4647
        %4657 = vmatpush.bf16.msra.mxu0 %v4646
        %4658 = vmatpush.bf16.msra.mxu0 %v4645
        %4659 = vmatpush.bf16.msra.mxu0 %v4644
        %4660 = vmatpush.bf16.msra.mxu0 %v4643
        %4661 = vmatpush.bf16.msra.mxu0 %v4642
        %4662 = vmatpush.bf16.msra.mxu0 %v4641
        %4663 = vmatpush.bf16.msra.mxu0 %v4640
        %4664 = vmatmul.bf16.gmra.mxu0 %v4590
        %v4665 = vpop.f32.mrf.mxu0
        %v4666 = vadd.f32 %v4607, %v4665
        %v4667 = vpop.f32.mrf.mxu0
        %v4668 = vadd.f32 %v4607, %v4667
        %4669 = vdwg.mxu0
        %v4670 = vadd.f32 %v4412, %v4666
        %v4671 = vadd.f32 %v4413, %v4668
        %4672 = vst.msk [vmem:[%s652] sm:$0xff] %vm655, %v4670
        %4673 = vst.msk [vmem:[%s652 + $0x8] sm:$0xff] %vm655, %v4671
        %p4674 = scmp.eq.s32.totalorder %s32, 3
        // Predicated region
        $region89: #{tpu_custom_call.1} parent=67 // pred_check
          %p4675 = pneg %p4674
        $region90: #{tpu_custom_call.1} parent=67 // pred_check_branch
          %4677 = sbr.rel (%p4675) target = $region92
        $region91: #{tpu_custom_call.1} parent=67 // pred_region
          %v4678 = vld [vmem:[%s10] sm:$0x3]
          %v4679 = vsel %vm655, %v4670, 0.0
          %4680 = vadd.xlane.f32.xlu0 %v4679
          %v4681 = vpop.xlane.xlu0 %4680
          %v4682 = vsel %vm655, %v4671, 0.0
          %4683 = vadd.xlane.f32.xlu0 %v4682
          %v4684 = vpop.xlane.xlu0 %4683
          %v4685 = vmul.f32 %v4681, %v668
          %v4686 = vmul.f32 %v4684, %v668
          %v4687 = vsub.f32 %v4670, %v4685
          %v4688 = vsub.f32 %v4671, %v4686
          %v4689 = vmul.f32 %v4687, %v4687
          %v4690 = vmul.f32 %v4688, %v4688
          %v4691 = vsel %vm655, %v4689, 0.0
          %4692 = vadd.xlane.f32.xlu0 %v4691
          %v4693 = vpop.xlane.xlu0 %4692
          %v4694 = vsel %vm655, %v4690, 0.0
          %4695 = vadd.xlane.f32.xlu0 %v4694
          %v4696 = vpop.xlane.xlu0 %4695
          %v4697 = vmul.f32 %v4693, %v668
          %v4698 = vmul.f32 %v4696, %v668
          %v4699 = vadd.f32 %v4697, 1e-05
          %v4700 = vadd.f32 %v4698, 1e-05
          %v4701 = vrsqrt.pop %v4699
          %v4702 = vmul.f32 %v4701, %v4699
          %v4703 = vmul.f32 %v4702, %v4701
          %v4704 = vmul.f32 0.5, %v4703
          %v4705 = vsub.f32 1.5, %v4704
          %v4706 = vmul.f32 %v4701, %v4705
          %vm4707 = vweird.f32 %v4699
          %vm4708 = vweird.f32 %v4701
          %vm4709 = vmor %vm4707, %vm4708
          %v4710 = vsel %vm4709, %v4701, %v4706
          %v4711 = vrsqrt.pop %v4700
          %v4712 = vmul.f32 %v4711, %v4700
          %v4713 = vmul.f32 %v4712, %v4711
          %v4714 = vmul.f32 0.5, %v4713
          %v4715 = vsub.f32 1.5, %v4714
          %v4716 = vmul.f32 %v4711, %v4715
          %vm4717 = vweird.f32 %v4700
          %vm4718 = vweird.f32 %v4711
          %vm4719 = vmor %vm4717, %vm4718
          %v4720 = vsel %vm4719, %v4711, %v4716
          %v4721 = vmul.f32 %v4687, %v4710
          %v4722 = vmul.f32 %v4688, %v4720
          %v4723 = vperm.slane %v4678, 0
          %v4724 = vmul.f32 %v4721, %v4723
          %v4725 = vmul.f32 %v4722, %v4723
          %v4726 = vperm.slane %v4678, 1
          %v4727 = vadd.f32 %v4724, %v4726
          %v4728 = vadd.f32 %v4725, %v4726
          %v4729 = vpack.c.bf16 %v4728, %v4727
          %v4730 = vld [vmem:[#allocation7] sm:$0xf]
          %v4731 = vld [vmem:[#allocation7 + $0x4] sm:$0xf]
          %v4732 = vld [vmem:[#allocation7 + $0x8] sm:$0xf]
          %v4733 = vld [vmem:[#allocation7 + $0xc] sm:$0xf]
          %v4738 = vunpack.c.l.b16 %v4730
          %v4739 = vunpack.c.l.b16 %v4731
          %v4740 = vunpack.c.l.b16 %v4732
          %v4741 = vunpack.c.l.b16 %v4733
          %v4742 = vpack.c.b16 %v4739, %v4738
          %v4743 = vpack.c.b16 %v4741, %v4740
          %v4747 = vsel %vm655, %v4729, 0
          %4749 = vmatpush.bf16.msra.mxu0 0
          %4750 = vmatpush.bf16.msra.mxu0 0
          %4751 = vmatpush.bf16.msra.mxu0 0
          %4752 = vmatpush.bf16.msra.mxu0 0
          %4753 = vmatpush.bf16.msra.mxu0 0
          %4754 = vmatpush.bf16.msra.mxu0 0
          %4755 = vmatpush.bf16.msra.mxu0 %v4743
          %4756 = vmatpush.bf16.msra.mxu0 %v4742
          %4757 = vmatmul.bf16.gmra.mxu0 %v4747
          %v4758 = vpop.f32.mrf.mxu0
          %v4759 = vadd.f32 0.0, %v4758
          %v4760 = vpop.f32.mrf.mxu0
          %v4761 = vadd.f32 0.0, %v4760
          %4762 = vdwg.mxu0
          %vm4763 = vcmask 523264
          %4764 = vst.msk [vmem:[#allocation9] sm:$0xff] %vm4763, %v4759
          %4765 = vst.msk [vmem:[#allocation9 + $0x8] sm:$0xff] %vm4763, %v4761
        $region92: #{tpu_custom_call.1} parent=67 // pred_fallthru
          _
        // Predicated region
        $region93: #{tpu_custom_call.1} parent=67 // pred_check
          %p4766 = pneg %p360
        $region94: #{tpu_custom_call.1} parent=67 // pred_check_branch
          %4768 = sbr.rel (%p4766) target = $region96
        $region95: #{tpu_custom_call.1} parent=67 // pred_region
          %s4769 = smul.u32 2, %s33
          %4771 = vsyncadd [#allocation6], 0
          %s4772 = smul.addr %s4769, 8
          %s4773 = scalar_lea.hbm %s12, %s4772
          %s4774 = sshll.u32 [#allocation9], 4
          %s4775 = int_to_ptr.vmem [resolvable:$true] %s4774
          %s4776 = sshll.u32 %s4773, 4
          %s4777 = int_to_ptr.hbm [resolvable:$true] %s4776
          %4782 = dma.vmem_to_hbm [thread:$0]  %s4775, 256, %s4777, [#allocation6], 128, 128, 8
        $region96: #{tpu_custom_call.1} parent=67 // pred_fallthru
          _
        // Predicated region
        $region97: #{tpu_custom_call.1} parent=67 // pred_check
          %p4783 = pneg %p360
        $region98: #{tpu_custom_call.1} parent=67 // pred_check_branch
          %4785 = sbr.rel (%p4783) target = $region100
        $region99: #{tpu_custom_call.1} parent=67 // pred_region
          %4787 = dma.done [#allocation6], 256
        $region100: #{tpu_custom_call.1} parent=67 // pred_fallthru
          _
      $region68: #{tpu_custom_call.1} parent=5 // pred_fallthru
        _
      %p4788 = scmp.le.s32.totalorder 2, %s23
      // Predicated region
      $region101: #{tpu_custom_call.1} parent=5 // pred_check
        %p4789 = pneg %p4788
      $region102: #{tpu_custom_call.1} parent=5 // pred_check_branch
        %4791 = sbr.rel (%p4789) target = $region104
      $region103: #{tpu_custom_call.1} parent=5 // pred_region
        %s4792 = ssub.s32 %s23, 2
      $region104: #{tpu_custom_call.1} parent=5 // pred_fallthru
        _
    $region6: #{tpu_custom_call.1} parent=1 // loop_footer
      %s27 = sadd.s32 1, %s23
    $region7: #{tpu_custom_call.1} parent=1 // loop_footer_branch
      %22 = sbr.rel target = $region3
    $region8: #{tpu_custom_call.1} parent=1 // loop_exit
      _
    %4793 = vsyncpa [#allocation5], 1
    %s4794 = scalar_lea.sflag [#allocation5], 1
    %4795 = vsyncpa %s4794, 1
    %4796 = vsyncpa [#allocation8], 1
    %4797 = vsyncpa [#allocation6], 1
    %s4798 = scalar_lea.sflag [#allocation6], 1
    %4799 = vsyncpa %s4798, 1

</llo_original>
